<compile_context>
chip_gen: v5e
topology: v5e:2x2
jax: 0.10.0
libtpu: 0.0.40
codegen_flags: <defaults>
</compile_context>

<pallas_src>
import math
import jax
import jax.numpy as jnp
from jax.experimental import pallas as pl
from jax.experimental.pallas import tpu as pltpu


def _nn_kernel(x_ref, w1_ref, b1_ref, w2_ref, b2_ref, w3_ref, b3_ref,
               out_ref, acc_ref):
    """Fused forward pass.

    grid = (K // tk,): K-reduction of fc1 ("arbitrary").  The f32 accumulator
    lives in VMEM scratch; the fc2/fc3/softmax epilogue runs on the last step.
    """
    k = pl.program_id(0)

    @pl.when(k == 0)
    def _():
        acc_ref[...] = jnp.zeros_like(acc_ref)

    # Partial fc1 matmul over this K chunk: bf16 operands, f32 accumulate (MXU).
    acc_ref[...] += jnp.dot(x_ref[...], w1_ref[...],
                            preferred_element_type=jnp.float32)

    @pl.when(k == pl.num_programs(0) - 1)
    def _():
        h1 = jnp.maximum(acc_ref[...] + b1_ref[...], 0.0)            # ReLU(fc1)
        h2 = jnp.dot(h1, w2_ref[...], preferred_element_type=jnp.float32)
        h2 = jnp.maximum(h2 + b2_ref[...], 0.0)                      # ReLU(fc2)
        logits = jnp.dot(h2, w3_ref[...],
                         preferred_element_type=jnp.float32) + b3_ref[...]
        m = jnp.max(logits, axis=1, keepdims=True)                   # softmax dim=1
        e = jnp.exp(logits - m)
        out_ref[...] = (e / jnp.sum(e, axis=1, keepdims=True)
                        ).astype(out_ref.dtype)


def nn_forward(x, w1, b1, w2, b2, w3, b3, *, tk=2048):
    B, K = x.shape
    H1 = w1.shape[1]
    H2 = w2.shape[1]
    C = w3.shape[1]
    assert K % tk == 0, "tk must divide the input feature size"

    # Stream the big fc1 operands as bf16 (no-op if the caller already cast).
    x_bf = x.astype(jnp.bfloat16)
    w1_bf = w1.astype(jnp.bfloat16)

    cost = pl.CostEstimate(
        flops=2 * B * (K * H1 + H1 * H2 + H2 * C),
        transcendentals=B * C,
        bytes_accessed=(K * H1 + B * K) * 2                          # bf16 x, W1
                       + (H1 + H1 * H2 + H2 + H2 * C + C + B * C) * 4,
    )

    return pl.pallas_call(
        _nn_kernel,
        out_shape=jax.ShapeDtypeStruct((B, C), jnp.float32),
        grid_spec=pltpu.PrefetchScalarGridSpec(
            num_scalar_prefetch=0,
            grid=(K // tk,),
            in_specs=[
                pl.BlockSpec((B, tk), lambda k: (0, k)),     # x  : K-tiled bf16
                pl.BlockSpec((tk, H1), lambda k: (k, 0)),    # W1 : K-tiled bf16, contiguous slab
                pl.BlockSpec((1, H1), lambda k: (0, 0)),     # b1 (k-invariant)
                pl.BlockSpec((H1, H2), lambda k: (0, 0)),    # W2 (k-invariant)
                pl.BlockSpec((1, H2), lambda k: (0, 0)),     # b2
                pl.BlockSpec((H2, C), lambda k: (0, 0)),     # W3
                pl.BlockSpec((1, C), lambda k: (0, 0)),      # b3
            ],
            out_specs=pl.BlockSpec((B, C), lambda k: (0, 0)),
            scratch_shapes=[pltpu.VMEM((B, H1), jnp.float32)],
        ),
        compiler_params=pltpu.CompilerParams(
            dimension_semantics=("arbitrary",),
        ),
        cost_estimate=cost,
    )(x_bf, w1_bf, b1, w2, b2, w3, b3)


def _init_linear(key, fan_in, fan_out):
    # Deterministic init mimicking PyTorch nn.Linear default:
    # U(-1/sqrt(fan_in), 1/sqrt(fan_in))
    kw, kb = jax.random.split(key)
    bound = 1.0 / math.sqrt(fan_in)
    w = jax.random.uniform(kw, (fan_in, fan_out), jnp.float32, -bound, bound)
    b = jax.random.uniform(kb, (1, fan_out), jnp.float32, -bound, bound)
    return w, b


def _reference(x, w1, b1, w2, b2, w3, b3):
    h1 = jnp.maximum(x @ w1 + b1, 0.0)
    h2 = jnp.maximum(h1 @ w2 + b2, 0.0)
    return jax.nn.softmax(h2 @ w3 + b3, axis=1)


if __name__ == "__main__":
    input_size = 3 * 64 * 64   # 12288, as in the PyTorch script
    num_classes = 2
    batch = 8

    root = jax.random.PRNGKey(0)
    kx, k1, k2, k3 = jax.random.split(root, 4)

    x = jax.random.normal(kx, (batch, input_size), jnp.float32)
    w1, b1 = _init_linear(k1, input_size, 512)
    w2, b2 = _init_linear(k2, 512, 256)
    w3, b3 = _init_linear(k3, 256, num_classes)

    # Cast the big weight once outside jit so the per-call HBM stream is bf16.
    w1_bf = w1.astype(jnp.bfloat16)

    fwd = jax.jit(nn_forward)
    out = jax.block_until_ready(fwd(x, w1_bf, b1, w2, b2, w3, b3))

    ref = _reference(x, w1, b1, w2, b2, w3, b3)   # full-f32 module semantics
    assert out.shape == (batch, num_classes)
    # Tolerance relaxed for the bf16 fc1 stream (f32 accumulation).
    assert jnp.allclose(out, ref, atol=2e-2, rtol=2e-2)
    # Softmax rows must still sum to 1 exactly (computed fully in f32).
    assert jnp.allclose(jnp.sum(out, axis=1), 1.0, atol=1e-5)

    print("KERNEL_OK")
</pallas_src>

<mosaic_0001>
module attributes {stable_mosaic.version = 11 : i64} {
  func.func @_nn_kernel(%arg0: i32, %arg1: memref<8x2048xbf16, #tpu.memory_space<vmem>>, %arg2: memref<2048x512xbf16, #tpu.memory_space<vmem>>, %arg3: memref<1x512xf32, #tpu.memory_space<vmem>>, %arg4: memref<512x256xf32, #tpu.memory_space<vmem>>, %arg5: memref<1x256xf32, #tpu.memory_space<vmem>>, %arg6: memref<256x2xf32, #tpu.memory_space<vmem>>, %arg7: memref<1x2xf32, #tpu.memory_space<vmem>>, %arg8: memref<8x2xf32, #tpu.memory_space<vmem>>, %arg9: memref<8x512xf32, #tpu.memory_space<vmem>>) attributes {dimension_semantics = [#tpu.dimension_semantics<arbitrary>], iteration_bounds = array<i64: 6>, scalar_prefetch = 0 : i64, scratch_operands = 1 : i64, tpu.core_type = #tpu.core_type<tc>, window_params = [{transform_indices = @transform_0, window_bounds = array<i64: 8, 2048>}, {transform_indices = @transform_1, window_bounds = array<i64: 2048, 512>}, {pipeline_mode = #tpu.pipeline_mode<synchronous>, transform_indices = @transform_2, window_bounds = array<i64: 1, 512>}, {pipeline_mode = #tpu.pipeline_mode<synchronous>, transform_indices = @transform_3, window_bounds = array<i64: 512, 256>}, {pipeline_mode = #tpu.pipeline_mode<synchronous>, transform_indices = @transform_4, window_bounds = array<i64: 1, 256>}, {pipeline_mode = #tpu.pipeline_mode<synchronous>, transform_indices = @transform_5, window_bounds = array<i64: 256, 2>}, {pipeline_mode = #tpu.pipeline_mode<synchronous>, transform_indices = @transform_6, window_bounds = array<i64: 1, 2>}, {pipeline_mode = #tpu.pipeline_mode<synchronous>, transform_indices = @transform_7, window_bounds = array<i64: 8, 2>}]} {
    %c0_i32 = arith.constant 0 : i32
    %0 = arith.cmpi eq, %arg0, %c0_i32 : i32
    %1 = arith.extui %0 : i1 to i32
    %c0_i32_0 = arith.constant 0 : i32
    %2 = arith.cmpi ne, %1, %c0_i32_0 : i32
    scf.if %2 {
      %cst_9 = arith.constant 0.000000e+00 : f32
      %12 = vector.broadcast %cst_9 : f32 to vector<8x512xf32>
      %c0_10 = arith.constant 0 : index
      %c0_11 = arith.constant 0 : index
      %13 = vector.load %arg9[%c0_10, %c0_11] : memref<8x512xf32, #tpu.memory_space<vmem>>, vector<8x512xf32>
      tpu.vector_store %arg9[%c0_10, %c0_11], %12 {strides = array<i32>} : memref<8x512xf32, #tpu.memory_space<vmem>>, vector<8x512xf32>,
    } else {
    }
    %c0 = arith.constant 0 : index
    %c0_1 = arith.constant 0 : index
    %3 = vector.load %arg9[%c0, %c0_1] : memref<8x512xf32, #tpu.memory_space<vmem>>, vector<8x512xf32>
    %c0_2 = arith.constant 0 : index
    %c0_3 = arith.constant 0 : index
    %4 = vector.load %arg1[%c0_2, %c0_3] : memref<8x2048xbf16, #tpu.memory_space<vmem>>, vector<8x2048xbf16>
    %c0_4 = arith.constant 0 : index
    %c0_5 = arith.constant 0 : index
    %5 = vector.load %arg2[%c0_4, %c0_5] : memref<2048x512xbf16, #tpu.memory_space<vmem>>, vector<2048x512xbf16>
    %cst = arith.constant dense<0.000000e+00> : vector<8x512xf32>
    %6 = tpu.matmul %4, %5, %cst {dimension_numbers = #tpu.dot_dimension_numbers<[1], [0], [0], [1], [0, 0, 1, 1], [], []>} : vector<8x2048xbf16>, vector<2048x512xbf16>, vector<8x512xf32> -> vector<8x512xf32>
    %7 = arith.addf %3, %6 : vector<8x512xf32>
    %c0_6 = arith.constant 0 : index
    %c0_7 = arith.constant 0 : index
    %8 = vector.load %arg9[%c0_6, %c0_7] : memref<8x512xf32, #tpu.memory_space<vmem>>, vector<8x512xf32>
    tpu.vector_store %arg9[%c0_6, %c0_7], %7 {strides = array<i32>} : memref<8x512xf32, #tpu.memory_space<vmem>>, vector<8x512xf32>,
    %c5_i32 = arith.constant 5 : i32
    %9 = arith.cmpi eq, %arg0, %c5_i32 : i32
    %10 = arith.extui %9 : i1 to i32
    %c0_i32_8 = arith.constant 0 : i32
    %11 = arith.cmpi ne, %10, %c0_i32_8 : i32
    scf.if %11 {
      %c0_9 = arith.constant 0 : index
      %c0_10 = arith.constant 0 : index
      %12 = vector.load %arg9[%c0_9, %c0_10] : memref<8x512xf32, #tpu.memory_space<vmem>>, vector<8x512xf32>
      %c0_11 = arith.constant 0 : index
      %c0_12 = arith.constant 0 : index
      %13 = vector.load %arg3[%c0_11, %c0_12] : memref<1x512xf32, #tpu.memory_space<vmem>>, vector<1x512xf32>
      %14 = vector.broadcast %13 : vector<1x512xf32> to vector<8x512xf32>
      %15 = arith.addf %12, %14 : vector<8x512xf32>
      %cst_13 = arith.constant 0.000000e+00 : f32
      %16 = vector.broadcast %cst_13 : f32 to vector<8x512xf32>
      %17 = arith.maximumf %15, %16 : vector<8x512xf32>
      %c0_14 = arith.constant 0 : index
      %c0_15 = arith.constant 0 : index
      %18 = vector.load %arg4[%c0_14, %c0_15] : memref<512x256xf32, #tpu.memory_space<vmem>>, vector<512x256xf32>
      %cst_16 = arith.constant dense<0.000000e+00> : vector<8x256xf32>
      %19 = tpu.matmul %17, %18, %cst_16 {dimension_numbers = #tpu.dot_dimension_numbers<[1], [0], [0], [1], [0, 0, 1, 1], [], []>} : vector<8x512xf32>, vector<512x256xf32>, vector<8x256xf32> -> vector<8x256xf32>
      %c0_17 = arith.constant 0 : index
      %c0_18 = arith.constant 0 : index
      %20 = vector.load %arg5[%c0_17, %c0_18] : memref<1x256xf32, #tpu.memory_space<vmem>>, vector<1x256xf32>
      %21 = vector.broadcast %20 : vector<1x256xf32> to vector<8x256xf32>
      %22 = arith.addf %19, %21 : vector<8x256xf32>
      %cst_19 = arith.constant 0.000000e+00 : f32
      %23 = vector.broadcast %cst_19 : f32 to vector<8x256xf32>
      %24 = arith.maximumf %22, %23 : vector<8x256xf32>
      %c0_20 = arith.constant 0 : index
      %c0_21 = arith.constant 0 : index
      %25 = vector.load %arg6[%c0_20, %c0_21] : memref<256x2xf32, #tpu.memory_space<vmem>>, vector<256x2xf32>
      %cst_22 = arith.constant dense<0.000000e+00> : vector<8x2xf32>
      %26 = tpu.matmul %24, %25, %cst_22 {dimension_numbers = #tpu.dot_dimension_numbers<[1], [0], [0], [1], [0, 0, 1, 1], [], []>} : vector<8x256xf32>, vector<256x2xf32>, vector<8x2xf32> -> vector<8x2xf32>
      %c0_23 = arith.constant 0 : index
      %c0_24 = arith.constant 0 : index
      %27 = vector.load %arg7[%c0_23, %c0_24] : memref<1x2xf32, #tpu.memory_space<vmem>>, vector<1x2xf32>
      %28 = vector.broadcast %27 : vector<1x2xf32> to vector<8x2xf32>
      %29 = arith.addf %26, %28 : vector<8x2xf32>
      %cst_25 = arith.constant dense<0xFF800000> : vector<8xf32>
      %30 = vector.multi_reduction <maximumf>, %29, %cst_25 [1] : vector<8x2xf32> to vector<8xf32>
      %31 = vector.shape_cast %30 : vector<8xf32> to vector<8x1xf32>
      %32 = vector.broadcast %31 : vector<8x1xf32> to vector<8x2xf32>
      %33 = arith.subf %29, %32 : vector<8x2xf32>
      %34 = math.exp %33 : vector<8x2xf32>
      %cst_26 = arith.constant dense<0.000000e+00> : vector<8xf32>
      %35 = vector.multi_reduction <add>, %34, %cst_26 [1] : vector<8x2xf32> to vector<8xf32>
      %36 = vector.shape_cast %35 : vector<8xf32> to vector<8x1xf32>
      %37 = vector.broadcast %36 : vector<8x1xf32> to vector<8x2xf32>
      %38 = arith.divf %34, %37 : vector<8x2xf32>
      %c0_27 = arith.constant 0 : index
      %c0_28 = arith.constant 0 : index
      %39 = vector.load %arg8[%c0_27, %c0_28] : memref<8x2xf32, #tpu.memory_space<vmem>>, vector<8x2xf32>
      tpu.vector_store %arg8[%c0_27, %c0_28], %38 {strides = array<i32>} : memref<8x2xf32, #tpu.memory_space<vmem>>, vector<8x2xf32>,
    } else {
    }
    return
  }
  func.func @transform_0(%arg0: i32) -> (i32, i32) {
    %c0_i32 = arith.constant 0 : i32
    %c0_i32_0 = arith.constant 0 : i32
    return %c0_i32, %arg0 : i32, i32
  }
  func.func @transform_1(%arg0: i32) -> (i32, i32) {
    %c0_i32 = arith.constant 0 : i32
    %c0_i32_0 = arith.constant 0 : i32
    return %arg0, %c0_i32 : i32, i32
  }
  func.func @transform_2(%arg0: i32) -> (i32, i32) {
    %c0_i32 = arith.constant 0 : i32
    %c0_i32_0 = arith.constant 0 : i32
    %c0_i32_1 = arith.constant 0 : i32
    return %c0_i32, %c0_i32_0 : i32, i32
  }
  func.func @transform_3(%arg0: i32) -> (i32, i32) {
    %c0_i32 = arith.constant 0 : i32
    %c0_i32_0 = arith.constant 0 : i32
    %c0_i32_1 = arith.constant 0 : i32
    return %c0_i32, %c0_i32_0 : i32, i32
  }
  func.func @transform_4(%arg0: i32) -> (i32, i32) {
    %c0_i32 = arith.constant 0 : i32
    %c0_i32_0 = arith.constant 0 : i32
    %c0_i32_1 = arith.constant 0 : i32
    return %c0_i32, %c0_i32_0 : i32, i32
  }
  func.func @transform_5(%arg0: i32) -> (i32, i32) {
    %c0_i32 = arith.constant 0 : i32
    %c0_i32_0 = arith.constant 0 : i32
    %c0_i32_1 = arith.constant 0 : i32
    return %c0_i32, %c0_i32_0 : i32, i32
  }
  func.func @transform_6(%arg0: i32) -> (i32, i32) {
    %c0_i32 = arith.constant 0 : i32
    %c0_i32_0 = arith.constant 0 : i32
    %c0_i32_1 = arith.constant 0 : i32
    return %c0_i32, %c0_i32_0 : i32, i32
  }
  func.func @transform_7(%arg0: i32) -> (i32, i32) {
    %c0_i32 = arith.constant 0 : i32
    %c0_i32_0 = arith.constant 0 : i32
    %c0_i32_1 = arith.constant 0 : i32
    return %c0_i32, %c0_i32_0 : i32, i32
  }
}

</mosaic_0001>

<llo_original>
// kernel: nn_forward.1
$region0: #{nn_forward.1}
  #allocation0 [shape = 'u32[]', space=smem, size = 0x4, offset = 0x4, fixed_abs, tag = 'smem constant byte address 0x4 - core index']
  #allocation1 [shape = 'u32[72,128]{1,0:T(1,128)}', space=vmem, size = 0x9000, scoped, tag = 'internal scratch']
  #allocation2 [shape = 'f32[8,512]{1,0:T(8,128)}', space=vmem, size = 0x4000, scoped, tag = 'scratch operand']
  %s0 = inlined_call_operand.vmem [shape: bf16[8,12288], index: 0, kind: input, shape index: {}]
  %s1 = inlined_call_operand.hbm [shape: bf16[12288,512], index: 1, kind: input, shape index: {}]
  %s2 = inlined_call_operand.hbm [shape: f32[1,512], index: 2, kind: input, shape index: {}]
  %s3 = inlined_call_operand.hbm [shape: f32[512,256], index: 3, kind: input, shape index: {}]
  %s4 = inlined_call_operand.hbm [shape: f32[1,256], index: 4, kind: input, shape index: {}]
  %s5 = inlined_call_operand.vmem [shape: f32[256,2], index: 5, kind: input, shape index: {}]
  %s6 = inlined_call_operand.hbm [shape: f32[1,2], index: 6, kind: input, shape index: {}]
  %s7 = inlined_call_operand.vmem [shape: f32[8,2], index: 7, kind: output, shape index: {}]
  %s8 = sld [smem:[#allocation0]]
  $region89: #{nn_forward.1} parent=0
    _
  %s10 = ssub.s32 1, %s8
  %s11 = scalar_select 0, %s10, %s8
  $region1: #{nn_forward.1} parent=0
    #allocation3 [shape = 'u8[4194304]{0}', space=vmem, size = 0x400000, scoped, tag = 'input window, operand 1']
    #allocation4 [shape = 's32[2]{0}', space=sflag, size = 0x8, scoped, tag = 'scoped memory for nn_forward.1']
    #allocation5 [shape = 'u8[2048]{0}', space=vmem, size = 0x800, scoped, tag = 'input window, operand 2, single buffered']
    #allocation6 [shape = 's32[1]{0}', space=sflag, size = 0x4, scoped, tag = 'scoped memory for nn_forward.1']
    #allocation7 [shape = 'u8[524288]{0}', space=vmem, size = 0x80000, scoped, tag = 'input window, operand 3, single buffered']
    #allocation8 [shape = 'u8[1024]{0}', space=vmem, size = 0x400, scoped, tag = 'input window, operand 4, single buffered']
    #allocation9 [shape = 's32[1]{0}', space=sflag, size = 0x4, scoped, tag = 'scoped memory for nn_forward.1']
    #allocation10 [shape = 'u8[512]{0}', space=vmem, size = 0x400, scoped, tag = 'input window, operand 6, single buffered']
    %12 = vsyncpa [#allocation4], 0
    %s13 = scalar_lea.sflag [#allocation4], 1
    %14 = vsyncpa %s13, 0
    %15 = vsyncpa [#allocation6], 0
    %16 = vsyncpa [#allocation9], 0
    loop: start=0, step=1, limit=8
    $region2: #{nn_forward.1} parent=1 // loop_pre_header
      _
    $region3: #{nn_forward.1} parent=1 // loop_header
      %s18 = sphi 0, %s22
      %p19 = scmp.ge.s32.totalorder %s18, 8
      %s28 = sphi 0, %s30
      %s31 = sphi 0, %s28
      %s32 = sphi 0, %s31
      %s48 = sphi 0, %s32
      %s54 = sphi 0, %s56
      %s57 = sphi 0, %s54
      %s58 = sphi 0, %s57
      %s74 = sphi 0, %s58
      %s78 = sphi 0, %s78
      %s80 = sphi 0, %s78
      %s81 = sphi 0, %s80
      %s95 = sphi 0, %s81
      %s99 = sphi 0, %s99
      %s101 = sphi 0, %s99
      %s102 = sphi 0, %s101
      %s116 = sphi 0, %s102
      %s120 = sphi 0, %s120
      %s122 = sphi 0, %s120
      %s123 = sphi 0, %s122
      %s137 = sphi 0, %s123
      %s141 = sphi 0, %s141
      %s143 = sphi 0, %s141
      %s144 = sphi 0, %s143
      %s158 = sphi 0, %s144
      %s162 = sphi 0, %s162
      %s164 = sphi 0, %s162
      %s165 = sphi 0, %s164
      %s179 = sphi 0, %s165
      %s183 = sphi 0, %s183
      %s185 = sphi 0, %s183
      %s186 = sphi 0, %s185
      %s200 = sphi 0, %s186
    $region4: #{nn_forward.1} parent=1 // loop_header_branch
      %21 = sbr.rel (%p19) target = $region8
    $region5: #{nn_forward.1} parent=1 // loop_body
      %s23 = ssub.s32 %s18, 1
      %s24 = ssub.s32 %s18, 2
      %s25 = sadd.s32 %s18, 1
      %s26 = ssub.s32 %s18, %s25
      %p27 = scmp.eq.s32.totalorder %s26, 0
      %s29 = sadd.s32 %s28, 1
      %s30 = scalar_select %p27, %s28, %s29
      %p33 = pneg %p27
      %p34 = scmp.eq.s32.totalorder %s18, 5
      %p35 = por %p33, %p34
      %p36 = scmp.ne.s32.totalorder %s28, %s31
      %p37 = scmp.eq.s32.totalorder %s18, 0
      %p38 = por %p36, %p37
      %p39 = scmp.ne.s32.totalorder %s28, %s31
      %p40 = scmp.eq.s32.totalorder %s23, 5
      %p41 = por %p39, %p40
      %p42 = scmp.ne.s32.totalorder %s31, %s32
      %p43 = scmp.eq.s32.totalorder %s23, 0
      %p44 = por %p42, %p43
      %p45 = scmp.ne.s32.totalorder %s31, %s32
      %p46 = scmp.eq.s32.totalorder %s24, 5
      %p47 = por %p45, %p46
      %p49 = scmp.ne.s32.totalorder %s32, %s48
      %p50 = scmp.eq.s32.totalorder %s24, 0
      %p51 = por %p49, %p50
      %s52 = ssub.s32 %s18, %s25
      %p53 = scmp.eq.s32.totalorder %s52, 0
      %s55 = sadd.s32 %s54, 1
      %s56 = scalar_select %p53, %s54, %s55
      %p59 = pneg %p53
      %p60 = scmp.eq.s32.totalorder %s18, 5
      %p61 = por %p59, %p60
      %p62 = scmp.ne.s32.totalorder %s54, %s57
      %p63 = scmp.eq.s32.totalorder %s18, 0
      %p64 = por %p62, %p63
      %p65 = scmp.ne.s32.totalorder %s54, %s57
      %p66 = scmp.eq.s32.totalorder %s23, 5
      %p67 = por %p65, %p66
      %p68 = scmp.ne.s32.totalorder %s57, %s58
      %p69 = scmp.eq.s32.totalorder %s23, 0
      %p70 = por %p68, %p69
      %p71 = scmp.ne.s32.totalorder %s57, %s58
      %p72 = scmp.eq.s32.totalorder %s24, 5
      %p73 = por %p71, %p72
      %p75 = scmp.ne.s32.totalorder %s58, %s74
      %p76 = scmp.eq.s32.totalorder %s24, 0
      %p77 = por %p75, %p76
      %s79 = sadd.s32 %s78, 1
      %p82 = scmp.eq.s32.totalorder %s18, 5
      %p83 = scmp.ne.s32.totalorder %s78, %s80
      %p84 = scmp.eq.s32.totalorder %s18, 0
      %p85 = por %p83, %p84
      %p86 = scmp.ne.s32.totalorder %s78, %s80
      %p87 = scmp.eq.s32.totalorder %s23, 5
      %p88 = por %p86, %p87
      %p89 = scmp.ne.s32.totalorder %s80, %s81
      %p90 = scmp.eq.s32.totalorder %s23, 0
      %p91 = por %p89, %p90
      %p92 = scmp.ne.s32.totalorder %s80, %s81
      %p93 = scmp.eq.s32.totalorder %s24, 5
      %p94 = por %p92, %p93
      %p96 = scmp.ne.s32.totalorder %s81, %s95
      %p97 = scmp.eq.s32.totalorder %s24, 0
      %p98 = por %p96, %p97
      %s100 = sadd.s32 %s99, 1
      %p103 = scmp.eq.s32.totalorder %s18, 5
      %p104 = scmp.ne.s32.totalorder %s99, %s101
      %p105 = scmp.eq.s32.totalorder %s18, 0
      %p106 = por %p104, %p105
      %p107 = scmp.ne.s32.totalorder %s99, %s101
      %p108 = scmp.eq.s32.totalorder %s23, 5
      %p109 = por %p107, %p108
      %p110 = scmp.ne.s32.totalorder %s101, %s102
      %p111 = scmp.eq.s32.totalorder %s23, 0
      %p112 = por %p110, %p111
      %p113 = scmp.ne.s32.totalorder %s101, %s102
      %p114 = scmp.eq.s32.totalorder %s24, 5
      %p115 = por %p113, %p114
      %p117 = scmp.ne.s32.totalorder %s102, %s116
      %p118 = scmp.eq.s32.totalorder %s24, 0
      %p119 = por %p117, %p118
      %s121 = sadd.s32 %s120, 1
      %p124 = scmp.eq.s32.totalorder %s18, 5
      %p125 = scmp.ne.s32.totalorder %s120, %s122
      %p126 = scmp.eq.s32.totalorder %s18, 0
      %p127 = por %p125, %p126
      %p128 = scmp.ne.s32.totalorder %s120, %s122
      %p129 = scmp.eq.s32.totalorder %s23, 5
      %p130 = por %p128, %p129
      %p131 = scmp.ne.s32.totalorder %s122, %s123
      %p132 = scmp.eq.s32.totalorder %s23, 0
      %p133 = por %p131, %p132
      %p134 = scmp.ne.s32.totalorder %s122, %s123
      %p135 = scmp.eq.s32.totalorder %s24, 5
      %p136 = por %p134, %p135
      %p138 = scmp.ne.s32.totalorder %s123, %s137
      %p139 = scmp.eq.s32.totalorder %s24, 0
      %p140 = por %p138, %p139
      %s142 = sadd.s32 %s141, 1
      %p145 = scmp.eq.s32.totalorder %s18, 5
      %p146 = scmp.ne.s32.totalorder %s141, %s143
      %p147 = scmp.eq.s32.totalorder %s18, 0
      %p148 = por %p146, %p147
      %p149 = scmp.ne.s32.totalorder %s141, %s143
      %p150 = scmp.eq.s32.totalorder %s23, 5
      %p151 = por %p149, %p150
      %p152 = scmp.ne.s32.totalorder %s143, %s144
      %p153 = scmp.eq.s32.totalorder %s23, 0
      %p154 = por %p152, %p153
      %p155 = scmp.ne.s32.totalorder %s143, %s144
      %p156 = scmp.eq.s32.totalorder %s24, 5
      %p157 = por %p155, %p156
      %p159 = scmp.ne.s32.totalorder %s144, %s158
      %p160 = scmp.eq.s32.totalorder %s24, 0
      %p161 = por %p159, %p160
      %s163 = sadd.s32 %s162, 1
      %p166 = scmp.eq.s32.totalorder %s18, 5
      %p167 = scmp.ne.s32.totalorder %s162, %s164
      %p168 = scmp.eq.s32.totalorder %s18, 0
      %p169 = por %p167, %p168
      %p170 = scmp.ne.s32.totalorder %s162, %s164
      %p171 = scmp.eq.s32.totalorder %s23, 5
      %p172 = por %p170, %p171
      %p173 = scmp.ne.s32.totalorder %s164, %s165
      %p174 = scmp.eq.s32.totalorder %s23, 0
      %p175 = por %p173, %p174
      %p176 = scmp.ne.s32.totalorder %s164, %s165
      %p177 = scmp.eq.s32.totalorder %s24, 5
      %p178 = por %p176, %p177
      %p180 = scmp.ne.s32.totalorder %s165, %s179
      %p181 = scmp.eq.s32.totalorder %s24, 0
      %p182 = por %p180, %p181
      %s184 = sadd.s32 %s183, 1
      %p187 = scmp.eq.s32.totalorder %s18, 5
      %p188 = scmp.ne.s32.totalorder %s183, %s185
      %p189 = scmp.eq.s32.totalorder %s18, 0
      %p190 = por %p188, %p189
      %p191 = scmp.ne.s32.totalorder %s183, %s185
      %p192 = scmp.eq.s32.totalorder %s23, 5
      %p193 = por %p191, %p192
      %p194 = scmp.ne.s32.totalorder %s185, %s186
      %p195 = scmp.eq.s32.totalorder %s23, 0
      %p196 = por %p194, %p195
      %p197 = scmp.ne.s32.totalorder %s185, %s186
      %p198 = scmp.eq.s32.totalorder %s24, 5
      %p199 = por %p197, %p198
      %p201 = scmp.ne.s32.totalorder %s186, %s200
      %p202 = scmp.eq.s32.totalorder %s24, 0
      %p203 = por %p201, %p202
      %p204 = scmp.le.s32.totalorder 1, %s18
      %p205 = scmp.lt.s32.totalorder %s18, 7
      %p206 = pnand %p204, %p205
      %p207 = pneg %p206
      // Predicated region
      $region9: #{nn_forward.1} parent=5 // pred_check
        _
      $region10: #{nn_forward.1} parent=5 // pred_check_branch
        %209 = sbr.rel (%p206) target = $region12
      $region11: #{nn_forward.1} parent=5 // pred_region
        %s210 = ssub.s32 %s18, 1
        // Predicated region
        $region13: #{nn_forward.1} parent=11 // pred_check
          %p211 = pneg %p91
        $region14: #{nn_forward.1} parent=11 // pred_check_branch
          %213 = sbr.rel (%p211) target = $region16
        $region15: #{nn_forward.1} parent=11 // pred_region
          %215 = vsyncadd [#allocation6], 0
          %s217 = sshll.u32 %s2, 4
          %s218 = int_to_ptr.hbm [resolvable:$true] %s217
          %s219 = sshll.u32 [#allocation5], 4
          %s220 = int_to_ptr.vmem [resolvable:$true] %s219
          %222 = dma.hbm_to_vmem [thread:$0]  %s218, 64, %s220, [#allocation6]
        $region16: #{nn_forward.1} parent=11 // pred_fallthru
          _
        // Predicated region
        $region17: #{nn_forward.1} parent=11 // pred_check
          %p223 = pneg %p112
        $region18: #{nn_forward.1} parent=11 // pred_check_branch
          %225 = sbr.rel (%p223) target = $region20
        $region19: #{nn_forward.1} parent=11 // pred_region
          %227 = vsyncadd [#allocation6], 0
          %s228 = sshll.u32 %s3, 4
          %s229 = int_to_ptr.hbm [resolvable:$true] %s228
          %s230 = sshll.u32 [#allocation7], 4
          %s231 = int_to_ptr.vmem [resolvable:$true] %s230
          %236 = dma.hbm_to_vmem [thread:$0]  %s229, 16384, %s231, [#allocation6], 256, 256, 16
        $region20: #{nn_forward.1} parent=11 // pred_fallthru
          _
        // Predicated region
        $region21: #{nn_forward.1} parent=11 // pred_check
          %p237 = pneg %p133
        $region22: #{nn_forward.1} parent=11 // pred_check_branch
          %239 = sbr.rel (%p237) target = $region24
        $region23: #{nn_forward.1} parent=11 // pred_region
          %241 = vsyncadd [#allocation9], 0
          %s243 = sshll.u32 %s4, 4
          %s244 = int_to_ptr.hbm [resolvable:$true] %s243
          %s245 = sshll.u32 [#allocation8], 4
          %s246 = int_to_ptr.vmem [resolvable:$true] %s245
          %248 = dma.hbm_to_vmem [thread:$0]  %s244, 32, %s246, [#allocation9]
        $region24: #{nn_forward.1} parent=11 // pred_fallthru
          _
        // Predicated region
        $region25: #{nn_forward.1} parent=11 // pred_check
          %p249 = pneg %p154
        $region26: #{nn_forward.1} parent=11 // pred_check_branch
          %251 = sbr.rel (%p249) target = $region28
        $region27: #{nn_forward.1} parent=11 // pred_region
          _
        $region28: #{nn_forward.1} parent=11 // pred_fallthru
          _
        // Predicated region
        $region29: #{nn_forward.1} parent=11 // pred_check
          %p252 = pneg %p175
        $region30: #{nn_forward.1} parent=11 // pred_check_branch
          %254 = sbr.rel (%p252) target = $region32
        $region31: #{nn_forward.1} parent=11 // pred_region
          %256 = vsyncadd [#allocation9], 0
          %s258 = sshll.u32 %s6, 4
          %s259 = int_to_ptr.hbm [resolvable:$true] %s258
          %s260 = sshll.u32 [#allocation10], 4
          %s261 = int_to_ptr.vmem [resolvable:$true] %s260
          %263 = dma.hbm_to_vmem [thread:$0]  %s259, 16, %s261, [#allocation9]
        $region32: #{nn_forward.1} parent=11 // pred_fallthru
          _
      $region12: #{nn_forward.1} parent=5 // pred_fallthru
        _
      %p264 = scmp.lt.s32.totalorder %s18, 6
      // Predicated region
      $region33: #{nn_forward.1} parent=5 // pred_check
        %p265 = pneg %p264
      $region34: #{nn_forward.1} parent=5 // pred_check_branch
        %267 = sbr.rel (%p265) target = $region36
      $region35: #{nn_forward.1} parent=5 // pred_region
        // Predicated region
        $region37: #{nn_forward.1} parent=35 // pred_check
          %p268 = pneg %p38
        $region38: #{nn_forward.1} parent=35 // pred_check_branch
          %270 = sbr.rel (%p268) target = $region40
        $region39: #{nn_forward.1} parent=35 // pred_region
          %s271 = smul.u32 16, %s18
          %p272 = scmp.lt.s32.totalorder %s271, 95
          %s273 = scalar_select %p272, %s271, 95
          %s274 = smul.addr %s273, 4
          %s275 = scalar_lea.vmem %s0, %s274
          %s276 = smul.u32 16, %s18
        $region40: #{nn_forward.1} parent=35 // pred_fallthru
          _
        // Predicated region
        $region41: #{nn_forward.1} parent=35 // pred_check
          %p277 = pneg %p64
        $region42: #{nn_forward.1} parent=35 // pred_check_branch
          %279 = sbr.rel (%p277) target = $region44
        $region43: #{nn_forward.1} parent=35 // pred_region
          %s280 = sand.u32 %s54, 1
          %s281 = scalar_lea.sflag [#allocation4], %s280
          %s282 = sand.u32 %s54, 1
          %s283 = smul.addr %s282, 4096
          %s284 = scalar_lea.vmem [#allocation3], %s283
          %s285 = smul.u32 256, %s18
          %287 = vsyncadd %s281, 0
          %s288 = smul.addr %s285, 4
          %s289 = smul.addr %s288, 4
          %s290 = scalar_lea.hbm %s1, %s289
          %s291 = sshll.u32 %s290, 4
          %s292 = int_to_ptr.hbm [resolvable:$true] %s291
          %s293 = sshll.u32 %s284, 4
          %s294 = int_to_ptr.vmem [resolvable:$true] %s293
          %299 = dma.hbm_to_vmem [thread:$0]  %s292, 65536, %s294, %s281, 256, 256, 16
        $region44: #{nn_forward.1} parent=35 // pred_fallthru
          _
      $region36: #{nn_forward.1} parent=5 // pred_fallthru
        _
      %p300 = scmp.le.s32.totalorder 1, %s18
      %p301 = scmp.lt.s32.totalorder %s18, 7
      %p302 = pnand %p300, %p301
      %p303 = pneg %p302
      // Predicated region
      $region45: #{nn_forward.1} parent=5 // pred_check
        _
      $region46: #{nn_forward.1} parent=5 // pred_check_branch
        %305 = sbr.rel (%p302) target = $region48
      $region47: #{nn_forward.1} parent=5 // pred_region
        %s306 = ssub.s32 %s18, 1
        %s307 = sand.u32 %s57, 1
        %s308 = scalar_lea.sflag [#allocation4], %s307
        %s309 = sand.u32 %s57, 1
        %s310 = smul.addr %s309, 4096
        %s311 = scalar_lea.vmem [#allocation3], %s310
        // Predicated region
        $region49: #{nn_forward.1} parent=47 // pred_check
          %p312 = pneg %p70
        $region50: #{nn_forward.1} parent=47 // pred_check_branch
          %314 = sbr.rel (%p312) target = $region52
        $region51: #{nn_forward.1} parent=47 // pred_region
          %316 = dma.done %s308, 65536
        $region52: #{nn_forward.1} parent=47 // pred_fallthru
          _
        // Predicated region
        $region53: #{nn_forward.1} parent=47 // pred_check
          %p317 = pneg %p91
        $region54: #{nn_forward.1} parent=47 // pred_check_branch
          %319 = sbr.rel (%p317) target = $region56
        $region55: #{nn_forward.1} parent=47 // pred_region
          %321 = dma.done [#allocation6], 64
        $region56: #{nn_forward.1} parent=47 // pred_fallthru
          _
        // Predicated region
        $region57: #{nn_forward.1} parent=47 // pred_check
          %p322 = pneg %p112
        $region58: #{nn_forward.1} parent=47 // pred_check_branch
          %324 = sbr.rel (%p322) target = $region60
        $region59: #{nn_forward.1} parent=47 // pred_region
          %326 = dma.done [#allocation6], 16384
        $region60: #{nn_forward.1} parent=47 // pred_fallthru
          _
        // Predicated region
        $region61: #{nn_forward.1} parent=47 // pred_check
          %p327 = pneg %p133
        $region62: #{nn_forward.1} parent=47 // pred_check_branch
          %329 = sbr.rel (%p327) target = $region64
        $region63: #{nn_forward.1} parent=47 // pred_region
          %331 = dma.done [#allocation9], 32
        $region64: #{nn_forward.1} parent=47 // pred_fallthru
          _
        // Predicated region
        $region65: #{nn_forward.1} parent=47 // pred_check
          %p332 = pneg %p175
        $region66: #{nn_forward.1} parent=47 // pred_check_branch
          %334 = sbr.rel (%p332) target = $region68
        $region67: #{nn_forward.1} parent=47 // pred_region
          %336 = dma.done [#allocation9], 16
        $region68: #{nn_forward.1} parent=47 // pred_fallthru
          _
        %s337 = smul.u32 16, %s23
        %p338 = scmp.lt.s32.totalorder %s337, 95
        %s339 = scalar_select %p338, %s337, 95
        %s340 = smul.addr %s339, 4
        %s341 = scalar_lea.vmem %s0, %s340
        %p342 = pneg %p44
        %p343 = pneg %p41
        %s344 = sand.u32 %s57, 1
        %s345 = scalar_lea.sflag [#allocation4], %s344
        %s346 = sand.u32 %s57, 1
        %s347 = smul.addr %s346, 4096
        %s348 = scalar_lea.vmem [#allocation3], %s347
        %p349 = pneg %p70
        %p350 = pneg %p67
        %p351 = pneg %p91
        %p352 = pneg %p88
        %p353 = pneg %p112
        %p354 = pneg %p109
        %p355 = pneg %p133
        %p356 = pneg %p130
        %p357 = pneg %p154
        %p358 = pneg %p151
        %p359 = pneg %p175
        %p360 = pneg %p172
        %p361 = pneg %p196
        %p362 = pneg %p193
        %s363 = smul.u32 16, %s23
        %p364 = scmp.lt.s32.totalorder %s363, 95
        %s365 = scalar_select %p364, %s363, 95
        %s366 = smul.addr %s365, 4
        %s367 = scalar_lea.vmem %s0, %s366
        %s368 = smul.u32 16, %s23
        %s369 = smul.u32 256, %s23
        %p370 = scmp.eq.s32.totalorder %s23, 0
        // Predicated region
        $region69: #{nn_forward.1} parent=47 // pred_check
          %p371 = pneg %p370
        $region70: #{nn_forward.1} parent=47 // pred_check_branch
          %373 = sbr.rel (%p371) target = $region72
        $region71: #{nn_forward.1} parent=47 // pred_region
          %374 = vst [vmem:[#allocation2] sm:$0xff] 0.0
          %375 = vst [vmem:[#allocation2 + $0x8] sm:$0xff] 0.0
          %376 = vst [vmem:[#allocation2 + $0x10] sm:$0xff] 0.0
          %377 = vst [vmem:[#allocation2 + $0x18] sm:$0xff] 0.0
        $region72: #{nn_forward.1} parent=47 // pred_fallthru
          _
        %v378 = vld [vmem:[#allocation2] sm:$0xff]
        %v379 = vld [vmem:[#allocation2 + $0x8] sm:$0xff]
        %v380 = vld [vmem:[#allocation2 + $0x10] sm:$0xff]
        %v381 = vld [vmem:[#allocation2 + $0x18] sm:$0xff]
        %v382 = vld [vmem:[%s367] sm:$0xff]
        %v383 = vld [vmem:[%s367 + $0x8] sm:$0xff]
        %v384 = vld [vmem:[%s367 + $0x10] sm:$0xff]
        %v385 = vld [vmem:[%s367 + $0x18] sm:$0xff]
        %v386 = vld [vmem:[%s367 + $0x20] sm:$0xff]
        %v387 = vld [vmem:[%s367 + $0x28] sm:$0xff]
        %v388 = vld [vmem:[%s367 + $0x30] sm:$0xff]
        %v389 = vld [vmem:[%s367 + $0x38] sm:$0xff]
        %v390 = vld [vmem:[%s311] sm:$0xff]
        %v391 = vld [vmem:[%s311 + $0x8] sm:$0xff]
        %v392 = vld [vmem:[%s311 + $0x10] sm:$0xff]
        %v393 = vld [vmem:[%s311 + $0x18] sm:$0xff]
        %v394 = vld [vmem:[%s311 + $0x20] sm:$0xff]
        %v395 = vld [vmem:[%s311 + $0x28] sm:$0xff]
        %v396 = vld [vmem:[%s311 + $0x30] sm:$0xff]
        %v397 = vld [vmem:[%s311 + $0x38] sm:$0xff]
        %v398 = vld [vmem:[%s311 + $0x40] sm:$0xff]
        %v399 = vld [vmem:[%s311 + $0x48] sm:$0xff]
        %v400 = vld [vmem:[%s311 + $0x50] sm:$0xff]
        %v401 = vld [vmem:[%s311 + $0x58] sm:$0xff]
        %v402 = vld [vmem:[%s311 + $0x60] sm:$0xff]
        %v403 = vld [vmem:[%s311 + $0x68] sm:$0xff]
        %v404 = vld [vmem:[%s311 + $0x70] sm:$0xff]
        %v405 = vld [vmem:[%s311 + $0x78] sm:$0xff]
        %v406 = vld [vmem:[%s311 + $0x80] sm:$0xff]
        %v407 = vld [vmem:[%s311 + $0x88] sm:$0xff]
        %v408 = vld [vmem:[%s311 + $0x90] sm:$0xff]
        %v409 = vld [vmem:[%s311 + $0x98] sm:$0xff]
        %v410 = vld [vmem:[%s311 + $0xa0] sm:$0xff]
        %v411 = vld [vmem:[%s311 + $0xa8] sm:$0xff]
        %v412 = vld [vmem:[%s311 + $0xb0] sm:$0xff]
        %v413 = vld [vmem:[%s311 + $0xb8] sm:$0xff]
        %v414 = vld [vmem:[%s311 + $0xc0] sm:$0xff]
        %v415 = vld [vmem:[%s311 + $0xc8] sm:$0xff]
        %v416 = vld [vmem:[%s311 + $0xd0] sm:$0xff]
        %v417 = vld [vmem:[%s311 + $0xd8] sm:$0xff]
        %v418 = vld [vmem:[%s311 + $0xe0] sm:$0xff]
        %v419 = vld [vmem:[%s311 + $0xe8] sm:$0xff]
        %v420 = vld [vmem:[%s311 + $0xf0] sm:$0xff]
        %v421 = vld [vmem:[%s311 + $0xf8] sm:$0xff]
        %v422 = vld [vmem:[%s311 + $0x100] sm:$0xff]
        %v423 = vld [vmem:[%s311 + $0x108] sm:$0xff]
        %v424 = vld [vmem:[%s311 + $0x110] sm:$0xff]
        %v425 = vld [vmem:[%s311 + $0x118] sm:$0xff]
        %v426 = vld [vmem:[%s311 + $0x120] sm:$0xff]
        %v427 = vld [vmem:[%s311 + $0x128] sm:$0xff]
        %v428 = vld [vmem:[%s311 + $0x130] sm:$0xff]
        %v429 = vld [vmem:[%s311 + $0x138] sm:$0xff]
        %v430 = vld [vmem:[%s311 + $0x140] sm:$0xff]
        %v431 = vld [vmem:[%s311 + $0x148] sm:$0xff]
        %v432 = vld [vmem:[%s311 + $0x150] sm:$0xff]
        %v433 = vld [vmem:[%s311 + $0x158] sm:$0xff]
        %v434 = vld [vmem:[%s311 + $0x160] sm:$0xff]
        %v435 = vld [vmem:[%s311 + $0x168] sm:$0xff]
        %v436 = vld [vmem:[%s311 + $0x170] sm:$0xff]
        %v437 = vld [vmem:[%s311 + $0x178] sm:$0xff]
        %v438 = vld [vmem:[%s311 + $0x180] sm:$0xff]
        %v439 = vld [vmem:[%s311 + $0x188] sm:$0xff]
        %v440 = vld [vmem:[%s311 + $0x190] sm:$0xff]
        %v441 = vld [vmem:[%s311 + $0x198] sm:$0xff]
        %v442 = vld [vmem:[%s311 + $0x1a0] sm:$0xff]
        %v443 = vld [vmem:[%s311 + $0x1a8] sm:$0xff]
        %v444 = vld [vmem:[%s311 + $0x1b0] sm:$0xff]
        %v445 = vld [vmem:[%s311 + $0x1b8] sm:$0xff]
        %v446 = vld [vmem:[%s311 + $0x1c0] sm:$0xff]
        %v447 = vld [vmem:[%s311 + $0x1c8] sm:$0xff]
        %v448 = vld [vmem:[%s311 + $0x1d0] sm:$0xff]
        %v449 = vld [vmem:[%s311 + $0x1d8] sm:$0xff]
        %v450 = vld [vmem:[%s311 + $0x1e0] sm:$0xff]
        %v451 = vld [vmem:[%s311 + $0x1e8] sm:$0xff]
        %v452 = vld [vmem:[%s311 + $0x1f0] sm:$0xff]
        %v453 = vld [vmem:[%s311 + $0x1f8] sm:$0xff]
        %v454 = vld [vmem:[%s311 + $0x200] sm:$0xff]
        %v455 = vld [vmem:[%s311 + $0x208] sm:$0xff]
        %v456 = vld [vmem:[%s311 + $0x210] sm:$0xff]
        %v457 = vld [vmem:[%s311 + $0x218] sm:$0xff]
        %v458 = vld [vmem:[%s311 + $0x220] sm:$0xff]
        %v459 = vld [vmem:[%s311 + $0x228] sm:$0xff]
        %v460 = vld [vmem:[%s311 + $0x230] sm:$0xff]
        %v461 = vld [vmem:[%s311 + $0x238] sm:$0xff]
        %v462 = vld [vmem:[%s311 + $0x240] sm:$0xff]
        %v463 = vld [vmem:[%s311 + $0x248] sm:$0xff]
        %v464 = vld [vmem:[%s311 + $0x250] sm:$0xff]
        %v465 = vld [vmem:[%s311 + $0x258] sm:$0xff]
        %v466 = vld [vmem:[%s311 + $0x260] sm:$0xff]
        %v467 = vld [vmem:[%s311 + $0x268] sm:$0xff]
        %v468 = vld [vmem:[%s311 + $0x270] sm:$0xff]
        %v469 = vld [vmem:[%s311 + $0x278] sm:$0xff]
        %v470 = vld [vmem:[%s311 + $0x280] sm:$0xff]
        %v471 = vld [vmem:[%s311 + $0x288] sm:$0xff]
        %v472 = vld [vmem:[%s311 + $0x290] sm:$0xff]
        %v473 = vld [vmem:[%s311 + $0x298] sm:$0xff]
        %v474 = vld [vmem:[%s311 + $0x2a0] sm:$0xff]
        %v475 = vld [vmem:[%s311 + $0x2a8] sm:$0xff]
        %v476 = vld [vmem:[%s311 + $0x2b0] sm:$0xff]
        %v477 = vld [vmem:[%s311 + $0x2b8] sm:$0xff]
        %v478 = vld [vmem:[%s311 + $0x2c0] sm:$0xff]
        %v479 = vld [vmem:[%s311 + $0x2c8] sm:$0xff]
        %v480 = vld [vmem:[%s311 + $0x2d0] sm:$0xff]
        %v481 = vld [vmem:[%s311 + $0x2d8] sm:$0xff]
        %v482 = vld [vmem:[%s311 + $0x2e0] sm:$0xff]
        %v483 = vld [vmem:[%s311 + $0x2e8] sm:$0xff]
        %v484 = vld [vmem:[%s311 + $0x2f0] sm:$0xff]
        %v485 = vld [vmem:[%s311 + $0x2f8] sm:$0xff]
        %v486 = vld [vmem:[%s311 + $0x300] sm:$0xff]
        %v487 = vld [vmem:[%s311 + $0x308] sm:$0xff]
        %v488 = vld [vmem:[%s311 + $0x310] sm:$0xff]
        %v489 = vld [vmem:[%s311 + $0x318] sm:$0xff]
        %v490 = vld [vmem:[%s311 + $0x320] sm:$0xff]
        %v491 = vld [vmem:[%s311 + $0x328] sm:$0xff]
        %v492 = vld [vmem:[%s311 + $0x330] sm:$0xff]
        %v493 = vld [vmem:[%s311 + $0x338] sm:$0xff]
        %v494 = vld [vmem:[%s311 + $0x340] sm:$0xff]
        %v495 = vld [vmem:[%s311 + $0x348] sm:$0xff]
        %v496 = vld [vmem:[%s311 + $0x350] sm:$0xff]
        %v497 = vld [vmem:[%s311 + $0x358] sm:$0xff]
        %v498 = vld [vmem:[%s311 + $0x360] sm:$0xff]
        %v499 = vld [vmem:[%s311 + $0x368] sm:$0xff]
        %v500 = vld [vmem:[%s311 + $0x370] sm:$0xff]
        %v501 = vld [vmem:[%s311 + $0x378] sm:$0xff]
        %v502 = vld [vmem:[%s311 + $0x380] sm:$0xff]
        %v503 = vld [vmem:[%s311 + $0x388] sm:$0xff]
        %v504 = vld [vmem:[%s311 + $0x390] sm:$0xff]
        %v505 = vld [vmem:[%s311 + $0x398] sm:$0xff]
        %v506 = vld [vmem:[%s311 + $0x3a0] sm:$0xff]
        %v507 = vld [vmem:[%s311 + $0x3a8] sm:$0xff]
        %v508 = vld [vmem:[%s311 + $0x3b0] sm:$0xff]
        %v509 = vld [vmem:[%s311 + $0x3b8] sm:$0xff]
        %v510 = vld [vmem:[%s311 + $0x3c0] sm:$0xff]
        %v511 = vld [vmem:[%s311 + $0x3c8] sm:$0xff]
        %v512 = vld [vmem:[%s311 + $0x3d0] sm:$0xff]
        %v513 = vld [vmem:[%s311 + $0x3d8] sm:$0xff]
        %v514 = vld [vmem:[%s311 + $0x3e0] sm:$0xff]
        %v515 = vld [vmem:[%s311 + $0x3e8] sm:$0xff]
        %v516 = vld [vmem:[%s311 + $0x3f0] sm:$0xff]
        %v517 = vld [vmem:[%s311 + $0x3f8] sm:$0xff]
        %v518 = vld [vmem:[%s311 + $0x400] sm:$0xff]
        %v519 = vld [vmem:[%s311 + $0x408] sm:$0xff]
        %v520 = vld [vmem:[%s311 + $0x410] sm:$0xff]
        %v521 = vld [vmem:[%s311 + $0x418] sm:$0xff]
        %v522 = vld [vmem:[%s311 + $0x420] sm:$0xff]
        %v523 = vld [vmem:[%s311 + $0x428] sm:$0xff]
        %v524 = vld [vmem:[%s311 + $0x430] sm:$0xff]
        %v525 = vld [vmem:[%s311 + $0x438] sm:$0xff]
        %v526 = vld [vmem:[%s311 + $0x440] sm:$0xff]
        %v527 = vld [vmem:[%s311 + $0x448] sm:$0xff]
        %v528 = vld [vmem:[%s311 + $0x450] sm:$0xff]
        %v529 = vld [vmem:[%s311 + $0x458] sm:$0xff]
        %v530 = vld [vmem:[%s311 + $0x460] sm:$0xff]
        %v531 = vld [vmem:[%s311 + $0x468] sm:$0xff]
        %v532 = vld [vmem:[%s311 + $0x470] sm:$0xff]
        %v533 = vld [vmem:[%s311 + $0x478] sm:$0xff]
        %v534 = vld [vmem:[%s311 + $0x480] sm:$0xff]
        %v535 = vld [vmem:[%s311 + $0x488] sm:$0xff]
        %v536 = vld [vmem:[%s311 + $0x490] sm:$0xff]
        %v537 = vld [vmem:[%s311 + $0x498] sm:$0xff]
        %v538 = vld [vmem:[%s311 + $0x4a0] sm:$0xff]
        %v539 = vld [vmem:[%s311 + $0x4a8] sm:$0xff]
        %v540 = vld [vmem:[%s311 + $0x4b0] sm:$0xff]
        %v541 = vld [vmem:[%s311 + $0x4b8] sm:$0xff]
        %v542 = vld [vmem:[%s311 + $0x4c0] sm:$0xff]
        %v543 = vld [vmem:[%s311 + $0x4c8] sm:$0xff]
        %v544 = vld [vmem:[%s311 + $0x4d0] sm:$0xff]
        %v545 = vld [vmem:[%s311 + $0x4d8] sm:$0xff]
        %v546 = vld [vmem:[%s311 + $0x4e0] sm:$0xff]
        %v547 = vld [vmem:[%s311 + $0x4e8] sm:$0xff]
        %v548 = vld [vmem:[%s311 + $0x4f0] sm:$0xff]
        %v549 = vld [vmem:[%s311 + $0x4f8] sm:$0xff]
        %v550 = vld [vmem:[%s311 + $0x500] sm:$0xff]
        %v551 = vld [vmem:[%s311 + $0x508] sm:$0xff]
        %v552 = vld [vmem:[%s311 + $0x510] sm:$0xff]
        %v553 = vld [vmem:[%s311 + $0x518] sm:$0xff]
        %v554 = vld [vmem:[%s311 + $0x520] sm:$0xff]
        %v555 = vld [vmem:[%s311 + $0x528] sm:$0xff]
        %v556 = vld [vmem:[%s311 + $0x530] sm:$0xff]
        %v557 = vld [vmem:[%s311 + $0x538] sm:$0xff]
        %v558 = vld [vmem:[%s311 + $0x540] sm:$0xff]
        %v559 = vld [vmem:[%s311 + $0x548] sm:$0xff]
        %v560 = vld [vmem:[%s311 + $0x550] sm:$0xff]
        %v561 = vld [vmem:[%s311 + $0x558] sm:$0xff]
        %v562 = vld [vmem:[%s311 + $0x560] sm:$0xff]
        %v563 = vld [vmem:[%s311 + $0x568] sm:$0xff]
        %v564 = vld [vmem:[%s311 + $0x570] sm:$0xff]
        %v565 = vld [vmem:[%s311 + $0x578] sm:$0xff]
        %v566 = vld [vmem:[%s311 + $0x580] sm:$0xff]
        %v567 = vld [vmem:[%s311 + $0x588] sm:$0xff]
        %v568 = vld [vmem:[%s311 + $0x590] sm:$0xff]
        %v569 = vld [vmem:[%s311 + $0x598] sm:$0xff]
        %v570 = vld [vmem:[%s311 + $0x5a0] sm:$0xff]
        %v571 = vld [vmem:[%s311 + $0x5a8] sm:$0xff]
        %v572 = vld [vmem:[%s311 + $0x5b0] sm:$0xff]
        %v573 = vld [vmem:[%s311 + $0x5b8] sm:$0xff]
        %v574 = vld [vmem:[%s311 + $0x5c0] sm:$0xff]
        %v575 = vld [vmem:[%s311 + $0x5c8] sm:$0xff]
        %v576 = vld [vmem:[%s311 + $0x5d0] sm:$0xff]
        %v577 = vld [vmem:[%s311 + $0x5d8] sm:$0xff]
        %v578 = vld [vmem:[%s311 + $0x5e0] sm:$0xff]
        %v579 = vld [vmem:[%s311 + $0x5e8] sm:$0xff]
        %v580 = vld [vmem:[%s311 + $0x5f0] sm:$0xff]
        %v581 = vld [vmem:[%s311 + $0x5f8] sm:$0xff]
        %v582 = vld [vmem:[%s311 + $0x600] sm:$0xff]
        %v583 = vld [vmem:[%s311 + $0x608] sm:$0xff]
        %v584 = vld [vmem:[%s311 + $0x610] sm:$0xff]
        %v585 = vld [vmem:[%s311 + $0x618] sm:$0xff]
        %v586 = vld [vmem:[%s311 + $0x620] sm:$0xff]
        %v587 = vld [vmem:[%s311 + $0x628] sm:$0xff]
        %v588 = vld [vmem:[%s311 + $0x630] sm:$0xff]
        %v589 = vld [vmem:[%s311 + $0x638] sm:$0xff]
        %v590 = vld [vmem:[%s311 + $0x640] sm:$0xff]
        %v591 = vld [vmem:[%s311 + $0x648] sm:$0xff]
        %v592 = vld [vmem:[%s311 + $0x650] sm:$0xff]
        %v593 = vld [vmem:[%s311 + $0x658] sm:$0xff]
        %v594 = vld [vmem:[%s311 + $0x660] sm:$0xff]
        %v595 = vld [vmem:[%s311 + $0x668] sm:$0xff]
        %v596 = vld [vmem:[%s311 + $0x670] sm:$0xff]
        %v597 = vld [vmem:[%s311 + $0x678] sm:$0xff]
        %v598 = vld [vmem:[%s311 + $0x680] sm:$0xff]
        %v599 = vld [vmem:[%s311 + $0x688] sm:$0xff]
        %v600 = vld [vmem:[%s311 + $0x690] sm:$0xff]
        %v601 = vld [vmem:[%s311 + $0x698] sm:$0xff]
        %v602 = vld [vmem:[%s311 + $0x6a0] sm:$0xff]
        %v603 = vld [vmem:[%s311 + $0x6a8] sm:$0xff]
        %v604 = vld [vmem:[%s311 + $0x6b0] sm:$0xff]
        %v605 = vld [vmem:[%s311 + $0x6b8] sm:$0xff]
        %v606 = vld [vmem:[%s311 + $0x6c0] sm:$0xff]
        %v607 = vld [vmem:[%s311 + $0x6c8] sm:$0xff]
        %v608 = vld [vmem:[%s311 + $0x6d0] sm:$0xff]
        %v609 = vld [vmem:[%s311 + $0x6d8] sm:$0xff]
        %v610 = vld [vmem:[%s311 + $0x6e0] sm:$0xff]
        %v611 = vld [vmem:[%s311 + $0x6e8] sm:$0xff]
        %v612 = vld [vmem:[%s311 + $0x6f0] sm:$0xff]
        %v613 = vld [vmem:[%s311 + $0x6f8] sm:$0xff]
        %v614 = vld [vmem:[%s311 + $0x700] sm:$0xff]
        %v615 = vld [vmem:[%s311 + $0x708] sm:$0xff]
        %v616 = vld [vmem:[%s311 + $0x710] sm:$0xff]
        %v617 = vld [vmem:[%s311 + $0x718] sm:$0xff]
        %v618 = vld [vmem:[%s311 + $0x720] sm:$0xff]
        %v619 = vld [vmem:[%s311 + $0x728] sm:$0xff]
        %v620 = vld [vmem:[%s311 + $0x730] sm:$0xff]
        %v621 = vld [vmem:[%s311 + $0x738] sm:$0xff]
        %v622 = vld [vmem:[%s311 + $0x740] sm:$0xff]
        %v623 = vld [vmem:[%s311 + $0x748] sm:$0xff]
        %v624 = vld [vmem:[%s311 + $0x750] sm:$0xff]
        %v625 = vld [vmem:[%s311 + $0x758] sm:$0xff]
        %v626 = vld [vmem:[%s311 + $0x760] sm:$0xff]
        %v627 = vld [vmem:[%s311 + $0x768] sm:$0xff]
        %v628 = vld [vmem:[%s311 + $0x770] sm:$0xff]
        %v629 = vld [vmem:[%s311 + $0x778] sm:$0xff]
        %v630 = vld [vmem:[%s311 + $0x780] sm:$0xff]
        %v631 = vld [vmem:[%s311 + $0x788] sm:$0xff]
        %v632 = vld [vmem:[%s311 + $0x790] sm:$0xff]
        %v633 = vld [vmem:[%s311 + $0x798] sm:$0xff]
        %v634 = vld [vmem:[%s311 + $0x7a0] sm:$0xff]
        %v635 = vld [vmem:[%s311 + $0x7a8] sm:$0xff]
        %v636 = vld [vmem:[%s311 + $0x7b0] sm:$0xff]
        %v637 = vld [vmem:[%s311 + $0x7b8] sm:$0xff]
        %v638 = vld [vmem:[%s311 + $0x7c0] sm:$0xff]
        %v639 = vld [vmem:[%s311 + $0x7c8] sm:$0xff]
        %v640 = vld [vmem:[%s311 + $0x7d0] sm:$0xff]
        %v641 = vld [vmem:[%s311 + $0x7d8] sm:$0xff]
        %v642 = vld [vmem:[%s311 + $0x7e0] sm:$0xff]
        %v643 = vld [vmem:[%s311 + $0x7e8] sm:$0xff]
        %v644 = vld [vmem:[%s311 + $0x7f0] sm:$0xff]
        %v645 = vld [vmem:[%s311 + $0x7f8] sm:$0xff]
        %v646 = vld [vmem:[%s311 + $0x800] sm:$0xff]
        %v647 = vld [vmem:[%s311 + $0x808] sm:$0xff]
        %v648 = vld [vmem:[%s311 + $0x810] sm:$0xff]
        %v649 = vld [vmem:[%s311 + $0x818] sm:$0xff]
        %v650 = vld [vmem:[%s311 + $0x820] sm:$0xff]
        %v651 = vld [vmem:[%s311 + $0x828] sm:$0xff]
        %v652 = vld [vmem:[%s311 + $0x830] sm:$0xff]
        %v653 = vld [vmem:[%s311 + $0x838] sm:$0xff]
        %v654 = vld [vmem:[%s311 + $0x840] sm:$0xff]
        %v655 = vld [vmem:[%s311 + $0x848] sm:$0xff]
        %v656 = vld [vmem:[%s311 + $0x850] sm:$0xff]
        %v657 = vld [vmem:[%s311 + $0x858] sm:$0xff]
        %v658 = vld [vmem:[%s311 + $0x860] sm:$0xff]
        %v659 = vld [vmem:[%s311 + $0x868] sm:$0xff]
        %v660 = vld [vmem:[%s311 + $0x870] sm:$0xff]
        %v661 = vld [vmem:[%s311 + $0x878] sm:$0xff]
        %v662 = vld [vmem:[%s311 + $0x880] sm:$0xff]
        %v663 = vld [vmem:[%s311 + $0x888] sm:$0xff]
        %v664 = vld [vmem:[%s311 + $0x890] sm:$0xff]
        %v665 = vld [vmem:[%s311 + $0x898] sm:$0xff]
        %v666 = vld [vmem:[%s311 + $0x8a0] sm:$0xff]
        %v667 = vld [vmem:[%s311 + $0x8a8] sm:$0xff]
        %v668 = vld [vmem:[%s311 + $0x8b0] sm:$0xff]
        %v669 = vld [vmem:[%s311 + $0x8b8] sm:$0xff]
        %v670 = vld [vmem:[%s311 + $0x8c0] sm:$0xff]
        %v671 = vld [vmem:[%s311 + $0x8c8] sm:$0xff]
        %v672 = vld [vmem:[%s311 + $0x8d0] sm:$0xff]
        %v673 = vld [vmem:[%s311 + $0x8d8] sm:$0xff]
        %v674 = vld [vmem:[%s311 + $0x8e0] sm:$0xff]
        %v675 = vld [vmem:[%s311 + $0x8e8] sm:$0xff]
        %v676 = vld [vmem:[%s311 + $0x8f0] sm:$0xff]
        %v677 = vld [vmem:[%s311 + $0x8f8] sm:$0xff]
        %v678 = vld [vmem:[%s311 + $0x900] sm:$0xff]
        %v679 = vld [vmem:[%s311 + $0x908] sm:$0xff]
        %v680 = vld [vmem:[%s311 + $0x910] sm:$0xff]
        %v681 = vld [vmem:[%s311 + $0x918] sm:$0xff]
        %v682 = vld [vmem:[%s311 + $0x920] sm:$0xff]
        %v683 = vld [vmem:[%s311 + $0x928] sm:$0xff]
        %v684 = vld [vmem:[%s311 + $0x930] sm:$0xff]
        %v685 = vld [vmem:[%s311 + $0x938] sm:$0xff]
        %v686 = vld [vmem:[%s311 + $0x940] sm:$0xff]
        %v687 = vld [vmem:[%s311 + $0x948] sm:$0xff]
        %v688 = vld [vmem:[%s311 + $0x950] sm:$0xff]
        %v689 = vld [vmem:[%s311 + $0x958] sm:$0xff]
        %v690 = vld [vmem:[%s311 + $0x960] sm:$0xff]
        %v691 = vld [vmem:[%s311 + $0x968] sm:$0xff]
        %v692 = vld [vmem:[%s311 + $0x970] sm:$0xff]
        %v693 = vld [vmem:[%s311 + $0x978] sm:$0xff]
        %v694 = vld [vmem:[%s311 + $0x980] sm:$0xff]
        %v695 = vld [vmem:[%s311 + $0x988] sm:$0xff]
        %v696 = vld [vmem:[%s311 + $0x990] sm:$0xff]
        %v697 = vld [vmem:[%s311 + $0x998] sm:$0xff]
        %v698 = vld [vmem:[%s311 + $0x9a0] sm:$0xff]
        %v699 = vld [vmem:[%s311 + $0x9a8] sm:$0xff]
        %v700 = vld [vmem:[%s311 + $0x9b0] sm:$0xff]
        %v701 = vld [vmem:[%s311 + $0x9b8] sm:$0xff]
        %v702 = vld [vmem:[%s311 + $0x9c0] sm:$0xff]
        %v703 = vld [vmem:[%s311 + $0x9c8] sm:$0xff]
        %v704 = vld [vmem:[%s311 + $0x9d0] sm:$0xff]
        %v705 = vld [vmem:[%s311 + $0x9d8] sm:$0xff]
        %v706 = vld [vmem:[%s311 + $0x9e0] sm:$0xff]
        %v707 = vld [vmem:[%s311 + $0x9e8] sm:$0xff]
        %v708 = vld [vmem:[%s311 + $0x9f0] sm:$0xff]
        %v709 = vld [vmem:[%s311 + $0x9f8] sm:$0xff]
        %v710 = vld [vmem:[%s311 + $0xa00] sm:$0xff]
        %v711 = vld [vmem:[%s311 + $0xa08] sm:$0xff]
        %v712 = vld [vmem:[%s311 + $0xa10] sm:$0xff]
        %v713 = vld [vmem:[%s311 + $0xa18] sm:$0xff]
        %v714 = vld [vmem:[%s311 + $0xa20] sm:$0xff]
        %v715 = vld [vmem:[%s311 + $0xa28] sm:$0xff]
        %v716 = vld [vmem:[%s311 + $0xa30] sm:$0xff]
        %v717 = vld [vmem:[%s311 + $0xa38] sm:$0xff]
        %v718 = vld [vmem:[%s311 + $0xa40] sm:$0xff]
        %v719 = vld [vmem:[%s311 + $0xa48] sm:$0xff]
        %v720 = vld [vmem:[%s311 + $0xa50] sm:$0xff]
        %v721 = vld [vmem:[%s311 + $0xa58] sm:$0xff]
        %v722 = vld [vmem:[%s311 + $0xa60] sm:$0xff]
        %v723 = vld [vmem:[%s311 + $0xa68] sm:$0xff]
        %v724 = vld [vmem:[%s311 + $0xa70] sm:$0xff]
        %v725 = vld [vmem:[%s311 + $0xa78] sm:$0xff]
        %v726 = vld [vmem:[%s311 + $0xa80] sm:$0xff]
        %v727 = vld [vmem:[%s311 + $0xa88] sm:$0xff]
        %v728 = vld [vmem:[%s311 + $0xa90] sm:$0xff]
        %v729 = vld [vmem:[%s311 + $0xa98] sm:$0xff]
        %v730 = vld [vmem:[%s311 + $0xaa0] sm:$0xff]
        %v731 = vld [vmem:[%s311 + $0xaa8] sm:$0xff]
        %v732 = vld [vmem:[%s311 + $0xab0] sm:$0xff]
        %v733 = vld [vmem:[%s311 + $0xab8] sm:$0xff]
        %v734 = vld [vmem:[%s311 + $0xac0] sm:$0xff]
        %v735 = vld [vmem:[%s311 + $0xac8] sm:$0xff]
        %v736 = vld [vmem:[%s311 + $0xad0] sm:$0xff]
        %v737 = vld [vmem:[%s311 + $0xad8] sm:$0xff]
        %v738 = vld [vmem:[%s311 + $0xae0] sm:$0xff]
        %v739 = vld [vmem:[%s311 + $0xae8] sm:$0xff]
        %v740 = vld [vmem:[%s311 + $0xaf0] sm:$0xff]
        %v741 = vld [vmem:[%s311 + $0xaf8] sm:$0xff]
        %v742 = vld [vmem:[%s311 + $0xb00] sm:$0xff]
        %v743 = vld [vmem:[%s311 + $0xb08] sm:$0xff]
        %v744 = vld [vmem:[%s311 + $0xb10] sm:$0xff]
        %v745 = vld [vmem:[%s311 + $0xb18] sm:$0xff]
        %v746 = vld [vmem:[%s311 + $0xb20] sm:$0xff]
        %v747 = vld [vmem:[%s311 + $0xb28] sm:$0xff]
        %v748 = vld [vmem:[%s311 + $0xb30] sm:$0xff]
        %v749 = vld [vmem:[%s311 + $0xb38] sm:$0xff]
        %v750 = vld [vmem:[%s311 + $0xb40] sm:$0xff]
        %v751 = vld [vmem:[%s311 + $0xb48] sm:$0xff]
        %v752 = vld [vmem:[%s311 + $0xb50] sm:$0xff]
        %v753 = vld [vmem:[%s311 + $0xb58] sm:$0xff]
        %v754 = vld [vmem:[%s311 + $0xb60] sm:$0xff]
        %v755 = vld [vmem:[%s311 + $0xb68] sm:$0xff]
        %v756 = vld [vmem:[%s311 + $0xb70] sm:$0xff]
        %v757 = vld [vmem:[%s311 + $0xb78] sm:$0xff]
        %v758 = vld [vmem:[%s311 + $0xb80] sm:$0xff]
        %v759 = vld [vmem:[%s311 + $0xb88] sm:$0xff]
        %v760 = vld [vmem:[%s311 + $0xb90] sm:$0xff]
        %v761 = vld [vmem:[%s311 + $0xb98] sm:$0xff]
        %v762 = vld [vmem:[%s311 + $0xba0] sm:$0xff]
        %v763 = vld [vmem:[%s311 + $0xba8] sm:$0xff]
        %v764 = vld [vmem:[%s311 + $0xbb0] sm:$0xff]
        %v765 = vld [vmem:[%s311 + $0xbb8] sm:$0xff]
        %v766 = vld [vmem:[%s311 + $0xbc0] sm:$0xff]
        %v767 = vld [vmem:[%s311 + $0xbc8] sm:$0xff]
        %v768 = vld [vmem:[%s311 + $0xbd0] sm:$0xff]
        %v769 = vld [vmem:[%s311 + $0xbd8] sm:$0xff]
        %v770 = vld [vmem:[%s311 + $0xbe0] sm:$0xff]
        %v771 = vld [vmem:[%s311 + $0xbe8] sm:$0xff]
        %v772 = vld [vmem:[%s311 + $0xbf0] sm:$0xff]
        %v773 = vld [vmem:[%s311 + $0xbf8] sm:$0xff]
        %v774 = vld [vmem:[%s311 + $0xc00] sm:$0xff]
        %v775 = vld [vmem:[%s311 + $0xc08] sm:$0xff]
        %v776 = vld [vmem:[%s311 + $0xc10] sm:$0xff]
        %v777 = vld [vmem:[%s311 + $0xc18] sm:$0xff]
        %v778 = vld [vmem:[%s311 + $0xc20] sm:$0xff]
        %v779 = vld [vmem:[%s311 + $0xc28] sm:$0xff]
        %v780 = vld [vmem:[%s311 + $0xc30] sm:$0xff]
        %v781 = vld [vmem:[%s311 + $0xc38] sm:$0xff]
        %v782 = vld [vmem:[%s311 + $0xc40] sm:$0xff]
        %v783 = vld [vmem:[%s311 + $0xc48] sm:$0xff]
        %v784 = vld [vmem:[%s311 + $0xc50] sm:$0xff]
        %v785 = vld [vmem:[%s311 + $0xc58] sm:$0xff]
        %v786 = vld [vmem:[%s311 + $0xc60] sm:$0xff]
        %v787 = vld [vmem:[%s311 + $0xc68] sm:$0xff]
        %v788 = vld [vmem:[%s311 + $0xc70] sm:$0xff]
        %v789 = vld [vmem:[%s311 + $0xc78] sm:$0xff]
        %v790 = vld [vmem:[%s311 + $0xc80] sm:$0xff]
        %v791 = vld [vmem:[%s311 + $0xc88] sm:$0xff]
        %v792 = vld [vmem:[%s311 + $0xc90] sm:$0xff]
        %v793 = vld [vmem:[%s311 + $0xc98] sm:$0xff]
        %v794 = vld [vmem:[%s311 + $0xca0] sm:$0xff]
        %v795 = vld [vmem:[%s311 + $0xca8] sm:$0xff]
        %v796 = vld [vmem:[%s311 + $0xcb0] sm:$0xff]
        %v797 = vld [vmem:[%s311 + $0xcb8] sm:$0xff]
        %v798 = vld [vmem:[%s311 + $0xcc0] sm:$0xff]
        %v799 = vld [vmem:[%s311 + $0xcc8] sm:$0xff]
        %v800 = vld [vmem:[%s311 + $0xcd0] sm:$0xff]
        %v801 = vld [vmem:[%s311 + $0xcd8] sm:$0xff]
        %v802 = vld [vmem:[%s311 + $0xce0] sm:$0xff]
        %v803 = vld [vmem:[%s311 + $0xce8] sm:$0xff]
        %v804 = vld [vmem:[%s311 + $0xcf0] sm:$0xff]
        %v805 = vld [vmem:[%s311 + $0xcf8] sm:$0xff]
        %v806 = vld [vmem:[%s311 + $0xd00] sm:$0xff]
        %v807 = vld [vmem:[%s311 + $0xd08] sm:$0xff]
        %v808 = vld [vmem:[%s311 + $0xd10] sm:$0xff]
        %v809 = vld [vmem:[%s311 + $0xd18] sm:$0xff]
        %v810 = vld [vmem:[%s311 + $0xd20] sm:$0xff]
        %v811 = vld [vmem:[%s311 + $0xd28] sm:$0xff]
        %v812 = vld [vmem:[%s311 + $0xd30] sm:$0xff]
        %v813 = vld [vmem:[%s311 + $0xd38] sm:$0xff]
        %v814 = vld [vmem:[%s311 + $0xd40] sm:$0xff]
        %v815 = vld [vmem:[%s311 + $0xd48] sm:$0xff]
        %v816 = vld [vmem:[%s311 + $0xd50] sm:$0xff]
        %v817 = vld [vmem:[%s311 + $0xd58] sm:$0xff]
        %v818 = vld [vmem:[%s311 + $0xd60] sm:$0xff]
        %v819 = vld [vmem:[%s311 + $0xd68] sm:$0xff]
        %v820 = vld [vmem:[%s311 + $0xd70] sm:$0xff]
        %v821 = vld [vmem:[%s311 + $0xd78] sm:$0xff]
        %v822 = vld [vmem:[%s311 + $0xd80] sm:$0xff]
        %v823 = vld [vmem:[%s311 + $0xd88] sm:$0xff]
        %v824 = vld [vmem:[%s311 + $0xd90] sm:$0xff]
        %v825 = vld [vmem:[%s311 + $0xd98] sm:$0xff]
        %v826 = vld [vmem:[%s311 + $0xda0] sm:$0xff]
        %v827 = vld [vmem:[%s311 + $0xda8] sm:$0xff]
        %v828 = vld [vmem:[%s311 + $0xdb0] sm:$0xff]
        %v829 = vld [vmem:[%s311 + $0xdb8] sm:$0xff]
        %v830 = vld [vmem:[%s311 + $0xdc0] sm:$0xff]
        %v831 = vld [vmem:[%s311 + $0xdc8] sm:$0xff]
        %v832 = vld [vmem:[%s311 + $0xdd0] sm:$0xff]
        %v833 = vld [vmem:[%s311 + $0xdd8] sm:$0xff]
        %v834 = vld [vmem:[%s311 + $0xde0] sm:$0xff]
        %v835 = vld [vmem:[%s311 + $0xde8] sm:$0xff]
        %v836 = vld [vmem:[%s311 + $0xdf0] sm:$0xff]
        %v837 = vld [vmem:[%s311 + $0xdf8] sm:$0xff]
        %v838 = vld [vmem:[%s311 + $0xe00] sm:$0xff]
        %v839 = vld [vmem:[%s311 + $0xe08] sm:$0xff]
        %v840 = vld [vmem:[%s311 + $0xe10] sm:$0xff]
        %v841 = vld [vmem:[%s311 + $0xe18] sm:$0xff]
        %v842 = vld [vmem:[%s311 + $0xe20] sm:$0xff]
        %v843 = vld [vmem:[%s311 + $0xe28] sm:$0xff]
        %v844 = vld [vmem:[%s311 + $0xe30] sm:$0xff]
        %v845 = vld [vmem:[%s311 + $0xe38] sm:$0xff]
        %v846 = vld [vmem:[%s311 + $0xe40] sm:$0xff]
        %v847 = vld [vmem:[%s311 + $0xe48] sm:$0xff]
        %v848 = vld [vmem:[%s311 + $0xe50] sm:$0xff]
        %v849 = vld [vmem:[%s311 + $0xe58] sm:$0xff]
        %v850 = vld [vmem:[%s311 + $0xe60] sm:$0xff]
        %v851 = vld [vmem:[%s311 + $0xe68] sm:$0xff]
        %v852 = vld [vmem:[%s311 + $0xe70] sm:$0xff]
        %v853 = vld [vmem:[%s311 + $0xe78] sm:$0xff]
        %v854 = vld [vmem:[%s311 + $0xe80] sm:$0xff]
        %v855 = vld [vmem:[%s311 + $0xe88] sm:$0xff]
        %v856 = vld [vmem:[%s311 + $0xe90] sm:$0xff]
        %v857 = vld [vmem:[%s311 + $0xe98] sm:$0xff]
        %v858 = vld [vmem:[%s311 + $0xea0] sm:$0xff]
        %v859 = vld [vmem:[%s311 + $0xea8] sm:$0xff]
        %v860 = vld [vmem:[%s311 + $0xeb0] sm:$0xff]
        %v861 = vld [vmem:[%s311 + $0xeb8] sm:$0xff]
        %v862 = vld [vmem:[%s311 + $0xec0] sm:$0xff]
        %v863 = vld [vmem:[%s311 + $0xec8] sm:$0xff]
        %v864 = vld [vmem:[%s311 + $0xed0] sm:$0xff]
        %v865 = vld [vmem:[%s311 + $0xed8] sm:$0xff]
        %v866 = vld [vmem:[%s311 + $0xee0] sm:$0xff]
        %v867 = vld [vmem:[%s311 + $0xee8] sm:$0xff]
        %v868 = vld [vmem:[%s311 + $0xef0] sm:$0xff]
        %v869 = vld [vmem:[%s311 + $0xef8] sm:$0xff]
        %v870 = vld [vmem:[%s311 + $0xf00] sm:$0xff]
        %v871 = vld [vmem:[%s311 + $0xf08] sm:$0xff]
        %v872 = vld [vmem:[%s311 + $0xf10] sm:$0xff]
        %v873 = vld [vmem:[%s311 + $0xf18] sm:$0xff]
        %v874 = vld [vmem:[%s311 + $0xf20] sm:$0xff]
        %v875 = vld [vmem:[%s311 + $0xf28] sm:$0xff]
        %v876 = vld [vmem:[%s311 + $0xf30] sm:$0xff]
        %v877 = vld [vmem:[%s311 + $0xf38] sm:$0xff]
        %v878 = vld [vmem:[%s311 + $0xf40] sm:$0xff]
        %v879 = vld [vmem:[%s311 + $0xf48] sm:$0xff]
        %v880 = vld [vmem:[%s311 + $0xf50] sm:$0xff]
        %v881 = vld [vmem:[%s311 + $0xf58] sm:$0xff]
        %v882 = vld [vmem:[%s311 + $0xf60] sm:$0xff]
        %v883 = vld [vmem:[%s311 + $0xf68] sm:$0xff]
        %v884 = vld [vmem:[%s311 + $0xf70] sm:$0xff]
        %v885 = vld [vmem:[%s311 + $0xf78] sm:$0xff]
        %v886 = vld [vmem:[%s311 + $0xf80] sm:$0xff]
        %v887 = vld [vmem:[%s311 + $0xf88] sm:$0xff]
        %v888 = vld [vmem:[%s311 + $0xf90] sm:$0xff]
        %v889 = vld [vmem:[%s311 + $0xf98] sm:$0xff]
        %v890 = vld [vmem:[%s311 + $0xfa0] sm:$0xff]
        %v891 = vld [vmem:[%s311 + $0xfa8] sm:$0xff]
        %v892 = vld [vmem:[%s311 + $0xfb0] sm:$0xff]
        %v893 = vld [vmem:[%s311 + $0xfb8] sm:$0xff]
        %v894 = vld [vmem:[%s311 + $0xfc0] sm:$0xff]
        %v895 = vld [vmem:[%s311 + $0xfc8] sm:$0xff]
        %v896 = vld [vmem:[%s311 + $0xfd0] sm:$0xff]
        %v897 = vld [vmem:[%s311 + $0xfd8] sm:$0xff]
        %v898 = vld [vmem:[%s311 + $0xfe0] sm:$0xff]
        %v899 = vld [vmem:[%s311 + $0xfe8] sm:$0xff]
        %v900 = vld [vmem:[%s311 + $0xff0] sm:$0xff]
        %v901 = vld [vmem:[%s311 + $0xff8] sm:$0xff]
        %v910 = vunpack.c.l.b16 %v382
        %v911 = vunpack.c.h.b16 %v382
        %v912 = vunpack.c.l.b16 %v383
        %v913 = vunpack.c.h.b16 %v383
        %v914 = vunpack.c.l.b16 %v384
        %v915 = vunpack.c.h.b16 %v384
        %v916 = vunpack.c.l.b16 %v385
        %v917 = vunpack.c.h.b16 %v385
        %v918 = vunpack.c.l.b16 %v386
        %v919 = vunpack.c.h.b16 %v386
        %v920 = vunpack.c.l.b16 %v387
        %v921 = vunpack.c.h.b16 %v387
        %v922 = vunpack.c.l.b16 %v388
        %v923 = vunpack.c.h.b16 %v388
        %v924 = vunpack.c.l.b16 %v389
        %v925 = vunpack.c.h.b16 %v389
        %v926 = vpack.c.b16 %v910, %v910
        %v927 = vpack.c.b16 %v911, %v911
        %v928 = vpack.c.b16 %v912, %v912
        %v929 = vpack.c.b16 %v913, %v913
        %v930 = vpack.c.b16 %v914, %v914
        %v931 = vpack.c.b16 %v915, %v915
        %v932 = vpack.c.b16 %v916, %v916
        %v933 = vpack.c.b16 %v917, %v917
        %v934 = vpack.c.b16 %v918, %v918
        %v935 = vpack.c.b16 %v919, %v919
        %v936 = vpack.c.b16 %v920, %v920
        %v937 = vpack.c.b16 %v921, %v921
        %v938 = vpack.c.b16 %v922, %v922
        %v939 = vpack.c.b16 %v923, %v923
        %v940 = vpack.c.b16 %v924, %v924
        %v941 = vpack.c.b16 %v925, %v925
        %v1470 = vunpack.c.l.b16 %v390
        %v1471 = vunpack.c.h.b16 %v390
        %v1472 = vunpack.c.l.b16 %v391
        %v1473 = vunpack.c.h.b16 %v391
        %v1474 = vunpack.c.l.b16 %v392
        %v1475 = vunpack.c.h.b16 %v392
        %v1476 = vunpack.c.l.b16 %v393
        %v1477 = vunpack.c.h.b16 %v393
        %v1478 = vunpack.c.l.b16 %v394
        %v1479 = vunpack.c.h.b16 %v394
        %v1480 = vunpack.c.l.b16 %v395
        %v1481 = vunpack.c.h.b16 %v395
        %v1482 = vunpack.c.l.b16 %v396
        %v1483 = vunpack.c.h.b16 %v396
        %v1484 = vunpack.c.l.b16 %v397
        %v1485 = vunpack.c.h.b16 %v397
        %v1486 = vunpack.c.l.b16 %v398
        %v1487 = vunpack.c.h.b16 %v398
        %v1488 = vunpack.c.l.b16 %v399
        %v1489 = vunpack.c.h.b16 %v399
        %v1490 = vunpack.c.l.b16 %v400
        %v1491 = vunpack.c.h.b16 %v400
        %v1492 = vunpack.c.l.b16 %v401
        %v1493 = vunpack.c.h.b16 %v401
        %v1494 = vunpack.c.l.b16 %v402
        %v1495 = vunpack.c.h.b16 %v402
        %v1496 = vunpack.c.l.b16 %v403
        %v1497 = vunpack.c.h.b16 %v403
        %v1498 = vunpack.c.l.b16 %v404
        %v1499 = vunpack.c.h.b16 %v404
        %v1500 = vunpack.c.l.b16 %v405
        %v1501 = vunpack.c.h.b16 %v405
        %v1502 = vunpack.c.l.b16 %v406
        %v1503 = vunpack.c.h.b16 %v406
        %v1504 = vunpack.c.l.b16 %v407
        %v1505 = vunpack.c.h.b16 %v407
        %v1506 = vunpack.c.l.b16 %v408
        %v1507 = vunpack.c.h.b16 %v408
        %v1508 = vunpack.c.l.b16 %v409
        %v1509 = vunpack.c.h.b16 %v409
        %v1510 = vunpack.c.l.b16 %v410
        %v1511 = vunpack.c.h.b16 %v410
        %v1512 = vunpack.c.l.b16 %v411
        %v1513 = vunpack.c.h.b16 %v411
        %v1514 = vunpack.c.l.b16 %v412
        %v1515 = vunpack.c.h.b16 %v412
        %v1516 = vunpack.c.l.b16 %v413
        %v1517 = vunpack.c.h.b16 %v413
        %v1518 = vunpack.c.l.b16 %v414
        %v1519 = vunpack.c.h.b16 %v414
        %v1520 = vunpack.c.l.b16 %v415
        %v1521 = vunpack.c.h.b16 %v415
        %v1522 = vunpack.c.l.b16 %v416
        %v1523 = vunpack.c.h.b16 %v416
        %v1524 = vunpack.c.l.b16 %v417
        %v1525 = vunpack.c.h.b16 %v417
        %v1526 = vunpack.c.l.b16 %v418
        %v1527 = vunpack.c.h.b16 %v418
        %v1528 = vunpack.c.l.b16 %v419
        %v1529 = vunpack.c.h.b16 %v419
        %v1530 = vunpack.c.l.b16 %v420
        %v1531 = vunpack.c.h.b16 %v420
        %v1532 = vunpack.c.l.b16 %v421
        %v1533 = vunpack.c.h.b16 %v421
        %v1534 = vunpack.c.l.b16 %v422
        %v1535 = vunpack.c.h.b16 %v422
        %v1536 = vunpack.c.l.b16 %v423
        %v1537 = vunpack.c.h.b16 %v423
        %v1538 = vunpack.c.l.b16 %v424
        %v1539 = vunpack.c.h.b16 %v424
        %v1540 = vunpack.c.l.b16 %v425
        %v1541 = vunpack.c.h.b16 %v425
        %v1542 = vunpack.c.l.b16 %v426
        %v1543 = vunpack.c.h.b16 %v426
        %v1544 = vunpack.c.l.b16 %v427
        %v1545 = vunpack.c.h.b16 %v427
        %v1546 = vunpack.c.l.b16 %v428
        %v1547 = vunpack.c.h.b16 %v428
        %v1548 = vunpack.c.l.b16 %v429
        %v1549 = vunpack.c.h.b16 %v429
        %v1550 = vunpack.c.l.b16 %v430
        %v1551 = vunpack.c.h.b16 %v430
        %v1552 = vunpack.c.l.b16 %v431
        %v1553 = vunpack.c.h.b16 %v431
        %v1554 = vunpack.c.l.b16 %v432
        %v1555 = vunpack.c.h.b16 %v432
        %v1556 = vunpack.c.l.b16 %v433
        %v1557 = vunpack.c.h.b16 %v433
        %v1558 = vunpack.c.l.b16 %v434
        %v1559 = vunpack.c.h.b16 %v434
        %v1560 = vunpack.c.l.b16 %v435
        %v1561 = vunpack.c.h.b16 %v435
        %v1562 = vunpack.c.l.b16 %v436
        %v1563 = vunpack.c.h.b16 %v436
        %v1564 = vunpack.c.l.b16 %v437
        %v1565 = vunpack.c.h.b16 %v437
        %v1566 = vunpack.c.l.b16 %v438
        %v1567 = vunpack.c.h.b16 %v438
        %v1568 = vunpack.c.l.b16 %v439
        %v1569 = vunpack.c.h.b16 %v439
        %v1570 = vunpack.c.l.b16 %v440
        %v1571 = vunpack.c.h.b16 %v440
        %v1572 = vunpack.c.l.b16 %v441
        %v1573 = vunpack.c.h.b16 %v441
        %v1574 = vunpack.c.l.b16 %v442
        %v1575 = vunpack.c.h.b16 %v442
        %v1576 = vunpack.c.l.b16 %v443
        %v1577 = vunpack.c.h.b16 %v443
        %v1578 = vunpack.c.l.b16 %v444
        %v1579 = vunpack.c.h.b16 %v444
        %v1580 = vunpack.c.l.b16 %v445
        %v1581 = vunpack.c.h.b16 %v445
        %v1582 = vunpack.c.l.b16 %v446
        %v1583 = vunpack.c.h.b16 %v446
        %v1584 = vunpack.c.l.b16 %v447
        %v1585 = vunpack.c.h.b16 %v447
        %v1586 = vunpack.c.l.b16 %v448
        %v1587 = vunpack.c.h.b16 %v448
        %v1588 = vunpack.c.l.b16 %v449
        %v1589 = vunpack.c.h.b16 %v449
        %v1590 = vunpack.c.l.b16 %v450
        %v1591 = vunpack.c.h.b16 %v450
        %v1592 = vunpack.c.l.b16 %v451
        %v1593 = vunpack.c.h.b16 %v451
        %v1594 = vunpack.c.l.b16 %v452
        %v1595 = vunpack.c.h.b16 %v452
        %v1596 = vunpack.c.l.b16 %v453
        %v1597 = vunpack.c.h.b16 %v453
        %v1598 = vunpack.c.l.b16 %v454
        %v1599 = vunpack.c.h.b16 %v454
        %v1600 = vunpack.c.l.b16 %v455
        %v1601 = vunpack.c.h.b16 %v455
        %v1602 = vunpack.c.l.b16 %v456
        %v1603 = vunpack.c.h.b16 %v456
        %v1604 = vunpack.c.l.b16 %v457
        %v1605 = vunpack.c.h.b16 %v457
        %v1606 = vunpack.c.l.b16 %v458
        %v1607 = vunpack.c.h.b16 %v458
        %v1608 = vunpack.c.l.b16 %v459
        %v1609 = vunpack.c.h.b16 %v459
        %v1610 = vunpack.c.l.b16 %v460
        %v1611 = vunpack.c.h.b16 %v460
        %v1612 = vunpack.c.l.b16 %v461
        %v1613 = vunpack.c.h.b16 %v461
        %v1614 = vunpack.c.l.b16 %v462
        %v1615 = vunpack.c.h.b16 %v462
        %v1616 = vunpack.c.l.b16 %v463
        %v1617 = vunpack.c.h.b16 %v463
        %v1618 = vunpack.c.l.b16 %v464
        %v1619 = vunpack.c.h.b16 %v464
        %v1620 = vunpack.c.l.b16 %v465
        %v1621 = vunpack.c.h.b16 %v465
        %v1622 = vunpack.c.l.b16 %v466
        %v1623 = vunpack.c.h.b16 %v466
        %v1624 = vunpack.c.l.b16 %v467
        %v1625 = vunpack.c.h.b16 %v467
        %v1626 = vunpack.c.l.b16 %v468
        %v1627 = vunpack.c.h.b16 %v468
        %v1628 = vunpack.c.l.b16 %v469
        %v1629 = vunpack.c.h.b16 %v469
        %v1630 = vunpack.c.l.b16 %v470
        %v1631 = vunpack.c.h.b16 %v470
        %v1632 = vunpack.c.l.b16 %v471
        %v1633 = vunpack.c.h.b16 %v471
        %v1634 = vunpack.c.l.b16 %v472
        %v1635 = vunpack.c.h.b16 %v472
        %v1636 = vunpack.c.l.b16 %v473
        %v1637 = vunpack.c.h.b16 %v473
        %v1638 = vunpack.c.l.b16 %v474
        %v1639 = vunpack.c.h.b16 %v474
        %v1640 = vunpack.c.l.b16 %v475
        %v1641 = vunpack.c.h.b16 %v475
        %v1642 = vunpack.c.l.b16 %v476
        %v1643 = vunpack.c.h.b16 %v476
        %v1644 = vunpack.c.l.b16 %v477
        %v1645 = vunpack.c.h.b16 %v477
        %v1646 = vunpack.c.l.b16 %v478
        %v1647 = vunpack.c.h.b16 %v478
        %v1648 = vunpack.c.l.b16 %v479
        %v1649 = vunpack.c.h.b16 %v479
        %v1650 = vunpack.c.l.b16 %v480
        %v1651 = vunpack.c.h.b16 %v480
        %v1652 = vunpack.c.l.b16 %v481
        %v1653 = vunpack.c.h.b16 %v481
        %v1654 = vunpack.c.l.b16 %v482
        %v1655 = vunpack.c.h.b16 %v482
        %v1656 = vunpack.c.l.b16 %v483
        %v1657 = vunpack.c.h.b16 %v483
        %v1658 = vunpack.c.l.b16 %v484
        %v1659 = vunpack.c.h.b16 %v484
        %v1660 = vunpack.c.l.b16 %v485
        %v1661 = vunpack.c.h.b16 %v485
        %v1662 = vunpack.c.l.b16 %v486
        %v1663 = vunpack.c.h.b16 %v486
        %v1664 = vunpack.c.l.b16 %v487
        %v1665 = vunpack.c.h.b16 %v487
        %v1666 = vunpack.c.l.b16 %v488
        %v1667 = vunpack.c.h.b16 %v488
        %v1668 = vunpack.c.l.b16 %v489
        %v1669 = vunpack.c.h.b16 %v489
        %v1670 = vunpack.c.l.b16 %v490
        %v1671 = vunpack.c.h.b16 %v490
        %v1672 = vunpack.c.l.b16 %v491
        %v1673 = vunpack.c.h.b16 %v491
        %v1674 = vunpack.c.l.b16 %v492
        %v1675 = vunpack.c.h.b16 %v492
        %v1676 = vunpack.c.l.b16 %v493
        %v1677 = vunpack.c.h.b16 %v493
        %v1678 = vunpack.c.l.b16 %v494
        %v1679 = vunpack.c.h.b16 %v494
        %v1680 = vunpack.c.l.b16 %v495
        %v1681 = vunpack.c.h.b16 %v495
        %v1682 = vunpack.c.l.b16 %v496
        %v1683 = vunpack.c.h.b16 %v496
        %v1684 = vunpack.c.l.b16 %v497
        %v1685 = vunpack.c.h.b16 %v497
        %v1686 = vunpack.c.l.b16 %v498
        %v1687 = vunpack.c.h.b16 %v498
        %v1688 = vunpack.c.l.b16 %v499
        %v1689 = vunpack.c.h.b16 %v499
        %v1690 = vunpack.c.l.b16 %v500
        %v1691 = vunpack.c.h.b16 %v500
        %v1692 = vunpack.c.l.b16 %v501
        %v1693 = vunpack.c.h.b16 %v501
        %v1694 = vunpack.c.l.b16 %v502
        %v1695 = vunpack.c.h.b16 %v502
        %v1696 = vunpack.c.l.b16 %v503
        %v1697 = vunpack.c.h.b16 %v503
        %v1698 = vunpack.c.l.b16 %v504
        %v1699 = vunpack.c.h.b16 %v504
        %v1700 = vunpack.c.l.b16 %v505
        %v1701 = vunpack.c.h.b16 %v505
        %v1702 = vunpack.c.l.b16 %v506
        %v1703 = vunpack.c.h.b16 %v506
        %v1704 = vunpack.c.l.b16 %v507
        %v1705 = vunpack.c.h.b16 %v507
        %v1706 = vunpack.c.l.b16 %v508
        %v1707 = vunpack.c.h.b16 %v508
        %v1708 = vunpack.c.l.b16 %v509
        %v1709 = vunpack.c.h.b16 %v509
        %v1710 = vunpack.c.l.b16 %v510
        %v1711 = vunpack.c.h.b16 %v510
        %v1712 = vunpack.c.l.b16 %v511
        %v1713 = vunpack.c.h.b16 %v511
        %v1714 = vunpack.c.l.b16 %v512
        %v1715 = vunpack.c.h.b16 %v512
        %v1716 = vunpack.c.l.b16 %v513
        %v1717 = vunpack.c.h.b16 %v513
        %v1718 = vunpack.c.l.b16 %v514
        %v1719 = vunpack.c.h.b16 %v514
        %v1720 = vunpack.c.l.b16 %v515
        %v1721 = vunpack.c.h.b16 %v515
        %v1722 = vunpack.c.l.b16 %v516
        %v1723 = vunpack.c.h.b16 %v516
        %v1724 = vunpack.c.l.b16 %v517
        %v1725 = vunpack.c.h.b16 %v517
        %v1726 = vunpack.c.l.b16 %v518
        %v1727 = vunpack.c.h.b16 %v518
        %v1728 = vunpack.c.l.b16 %v519
        %v1729 = vunpack.c.h.b16 %v519
        %v1730 = vunpack.c.l.b16 %v520
        %v1731 = vunpack.c.h.b16 %v520
        %v1732 = vunpack.c.l.b16 %v521
        %v1733 = vunpack.c.h.b16 %v521
        %v1734 = vunpack.c.l.b16 %v522
        %v1735 = vunpack.c.h.b16 %v522
        %v1736 = vunpack.c.l.b16 %v523
        %v1737 = vunpack.c.h.b16 %v523
        %v1738 = vunpack.c.l.b16 %v524
        %v1739 = vunpack.c.h.b16 %v524
        %v1740 = vunpack.c.l.b16 %v525
        %v1741 = vunpack.c.h.b16 %v525
        %v1742 = vunpack.c.l.b16 %v526
        %v1743 = vunpack.c.h.b16 %v526
        %v1744 = vunpack.c.l.b16 %v527
        %v1745 = vunpack.c.h.b16 %v527
        %v1746 = vunpack.c.l.b16 %v528
        %v1747 = vunpack.c.h.b16 %v528
        %v1748 = vunpack.c.l.b16 %v529
        %v1749 = vunpack.c.h.b16 %v529
        %v1750 = vunpack.c.l.b16 %v530
        %v1751 = vunpack.c.h.b16 %v530
        %v1752 = vunpack.c.l.b16 %v531
        %v1753 = vunpack.c.h.b16 %v531
        %v1754 = vunpack.c.l.b16 %v532
        %v1755 = vunpack.c.h.b16 %v532
        %v1756 = vunpack.c.l.b16 %v533
        %v1757 = vunpack.c.h.b16 %v533
        %v1758 = vunpack.c.l.b16 %v534
        %v1759 = vunpack.c.h.b16 %v534
        %v1760 = vunpack.c.l.b16 %v535
        %v1761 = vunpack.c.h.b16 %v535
        %v1762 = vunpack.c.l.b16 %v536
        %v1763 = vunpack.c.h.b16 %v536
        %v1764 = vunpack.c.l.b16 %v537
        %v1765 = vunpack.c.h.b16 %v537
        %v1766 = vunpack.c.l.b16 %v538
        %v1767 = vunpack.c.h.b16 %v538
        %v1768 = vunpack.c.l.b16 %v539
        %v1769 = vunpack.c.h.b16 %v539
        %v1770 = vunpack.c.l.b16 %v540
        %v1771 = vunpack.c.h.b16 %v540
        %v1772 = vunpack.c.l.b16 %v541
        %v1773 = vunpack.c.h.b16 %v541
        %v1774 = vunpack.c.l.b16 %v542
        %v1775 = vunpack.c.h.b16 %v542
        %v1776 = vunpack.c.l.b16 %v543
        %v1777 = vunpack.c.h.b16 %v543
        %v1778 = vunpack.c.l.b16 %v544
        %v1779 = vunpack.c.h.b16 %v544
        %v1780 = vunpack.c.l.b16 %v545
        %v1781 = vunpack.c.h.b16 %v545
        %v1782 = vunpack.c.l.b16 %v546
        %v1783 = vunpack.c.h.b16 %v546
        %v1784 = vunpack.c.l.b16 %v547
        %v1785 = vunpack.c.h.b16 %v547
        %v1786 = vunpack.c.l.b16 %v548
        %v1787 = vunpack.c.h.b16 %v548
        %v1788 = vunpack.c.l.b16 %v549
        %v1789 = vunpack.c.h.b16 %v549
        %v1790 = vunpack.c.l.b16 %v550
        %v1791 = vunpack.c.h.b16 %v550
        %v1792 = vunpack.c.l.b16 %v551
        %v1793 = vunpack.c.h.b16 %v551
        %v1794 = vunpack.c.l.b16 %v552
        %v1795 = vunpack.c.h.b16 %v552
        %v1796 = vunpack.c.l.b16 %v553
        %v1797 = vunpack.c.h.b16 %v553
        %v1798 = vunpack.c.l.b16 %v554
        %v1799 = vunpack.c.h.b16 %v554
        %v1800 = vunpack.c.l.b16 %v555
        %v1801 = vunpack.c.h.b16 %v555
        %v1802 = vunpack.c.l.b16 %v556
        %v1803 = vunpack.c.h.b16 %v556
        %v1804 = vunpack.c.l.b16 %v557
        %v1805 = vunpack.c.h.b16 %v557
        %v1806 = vunpack.c.l.b16 %v558
        %v1807 = vunpack.c.h.b16 %v558
        %v1808 = vunpack.c.l.b16 %v559
        %v1809 = vunpack.c.h.b16 %v559
        %v1810 = vunpack.c.l.b16 %v560
        %v1811 = vunpack.c.h.b16 %v560
        %v1812 = vunpack.c.l.b16 %v561
        %v1813 = vunpack.c.h.b16 %v561
        %v1814 = vunpack.c.l.b16 %v562
        %v1815 = vunpack.c.h.b16 %v562
        %v1816 = vunpack.c.l.b16 %v563
        %v1817 = vunpack.c.h.b16 %v563
        %v1818 = vunpack.c.l.b16 %v564
        %v1819 = vunpack.c.h.b16 %v564
        %v1820 = vunpack.c.l.b16 %v565
        %v1821 = vunpack.c.h.b16 %v565
        %v1822 = vunpack.c.l.b16 %v566
        %v1823 = vunpack.c.h.b16 %v566
        %v1824 = vunpack.c.l.b16 %v567
        %v1825 = vunpack.c.h.b16 %v567
        %v1826 = vunpack.c.l.b16 %v568
        %v1827 = vunpack.c.h.b16 %v568
        %v1828 = vunpack.c.l.b16 %v569
        %v1829 = vunpack.c.h.b16 %v569
        %v1830 = vunpack.c.l.b16 %v570
        %v1831 = vunpack.c.h.b16 %v570
        %v1832 = vunpack.c.l.b16 %v571
        %v1833 = vunpack.c.h.b16 %v571
        %v1834 = vunpack.c.l.b16 %v572
        %v1835 = vunpack.c.h.b16 %v572
        %v1836 = vunpack.c.l.b16 %v573
        %v1837 = vunpack.c.h.b16 %v573
        %v1838 = vunpack.c.l.b16 %v574
        %v1839 = vunpack.c.h.b16 %v574
        %v1840 = vunpack.c.l.b16 %v575
        %v1841 = vunpack.c.h.b16 %v575
        %v1842 = vunpack.c.l.b16 %v576
        %v1843 = vunpack.c.h.b16 %v576
        %v1844 = vunpack.c.l.b16 %v577
        %v1845 = vunpack.c.h.b16 %v577
        %v1846 = vunpack.c.l.b16 %v578
        %v1847 = vunpack.c.h.b16 %v578
        %v1848 = vunpack.c.l.b16 %v579
        %v1849 = vunpack.c.h.b16 %v579
        %v1850 = vunpack.c.l.b16 %v580
        %v1851 = vunpack.c.h.b16 %v580
        %v1852 = vunpack.c.l.b16 %v581
        %v1853 = vunpack.c.h.b16 %v581
        %v1854 = vunpack.c.l.b16 %v582
        %v1855 = vunpack.c.h.b16 %v582
        %v1856 = vunpack.c.l.b16 %v583
        %v1857 = vunpack.c.h.b16 %v583
        %v1858 = vunpack.c.l.b16 %v584
        %v1859 = vunpack.c.h.b16 %v584
        %v1860 = vunpack.c.l.b16 %v585
        %v1861 = vunpack.c.h.b16 %v585
        %v1862 = vunpack.c.l.b16 %v586
        %v1863 = vunpack.c.h.b16 %v586
        %v1864 = vunpack.c.l.b16 %v587
        %v1865 = vunpack.c.h.b16 %v587
        %v1866 = vunpack.c.l.b16 %v588
        %v1867 = vunpack.c.h.b16 %v588
        %v1868 = vunpack.c.l.b16 %v589
        %v1869 = vunpack.c.h.b16 %v589
        %v1870 = vunpack.c.l.b16 %v590
        %v1871 = vunpack.c.h.b16 %v590
        %v1872 = vunpack.c.l.b16 %v591
        %v1873 = vunpack.c.h.b16 %v591
        %v1874 = vunpack.c.l.b16 %v592
        %v1875 = vunpack.c.h.b16 %v592
        %v1876 = vunpack.c.l.b16 %v593
        %v1877 = vunpack.c.h.b16 %v593
        %v1878 = vunpack.c.l.b16 %v594
        %v1879 = vunpack.c.h.b16 %v594
        %v1880 = vunpack.c.l.b16 %v595
        %v1881 = vunpack.c.h.b16 %v595
        %v1882 = vunpack.c.l.b16 %v596
        %v1883 = vunpack.c.h.b16 %v596
        %v1884 = vunpack.c.l.b16 %v597
        %v1885 = vunpack.c.h.b16 %v597
        %v1886 = vunpack.c.l.b16 %v598
        %v1887 = vunpack.c.h.b16 %v598
        %v1888 = vunpack.c.l.b16 %v599
        %v1889 = vunpack.c.h.b16 %v599
        %v1890 = vunpack.c.l.b16 %v600
        %v1891 = vunpack.c.h.b16 %v600
        %v1892 = vunpack.c.l.b16 %v601
        %v1893 = vunpack.c.h.b16 %v601
        %v1894 = vunpack.c.l.b16 %v602
        %v1895 = vunpack.c.h.b16 %v602
        %v1896 = vunpack.c.l.b16 %v603
        %v1897 = vunpack.c.h.b16 %v603
        %v1898 = vunpack.c.l.b16 %v604
        %v1899 = vunpack.c.h.b16 %v604
        %v1900 = vunpack.c.l.b16 %v605
        %v1901 = vunpack.c.h.b16 %v605
        %v1902 = vunpack.c.l.b16 %v606
        %v1903 = vunpack.c.h.b16 %v606
        %v1904 = vunpack.c.l.b16 %v607
        %v1905 = vunpack.c.h.b16 %v607
        %v1906 = vunpack.c.l.b16 %v608
        %v1907 = vunpack.c.h.b16 %v608
        %v1908 = vunpack.c.l.b16 %v609
        %v1909 = vunpack.c.h.b16 %v609
        %v1910 = vunpack.c.l.b16 %v610
        %v1911 = vunpack.c.h.b16 %v610
        %v1912 = vunpack.c.l.b16 %v611
        %v1913 = vunpack.c.h.b16 %v611
        %v1914 = vunpack.c.l.b16 %v612
        %v1915 = vunpack.c.h.b16 %v612
        %v1916 = vunpack.c.l.b16 %v613
        %v1917 = vunpack.c.h.b16 %v613
        %v1918 = vunpack.c.l.b16 %v614
        %v1919 = vunpack.c.h.b16 %v614
        %v1920 = vunpack.c.l.b16 %v615
        %v1921 = vunpack.c.h.b16 %v615
        %v1922 = vunpack.c.l.b16 %v616
        %v1923 = vunpack.c.h.b16 %v616
        %v1924 = vunpack.c.l.b16 %v617
        %v1925 = vunpack.c.h.b16 %v617
        %v1926 = vunpack.c.l.b16 %v618
        %v1927 = vunpack.c.h.b16 %v618
        %v1928 = vunpack.c.l.b16 %v619
        %v1929 = vunpack.c.h.b16 %v619
        %v1930 = vunpack.c.l.b16 %v620
        %v1931 = vunpack.c.h.b16 %v620
        %v1932 = vunpack.c.l.b16 %v621
        %v1933 = vunpack.c.h.b16 %v621
        %v1934 = vunpack.c.l.b16 %v622
        %v1935 = vunpack.c.h.b16 %v622
        %v1936 = vunpack.c.l.b16 %v623
        %v1937 = vunpack.c.h.b16 %v623
        %v1938 = vunpack.c.l.b16 %v624
        %v1939 = vunpack.c.h.b16 %v624
        %v1940 = vunpack.c.l.b16 %v625
        %v1941 = vunpack.c.h.b16 %v625
        %v1942 = vunpack.c.l.b16 %v626
        %v1943 = vunpack.c.h.b16 %v626
        %v1944 = vunpack.c.l.b16 %v627
        %v1945 = vunpack.c.h.b16 %v627
        %v1946 = vunpack.c.l.b16 %v628
        %v1947 = vunpack.c.h.b16 %v628
        %v1948 = vunpack.c.l.b16 %v629
        %v1949 = vunpack.c.h.b16 %v629
        %v1950 = vunpack.c.l.b16 %v630
        %v1951 = vunpack.c.h.b16 %v630
        %v1952 = vunpack.c.l.b16 %v631
        %v1953 = vunpack.c.h.b16 %v631
        %v1954 = vunpack.c.l.b16 %v632
        %v1955 = vunpack.c.h.b16 %v632
        %v1956 = vunpack.c.l.b16 %v633
        %v1957 = vunpack.c.h.b16 %v633
        %v1958 = vunpack.c.l.b16 %v634
        %v1959 = vunpack.c.h.b16 %v634
        %v1960 = vunpack.c.l.b16 %v635
        %v1961 = vunpack.c.h.b16 %v635
        %v1962 = vunpack.c.l.b16 %v636
        %v1963 = vunpack.c.h.b16 %v636
        %v1964 = vunpack.c.l.b16 %v637
        %v1965 = vunpack.c.h.b16 %v637
        %v1966 = vunpack.c.l.b16 %v638
        %v1967 = vunpack.c.h.b16 %v638
        %v1968 = vunpack.c.l.b16 %v639
        %v1969 = vunpack.c.h.b16 %v639
        %v1970 = vunpack.c.l.b16 %v640
        %v1971 = vunpack.c.h.b16 %v640
        %v1972 = vunpack.c.l.b16 %v641
        %v1973 = vunpack.c.h.b16 %v641
        %v1974 = vunpack.c.l.b16 %v642
        %v1975 = vunpack.c.h.b16 %v642
        %v1976 = vunpack.c.l.b16 %v643
        %v1977 = vunpack.c.h.b16 %v643
        %v1978 = vunpack.c.l.b16 %v644
        %v1979 = vunpack.c.h.b16 %v644
        %v1980 = vunpack.c.l.b16 %v645
        %v1981 = vunpack.c.h.b16 %v645
        %v1982 = vunpack.c.l.b16 %v646
        %v1983 = vunpack.c.h.b16 %v646
        %v1984 = vunpack.c.l.b16 %v647
        %v1985 = vunpack.c.h.b16 %v647
        %v1986 = vunpack.c.l.b16 %v648
        %v1987 = vunpack.c.h.b16 %v648
        %v1988 = vunpack.c.l.b16 %v649
        %v1989 = vunpack.c.h.b16 %v649
        %v1990 = vunpack.c.l.b16 %v650
        %v1991 = vunpack.c.h.b16 %v650
        %v1992 = vunpack.c.l.b16 %v651
        %v1993 = vunpack.c.h.b16 %v651
        %v1994 = vunpack.c.l.b16 %v652
        %v1995 = vunpack.c.h.b16 %v652
        %v1996 = vunpack.c.l.b16 %v653
        %v1997 = vunpack.c.h.b16 %v653
        %v1998 = vunpack.c.l.b16 %v654
        %v1999 = vunpack.c.h.b16 %v654
        %v2000 = vunpack.c.l.b16 %v655
        %v2001 = vunpack.c.h.b16 %v655
        %v2002 = vunpack.c.l.b16 %v656
        %v2003 = vunpack.c.h.b16 %v656
        %v2004 = vunpack.c.l.b16 %v657
        %v2005 = vunpack.c.h.b16 %v657
        %v2006 = vunpack.c.l.b16 %v658
        %v2007 = vunpack.c.h.b16 %v658
        %v2008 = vunpack.c.l.b16 %v659
        %v2009 = vunpack.c.h.b16 %v659
        %v2010 = vunpack.c.l.b16 %v660
        %v2011 = vunpack.c.h.b16 %v660
        %v2012 = vunpack.c.l.b16 %v661
        %v2013 = vunpack.c.h.b16 %v661
        %v2014 = vunpack.c.l.b16 %v662
        %v2015 = vunpack.c.h.b16 %v662
        %v2016 = vunpack.c.l.b16 %v663
        %v2017 = vunpack.c.h.b16 %v663
        %v2018 = vunpack.c.l.b16 %v664
        %v2019 = vunpack.c.h.b16 %v664
        %v2020 = vunpack.c.l.b16 %v665
        %v2021 = vunpack.c.h.b16 %v665
        %v2022 = vunpack.c.l.b16 %v666
        %v2023 = vunpack.c.h.b16 %v666
        %v2024 = vunpack.c.l.b16 %v667
        %v2025 = vunpack.c.h.b16 %v667
        %v2026 = vunpack.c.l.b16 %v668
        %v2027 = vunpack.c.h.b16 %v668
        %v2028 = vunpack.c.l.b16 %v669
        %v2029 = vunpack.c.h.b16 %v669
        %v2030 = vunpack.c.l.b16 %v670
        %v2031 = vunpack.c.h.b16 %v670
        %v2032 = vunpack.c.l.b16 %v671
        %v2033 = vunpack.c.h.b16 %v671
        %v2034 = vunpack.c.l.b16 %v672
        %v2035 = vunpack.c.h.b16 %v672
        %v2036 = vunpack.c.l.b16 %v673
        %v2037 = vunpack.c.h.b16 %v673
        %v2038 = vunpack.c.l.b16 %v674
        %v2039 = vunpack.c.h.b16 %v674
        %v2040 = vunpack.c.l.b16 %v675
        %v2041 = vunpack.c.h.b16 %v675
        %v2042 = vunpack.c.l.b16 %v676
        %v2043 = vunpack.c.h.b16 %v676
        %v2044 = vunpack.c.l.b16 %v677
        %v2045 = vunpack.c.h.b16 %v677
        %v2046 = vunpack.c.l.b16 %v678
        %v2047 = vunpack.c.h.b16 %v678
        %v2048 = vunpack.c.l.b16 %v679
        %v2049 = vunpack.c.h.b16 %v679
        %v2050 = vunpack.c.l.b16 %v680
        %v2051 = vunpack.c.h.b16 %v680
        %v2052 = vunpack.c.l.b16 %v681
        %v2053 = vunpack.c.h.b16 %v681
        %v2054 = vunpack.c.l.b16 %v682
        %v2055 = vunpack.c.h.b16 %v682
        %v2056 = vunpack.c.l.b16 %v683
        %v2057 = vunpack.c.h.b16 %v683
        %v2058 = vunpack.c.l.b16 %v684
        %v2059 = vunpack.c.h.b16 %v684
        %v2060 = vunpack.c.l.b16 %v685
        %v2061 = vunpack.c.h.b16 %v685
        %v2062 = vunpack.c.l.b16 %v686
        %v2063 = vunpack.c.h.b16 %v686
        %v2064 = vunpack.c.l.b16 %v687
        %v2065 = vunpack.c.h.b16 %v687
        %v2066 = vunpack.c.l.b16 %v688
        %v2067 = vunpack.c.h.b16 %v688
        %v2068 = vunpack.c.l.b16 %v689
        %v2069 = vunpack.c.h.b16 %v689
        %v2070 = vunpack.c.l.b16 %v690
        %v2071 = vunpack.c.h.b16 %v690
        %v2072 = vunpack.c.l.b16 %v691
        %v2073 = vunpack.c.h.b16 %v691
        %v2074 = vunpack.c.l.b16 %v692
        %v2075 = vunpack.c.h.b16 %v692
        %v2076 = vunpack.c.l.b16 %v693
        %v2077 = vunpack.c.h.b16 %v693
        %v2078 = vunpack.c.l.b16 %v694
        %v2079 = vunpack.c.h.b16 %v694
        %v2080 = vunpack.c.l.b16 %v695
        %v2081 = vunpack.c.h.b16 %v695
        %v2082 = vunpack.c.l.b16 %v696
        %v2083 = vunpack.c.h.b16 %v696
        %v2084 = vunpack.c.l.b16 %v697
        %v2085 = vunpack.c.h.b16 %v697
        %v2086 = vunpack.c.l.b16 %v698
        %v2087 = vunpack.c.h.b16 %v698
        %v2088 = vunpack.c.l.b16 %v699
        %v2089 = vunpack.c.h.b16 %v699
        %v2090 = vunpack.c.l.b16 %v700
        %v2091 = vunpack.c.h.b16 %v700
        %v2092 = vunpack.c.l.b16 %v701
        %v2093 = vunpack.c.h.b16 %v701
        %v2094 = vunpack.c.l.b16 %v702
        %v2095 = vunpack.c.h.b16 %v702
        %v2096 = vunpack.c.l.b16 %v703
        %v2097 = vunpack.c.h.b16 %v703
        %v2098 = vunpack.c.l.b16 %v704
        %v2099 = vunpack.c.h.b16 %v704
        %v2100 = vunpack.c.l.b16 %v705
        %v2101 = vunpack.c.h.b16 %v705
        %v2102 = vunpack.c.l.b16 %v706
        %v2103 = vunpack.c.h.b16 %v706
        %v2104 = vunpack.c.l.b16 %v707
        %v2105 = vunpack.c.h.b16 %v707
        %v2106 = vunpack.c.l.b16 %v708
        %v2107 = vunpack.c.h.b16 %v708
        %v2108 = vunpack.c.l.b16 %v709
        %v2109 = vunpack.c.h.b16 %v709
        %v2110 = vunpack.c.l.b16 %v710
        %v2111 = vunpack.c.h.b16 %v710
        %v2112 = vunpack.c.l.b16 %v711
        %v2113 = vunpack.c.h.b16 %v711
        %v2114 = vunpack.c.l.b16 %v712
        %v2115 = vunpack.c.h.b16 %v712
        %v2116 = vunpack.c.l.b16 %v713
        %v2117 = vunpack.c.h.b16 %v713
        %v2118 = vunpack.c.l.b16 %v714
        %v2119 = vunpack.c.h.b16 %v714
        %v2120 = vunpack.c.l.b16 %v715
        %v2121 = vunpack.c.h.b16 %v715
        %v2122 = vunpack.c.l.b16 %v716
        %v2123 = vunpack.c.h.b16 %v716
        %v2124 = vunpack.c.l.b16 %v717
        %v2125 = vunpack.c.h.b16 %v717
        %v2126 = vunpack.c.l.b16 %v718
        %v2127 = vunpack.c.h.b16 %v718
        %v2128 = vunpack.c.l.b16 %v719
        %v2129 = vunpack.c.h.b16 %v719
        %v2130 = vunpack.c.l.b16 %v720
        %v2131 = vunpack.c.h.b16 %v720
        %v2132 = vunpack.c.l.b16 %v721
        %v2133 = vunpack.c.h.b16 %v721
        %v2134 = vunpack.c.l.b16 %v722
        %v2135 = vunpack.c.h.b16 %v722
        %v2136 = vunpack.c.l.b16 %v723
        %v2137 = vunpack.c.h.b16 %v723
        %v2138 = vunpack.c.l.b16 %v724
        %v2139 = vunpack.c.h.b16 %v724
        %v2140 = vunpack.c.l.b16 %v725
        %v2141 = vunpack.c.h.b16 %v725
        %v2142 = vunpack.c.l.b16 %v726
        %v2143 = vunpack.c.h.b16 %v726
        %v2144 = vunpack.c.l.b16 %v727
        %v2145 = vunpack.c.h.b16 %v727
        %v2146 = vunpack.c.l.b16 %v728
        %v2147 = vunpack.c.h.b16 %v728
        %v2148 = vunpack.c.l.b16 %v729
        %v2149 = vunpack.c.h.b16 %v729
        %v2150 = vunpack.c.l.b16 %v730
        %v2151 = vunpack.c.h.b16 %v730
        %v2152 = vunpack.c.l.b16 %v731
        %v2153 = vunpack.c.h.b16 %v731
        %v2154 = vunpack.c.l.b16 %v732
        %v2155 = vunpack.c.h.b16 %v732
        %v2156 = vunpack.c.l.b16 %v733
        %v2157 = vunpack.c.h.b16 %v733
        %v2158 = vunpack.c.l.b16 %v734
        %v2159 = vunpack.c.h.b16 %v734
        %v2160 = vunpack.c.l.b16 %v735
        %v2161 = vunpack.c.h.b16 %v735
        %v2162 = vunpack.c.l.b16 %v736
        %v2163 = vunpack.c.h.b16 %v736
        %v2164 = vunpack.c.l.b16 %v737
        %v2165 = vunpack.c.h.b16 %v737
        %v2166 = vunpack.c.l.b16 %v738
        %v2167 = vunpack.c.h.b16 %v738
        %v2168 = vunpack.c.l.b16 %v739
        %v2169 = vunpack.c.h.b16 %v739
        %v2170 = vunpack.c.l.b16 %v740
        %v2171 = vunpack.c.h.b16 %v740
        %v2172 = vunpack.c.l.b16 %v741
        %v2173 = vunpack.c.h.b16 %v741
        %v2174 = vunpack.c.l.b16 %v742
        %v2175 = vunpack.c.h.b16 %v742
        %v2176 = vunpack.c.l.b16 %v743
        %v2177 = vunpack.c.h.b16 %v743
        %v2178 = vunpack.c.l.b16 %v744
        %v2179 = vunpack.c.h.b16 %v744
        %v2180 = vunpack.c.l.b16 %v745
        %v2181 = vunpack.c.h.b16 %v745
        %v2182 = vunpack.c.l.b16 %v746
        %v2183 = vunpack.c.h.b16 %v746
        %v2184 = vunpack.c.l.b16 %v747
        %v2185 = vunpack.c.h.b16 %v747
        %v2186 = vunpack.c.l.b16 %v748
        %v2187 = vunpack.c.h.b16 %v748
        %v2188 = vunpack.c.l.b16 %v749
        %v2189 = vunpack.c.h.b16 %v749
        %v2190 = vunpack.c.l.b16 %v750
        %v2191 = vunpack.c.h.b16 %v750
        %v2192 = vunpack.c.l.b16 %v751
        %v2193 = vunpack.c.h.b16 %v751
        %v2194 = vunpack.c.l.b16 %v752
        %v2195 = vunpack.c.h.b16 %v752
        %v2196 = vunpack.c.l.b16 %v753
        %v2197 = vunpack.c.h.b16 %v753
        %v2198 = vunpack.c.l.b16 %v754
        %v2199 = vunpack.c.h.b16 %v754
        %v2200 = vunpack.c.l.b16 %v755
        %v2201 = vunpack.c.h.b16 %v755
        %v2202 = vunpack.c.l.b16 %v756
        %v2203 = vunpack.c.h.b16 %v756
        %v2204 = vunpack.c.l.b16 %v757
        %v2205 = vunpack.c.h.b16 %v757
        %v2206 = vunpack.c.l.b16 %v758
        %v2207 = vunpack.c.h.b16 %v758
        %v2208 = vunpack.c.l.b16 %v759
        %v2209 = vunpack.c.h.b16 %v759
        %v2210 = vunpack.c.l.b16 %v760
        %v2211 = vunpack.c.h.b16 %v760
        %v2212 = vunpack.c.l.b16 %v761
        %v2213 = vunpack.c.h.b16 %v761
        %v2214 = vunpack.c.l.b16 %v762
        %v2215 = vunpack.c.h.b16 %v762
        %v2216 = vunpack.c.l.b16 %v763
        %v2217 = vunpack.c.h.b16 %v763
        %v2218 = vunpack.c.l.b16 %v764
        %v2219 = vunpack.c.h.b16 %v764
        %v2220 = vunpack.c.l.b16 %v765
        %v2221 = vunpack.c.h.b16 %v765
        %v2222 = vunpack.c.l.b16 %v766
        %v2223 = vunpack.c.h.b16 %v766
        %v2224 = vunpack.c.l.b16 %v767
        %v2225 = vunpack.c.h.b16 %v767
        %v2226 = vunpack.c.l.b16 %v768
        %v2227 = vunpack.c.h.b16 %v768
        %v2228 = vunpack.c.l.b16 %v769
        %v2229 = vunpack.c.h.b16 %v769
        %v2230 = vunpack.c.l.b16 %v770
        %v2231 = vunpack.c.h.b16 %v770
        %v2232 = vunpack.c.l.b16 %v771
        %v2233 = vunpack.c.h.b16 %v771
        %v2234 = vunpack.c.l.b16 %v772
        %v2235 = vunpack.c.h.b16 %v772
        %v2236 = vunpack.c.l.b16 %v773
        %v2237 = vunpack.c.h.b16 %v773
        %v2238 = vunpack.c.l.b16 %v774
        %v2239 = vunpack.c.h.b16 %v774
        %v2240 = vunpack.c.l.b16 %v775
        %v2241 = vunpack.c.h.b16 %v775
        %v2242 = vunpack.c.l.b16 %v776
        %v2243 = vunpack.c.h.b16 %v776
        %v2244 = vunpack.c.l.b16 %v777
        %v2245 = vunpack.c.h.b16 %v777
        %v2246 = vunpack.c.l.b16 %v778
        %v2247 = vunpack.c.h.b16 %v778
        %v2248 = vunpack.c.l.b16 %v779
        %v2249 = vunpack.c.h.b16 %v779
        %v2250 = vunpack.c.l.b16 %v780
        %v2251 = vunpack.c.h.b16 %v780
        %v2252 = vunpack.c.l.b16 %v781
        %v2253 = vunpack.c.h.b16 %v781
        %v2254 = vunpack.c.l.b16 %v782
        %v2255 = vunpack.c.h.b16 %v782
        %v2256 = vunpack.c.l.b16 %v783
        %v2257 = vunpack.c.h.b16 %v783
        %v2258 = vunpack.c.l.b16 %v784
        %v2259 = vunpack.c.h.b16 %v784
        %v2260 = vunpack.c.l.b16 %v785
        %v2261 = vunpack.c.h.b16 %v785
        %v2262 = vunpack.c.l.b16 %v786
        %v2263 = vunpack.c.h.b16 %v786
        %v2264 = vunpack.c.l.b16 %v787
        %v2265 = vunpack.c.h.b16 %v787
        %v2266 = vunpack.c.l.b16 %v788
        %v2267 = vunpack.c.h.b16 %v788
        %v2268 = vunpack.c.l.b16 %v789
        %v2269 = vunpack.c.h.b16 %v789
        %v2270 = vunpack.c.l.b16 %v790
        %v2271 = vunpack.c.h.b16 %v790
        %v2272 = vunpack.c.l.b16 %v791
        %v2273 = vunpack.c.h.b16 %v791
        %v2274 = vunpack.c.l.b16 %v792
        %v2275 = vunpack.c.h.b16 %v792
        %v2276 = vunpack.c.l.b16 %v793
        %v2277 = vunpack.c.h.b16 %v793
        %v2278 = vunpack.c.l.b16 %v794
        %v2279 = vunpack.c.h.b16 %v794
        %v2280 = vunpack.c.l.b16 %v795
        %v2281 = vunpack.c.h.b16 %v795
        %v2282 = vunpack.c.l.b16 %v796
        %v2283 = vunpack.c.h.b16 %v796
        %v2284 = vunpack.c.l.b16 %v797
        %v2285 = vunpack.c.h.b16 %v797
        %v2286 = vunpack.c.l.b16 %v798
        %v2287 = vunpack.c.h.b16 %v798
        %v2288 = vunpack.c.l.b16 %v799
        %v2289 = vunpack.c.h.b16 %v799
        %v2290 = vunpack.c.l.b16 %v800
        %v2291 = vunpack.c.h.b16 %v800
        %v2292 = vunpack.c.l.b16 %v801
        %v2293 = vunpack.c.h.b16 %v801
        %v2294 = vunpack.c.l.b16 %v802
        %v2295 = vunpack.c.h.b16 %v802
        %v2296 = vunpack.c.l.b16 %v803
        %v2297 = vunpack.c.h.b16 %v803
        %v2298 = vunpack.c.l.b16 %v804
        %v2299 = vunpack.c.h.b16 %v804
        %v2300 = vunpack.c.l.b16 %v805
        %v2301 = vunpack.c.h.b16 %v805
        %v2302 = vunpack.c.l.b16 %v806
        %v2303 = vunpack.c.h.b16 %v806
        %v2304 = vunpack.c.l.b16 %v807
        %v2305 = vunpack.c.h.b16 %v807
        %v2306 = vunpack.c.l.b16 %v808
        %v2307 = vunpack.c.h.b16 %v808
        %v2308 = vunpack.c.l.b16 %v809
        %v2309 = vunpack.c.h.b16 %v809
        %v2310 = vunpack.c.l.b16 %v810
        %v2311 = vunpack.c.h.b16 %v810
        %v2312 = vunpack.c.l.b16 %v811
        %v2313 = vunpack.c.h.b16 %v811
        %v2314 = vunpack.c.l.b16 %v812
        %v2315 = vunpack.c.h.b16 %v812
        %v2316 = vunpack.c.l.b16 %v813
        %v2317 = vunpack.c.h.b16 %v813
        %v2318 = vunpack.c.l.b16 %v814
        %v2319 = vunpack.c.h.b16 %v814
        %v2320 = vunpack.c.l.b16 %v815
        %v2321 = vunpack.c.h.b16 %v815
        %v2322 = vunpack.c.l.b16 %v816
        %v2323 = vunpack.c.h.b16 %v816
        %v2324 = vunpack.c.l.b16 %v817
        %v2325 = vunpack.c.h.b16 %v817
        %v2326 = vunpack.c.l.b16 %v818
        %v2327 = vunpack.c.h.b16 %v818
        %v2328 = vunpack.c.l.b16 %v819
        %v2329 = vunpack.c.h.b16 %v819
        %v2330 = vunpack.c.l.b16 %v820
        %v2331 = vunpack.c.h.b16 %v820
        %v2332 = vunpack.c.l.b16 %v821
        %v2333 = vunpack.c.h.b16 %v821
        %v2334 = vunpack.c.l.b16 %v822
        %v2335 = vunpack.c.h.b16 %v822
        %v2336 = vunpack.c.l.b16 %v823
        %v2337 = vunpack.c.h.b16 %v823
        %v2338 = vunpack.c.l.b16 %v824
        %v2339 = vunpack.c.h.b16 %v824
        %v2340 = vunpack.c.l.b16 %v825
        %v2341 = vunpack.c.h.b16 %v825
        %v2342 = vunpack.c.l.b16 %v826
        %v2343 = vunpack.c.h.b16 %v826
        %v2344 = vunpack.c.l.b16 %v827
        %v2345 = vunpack.c.h.b16 %v827
        %v2346 = vunpack.c.l.b16 %v828
        %v2347 = vunpack.c.h.b16 %v828
        %v2348 = vunpack.c.l.b16 %v829
        %v2349 = vunpack.c.h.b16 %v829
        %v2350 = vunpack.c.l.b16 %v830
        %v2351 = vunpack.c.h.b16 %v830
        %v2352 = vunpack.c.l.b16 %v831
        %v2353 = vunpack.c.h.b16 %v831
        %v2354 = vunpack.c.l.b16 %v832
        %v2355 = vunpack.c.h.b16 %v832
        %v2356 = vunpack.c.l.b16 %v833
        %v2357 = vunpack.c.h.b16 %v833
        %v2358 = vunpack.c.l.b16 %v834
        %v2359 = vunpack.c.h.b16 %v834
        %v2360 = vunpack.c.l.b16 %v835
        %v2361 = vunpack.c.h.b16 %v835
        %v2362 = vunpack.c.l.b16 %v836
        %v2363 = vunpack.c.h.b16 %v836
        %v2364 = vunpack.c.l.b16 %v837
        %v2365 = vunpack.c.h.b16 %v837
        %v2366 = vunpack.c.l.b16 %v838
        %v2367 = vunpack.c.h.b16 %v838
        %v2368 = vunpack.c.l.b16 %v839
        %v2369 = vunpack.c.h.b16 %v839
        %v2370 = vunpack.c.l.b16 %v840
        %v2371 = vunpack.c.h.b16 %v840
        %v2372 = vunpack.c.l.b16 %v841
        %v2373 = vunpack.c.h.b16 %v841
        %v2374 = vunpack.c.l.b16 %v842
        %v2375 = vunpack.c.h.b16 %v842
        %v2376 = vunpack.c.l.b16 %v843
        %v2377 = vunpack.c.h.b16 %v843
        %v2378 = vunpack.c.l.b16 %v844
        %v2379 = vunpack.c.h.b16 %v844
        %v2380 = vunpack.c.l.b16 %v845
        %v2381 = vunpack.c.h.b16 %v845
        %v2382 = vunpack.c.l.b16 %v846
        %v2383 = vunpack.c.h.b16 %v846
        %v2384 = vunpack.c.l.b16 %v847
        %v2385 = vunpack.c.h.b16 %v847
        %v2386 = vunpack.c.l.b16 %v848
        %v2387 = vunpack.c.h.b16 %v848
        %v2388 = vunpack.c.l.b16 %v849
        %v2389 = vunpack.c.h.b16 %v849
        %v2390 = vunpack.c.l.b16 %v850
        %v2391 = vunpack.c.h.b16 %v850
        %v2392 = vunpack.c.l.b16 %v851
        %v2393 = vunpack.c.h.b16 %v851
        %v2394 = vunpack.c.l.b16 %v852
        %v2395 = vunpack.c.h.b16 %v852
        %v2396 = vunpack.c.l.b16 %v853
        %v2397 = vunpack.c.h.b16 %v853
        %v2398 = vunpack.c.l.b16 %v854
        %v2399 = vunpack.c.h.b16 %v854
        %v2400 = vunpack.c.l.b16 %v855
        %v2401 = vunpack.c.h.b16 %v855
        %v2402 = vunpack.c.l.b16 %v856
        %v2403 = vunpack.c.h.b16 %v856
        %v2404 = vunpack.c.l.b16 %v857
        %v2405 = vunpack.c.h.b16 %v857
        %v2406 = vunpack.c.l.b16 %v858
        %v2407 = vunpack.c.h.b16 %v858
        %v2408 = vunpack.c.l.b16 %v859
        %v2409 = vunpack.c.h.b16 %v859
        %v2410 = vunpack.c.l.b16 %v860
        %v2411 = vunpack.c.h.b16 %v860
        %v2412 = vunpack.c.l.b16 %v861
        %v2413 = vunpack.c.h.b16 %v861
        %v2414 = vunpack.c.l.b16 %v862
        %v2415 = vunpack.c.h.b16 %v862
        %v2416 = vunpack.c.l.b16 %v863
        %v2417 = vunpack.c.h.b16 %v863
        %v2418 = vunpack.c.l.b16 %v864
        %v2419 = vunpack.c.h.b16 %v864
        %v2420 = vunpack.c.l.b16 %v865
        %v2421 = vunpack.c.h.b16 %v865
        %v2422 = vunpack.c.l.b16 %v866
        %v2423 = vunpack.c.h.b16 %v866
        %v2424 = vunpack.c.l.b16 %v867
        %v2425 = vunpack.c.h.b16 %v867
        %v2426 = vunpack.c.l.b16 %v868
        %v2427 = vunpack.c.h.b16 %v868
        %v2428 = vunpack.c.l.b16 %v869
        %v2429 = vunpack.c.h.b16 %v869
        %v2430 = vunpack.c.l.b16 %v870
        %v2431 = vunpack.c.h.b16 %v870
        %v2432 = vunpack.c.l.b16 %v871
        %v2433 = vunpack.c.h.b16 %v871
        %v2434 = vunpack.c.l.b16 %v872
        %v2435 = vunpack.c.h.b16 %v872
        %v2436 = vunpack.c.l.b16 %v873
        %v2437 = vunpack.c.h.b16 %v873
        %v2438 = vunpack.c.l.b16 %v874
        %v2439 = vunpack.c.h.b16 %v874
        %v2440 = vunpack.c.l.b16 %v875
        %v2441 = vunpack.c.h.b16 %v875
        %v2442 = vunpack.c.l.b16 %v876
        %v2443 = vunpack.c.h.b16 %v876
        %v2444 = vunpack.c.l.b16 %v877
        %v2445 = vunpack.c.h.b16 %v877
        %v2446 = vunpack.c.l.b16 %v878
        %v2447 = vunpack.c.h.b16 %v878
        %v2448 = vunpack.c.l.b16 %v879
        %v2449 = vunpack.c.h.b16 %v879
        %v2450 = vunpack.c.l.b16 %v880
        %v2451 = vunpack.c.h.b16 %v880
        %v2452 = vunpack.c.l.b16 %v881
        %v2453 = vunpack.c.h.b16 %v881
        %v2454 = vunpack.c.l.b16 %v882
        %v2455 = vunpack.c.h.b16 %v882
        %v2456 = vunpack.c.l.b16 %v883
        %v2457 = vunpack.c.h.b16 %v883
        %v2458 = vunpack.c.l.b16 %v884
        %v2459 = vunpack.c.h.b16 %v884
        %v2460 = vunpack.c.l.b16 %v885
        %v2461 = vunpack.c.h.b16 %v885
        %v2462 = vunpack.c.l.b16 %v886
        %v2463 = vunpack.c.h.b16 %v886
        %v2464 = vunpack.c.l.b16 %v887
        %v2465 = vunpack.c.h.b16 %v887
        %v2466 = vunpack.c.l.b16 %v888
        %v2467 = vunpack.c.h.b16 %v888
        %v2468 = vunpack.c.l.b16 %v889
        %v2469 = vunpack.c.h.b16 %v889
        %v2470 = vunpack.c.l.b16 %v890
        %v2471 = vunpack.c.h.b16 %v890
        %v2472 = vunpack.c.l.b16 %v891
        %v2473 = vunpack.c.h.b16 %v891
        %v2474 = vunpack.c.l.b16 %v892
        %v2475 = vunpack.c.h.b16 %v892
        %v2476 = vunpack.c.l.b16 %v893
        %v2477 = vunpack.c.h.b16 %v893
        %v2478 = vunpack.c.l.b16 %v894
        %v2479 = vunpack.c.h.b16 %v894
        %v2480 = vunpack.c.l.b16 %v895
        %v2481 = vunpack.c.h.b16 %v895
        %v2482 = vunpack.c.l.b16 %v896
        %v2483 = vunpack.c.h.b16 %v896
        %v2484 = vunpack.c.l.b16 %v897
        %v2485 = vunpack.c.h.b16 %v897
        %v2486 = vunpack.c.l.b16 %v898
        %v2487 = vunpack.c.h.b16 %v898
        %v2488 = vunpack.c.l.b16 %v899
        %v2489 = vunpack.c.h.b16 %v899
        %v2490 = vunpack.c.l.b16 %v900
        %v2491 = vunpack.c.h.b16 %v900
        %v2492 = vunpack.c.l.b16 %v901
        %v2493 = vunpack.c.h.b16 %v901
        %v2494 = vpack.c.b16 %v1474, %v1470
        %v2495 = vpack.c.b16 %v1475, %v1471
        %v2496 = vpack.c.b16 %v1476, %v1472
        %v2497 = vpack.c.b16 %v1477, %v1473
        %v2498 = vpack.c.b16 %v1482, %v1478
        %v2499 = vpack.c.b16 %v1483, %v1479
        %v2500 = vpack.c.b16 %v1484, %v1480
        %v2501 = vpack.c.b16 %v1485, %v1481
        %v2502 = vpack.c.b16 %v1490, %v1486
        %v2503 = vpack.c.b16 %v1491, %v1487
        %v2504 = vpack.c.b16 %v1492, %v1488
        %v2505 = vpack.c.b16 %v1493, %v1489
        %v2506 = vpack.c.b16 %v1498, %v1494
        %v2507 = vpack.c.b16 %v1499, %v1495
        %v2508 = vpack.c.b16 %v1500, %v1496
        %v2509 = vpack.c.b16 %v1501, %v1497
        %v2510 = vpack.c.b16 %v1506, %v1502
        %v2511 = vpack.c.b16 %v1507, %v1503
        %v2512 = vpack.c.b16 %v1508, %v1504
        %v2513 = vpack.c.b16 %v1509, %v1505
        %v2514 = vpack.c.b16 %v1514, %v1510
        %v2515 = vpack.c.b16 %v1515, %v1511
        %v2516 = vpack.c.b16 %v1516, %v1512
        %v2517 = vpack.c.b16 %v1517, %v1513
        %v2518 = vpack.c.b16 %v1522, %v1518
        %v2519 = vpack.c.b16 %v1523, %v1519
        %v2520 = vpack.c.b16 %v1524, %v1520
        %v2521 = vpack.c.b16 %v1525, %v1521
        %v2522 = vpack.c.b16 %v1530, %v1526
        %v2523 = vpack.c.b16 %v1531, %v1527
        %v2524 = vpack.c.b16 %v1532, %v1528
        %v2525 = vpack.c.b16 %v1533, %v1529
        %v2526 = vpack.c.b16 %v1538, %v1534
        %v2527 = vpack.c.b16 %v1539, %v1535
        %v2528 = vpack.c.b16 %v1540, %v1536
        %v2529 = vpack.c.b16 %v1541, %v1537
        %v2530 = vpack.c.b16 %v1546, %v1542
        %v2531 = vpack.c.b16 %v1547, %v1543
        %v2532 = vpack.c.b16 %v1548, %v1544
        %v2533 = vpack.c.b16 %v1549, %v1545
        %v2534 = vpack.c.b16 %v1554, %v1550
        %v2535 = vpack.c.b16 %v1555, %v1551
        %v2536 = vpack.c.b16 %v1556, %v1552
        %v2537 = vpack.c.b16 %v1557, %v1553
        %v2538 = vpack.c.b16 %v1562, %v1558
        %v2539 = vpack.c.b16 %v1563, %v1559
        %v2540 = vpack.c.b16 %v1564, %v1560
        %v2541 = vpack.c.b16 %v1565, %v1561
        %v2542 = vpack.c.b16 %v1570, %v1566
        %v2543 = vpack.c.b16 %v1571, %v1567
        %v2544 = vpack.c.b16 %v1572, %v1568
        %v2545 = vpack.c.b16 %v1573, %v1569
        %v2546 = vpack.c.b16 %v1578, %v1574
        %v2547 = vpack.c.b16 %v1579, %v1575
        %v2548 = vpack.c.b16 %v1580, %v1576
        %v2549 = vpack.c.b16 %v1581, %v1577
        %v2550 = vpack.c.b16 %v1586, %v1582
        %v2551 = vpack.c.b16 %v1587, %v1583
        %v2552 = vpack.c.b16 %v1588, %v1584
        %v2553 = vpack.c.b16 %v1589, %v1585
        %v2554 = vpack.c.b16 %v1594, %v1590
        %v2555 = vpack.c.b16 %v1595, %v1591
        %v2556 = vpack.c.b16 %v1596, %v1592
        %v2557 = vpack.c.b16 %v1597, %v1593
        %v2558 = vpack.c.b16 %v1602, %v1598
        %v2559 = vpack.c.b16 %v1603, %v1599
        %v2560 = vpack.c.b16 %v1604, %v1600
        %v2561 = vpack.c.b16 %v1605, %v1601
        %v2562 = vpack.c.b16 %v1610, %v1606
        %v2563 = vpack.c.b16 %v1611, %v1607
        %v2564 = vpack.c.b16 %v1612, %v1608
        %v2565 = vpack.c.b16 %v1613, %v1609
        %v2566 = vpack.c.b16 %v1618, %v1614
        %v2567 = vpack.c.b16 %v1619, %v1615
        %v2568 = vpack.c.b16 %v1620, %v1616
        %v2569 = vpack.c.b16 %v1621, %v1617
        %v2570 = vpack.c.b16 %v1626, %v1622
        %v2571 = vpack.c.b16 %v1627, %v1623
        %v2572 = vpack.c.b16 %v1628, %v1624
        %v2573 = vpack.c.b16 %v1629, %v1625
        %v2574 = vpack.c.b16 %v1634, %v1630
        %v2575 = vpack.c.b16 %v1635, %v1631
        %v2576 = vpack.c.b16 %v1636, %v1632
        %v2577 = vpack.c.b16 %v1637, %v1633
        %v2578 = vpack.c.b16 %v1642, %v1638
        %v2579 = vpack.c.b16 %v1643, %v1639
        %v2580 = vpack.c.b16 %v1644, %v1640
        %v2581 = vpack.c.b16 %v1645, %v1641
        %v2582 = vpack.c.b16 %v1650, %v1646
        %v2583 = vpack.c.b16 %v1651, %v1647
        %v2584 = vpack.c.b16 %v1652, %v1648
        %v2585 = vpack.c.b16 %v1653, %v1649
        %v2586 = vpack.c.b16 %v1658, %v1654
        %v2587 = vpack.c.b16 %v1659, %v1655
        %v2588 = vpack.c.b16 %v1660, %v1656
        %v2589 = vpack.c.b16 %v1661, %v1657
        %v2590 = vpack.c.b16 %v1666, %v1662
        %v2591 = vpack.c.b16 %v1667, %v1663
        %v2592 = vpack.c.b16 %v1668, %v1664
        %v2593 = vpack.c.b16 %v1669, %v1665
        %v2594 = vpack.c.b16 %v1674, %v1670
        %v2595 = vpack.c.b16 %v1675, %v1671
        %v2596 = vpack.c.b16 %v1676, %v1672
        %v2597 = vpack.c.b16 %v1677, %v1673
        %v2598 = vpack.c.b16 %v1682, %v1678
        %v2599 = vpack.c.b16 %v1683, %v1679
        %v2600 = vpack.c.b16 %v1684, %v1680
        %v2601 = vpack.c.b16 %v1685, %v1681
        %v2602 = vpack.c.b16 %v1690, %v1686
        %v2603 = vpack.c.b16 %v1691, %v1687
        %v2604 = vpack.c.b16 %v1692, %v1688
        %v2605 = vpack.c.b16 %v1693, %v1689
        %v2606 = vpack.c.b16 %v1698, %v1694
        %v2607 = vpack.c.b16 %v1699, %v1695
        %v2608 = vpack.c.b16 %v1700, %v1696
        %v2609 = vpack.c.b16 %v1701, %v1697
        %v2610 = vpack.c.b16 %v1706, %v1702
        %v2611 = vpack.c.b16 %v1707, %v1703
        %v2612 = vpack.c.b16 %v1708, %v1704
        %v2613 = vpack.c.b16 %v1709, %v1705
        %v2614 = vpack.c.b16 %v1714, %v1710
        %v2615 = vpack.c.b16 %v1715, %v1711
        %v2616 = vpack.c.b16 %v1716, %v1712
        %v2617 = vpack.c.b16 %v1717, %v1713
        %v2618 = vpack.c.b16 %v1722, %v1718
        %v2619 = vpack.c.b16 %v1723, %v1719
        %v2620 = vpack.c.b16 %v1724, %v1720
        %v2621 = vpack.c.b16 %v1725, %v1721
        %v2622 = vpack.c.b16 %v1730, %v1726
        %v2623 = vpack.c.b16 %v1731, %v1727
        %v2624 = vpack.c.b16 %v1732, %v1728
        %v2625 = vpack.c.b16 %v1733, %v1729
        %v2626 = vpack.c.b16 %v1738, %v1734
        %v2627 = vpack.c.b16 %v1739, %v1735
        %v2628 = vpack.c.b16 %v1740, %v1736
        %v2629 = vpack.c.b16 %v1741, %v1737
        %v2630 = vpack.c.b16 %v1746, %v1742
        %v2631 = vpack.c.b16 %v1747, %v1743
        %v2632 = vpack.c.b16 %v1748, %v1744
        %v2633 = vpack.c.b16 %v1749, %v1745
        %v2634 = vpack.c.b16 %v1754, %v1750
        %v2635 = vpack.c.b16 %v1755, %v1751
        %v2636 = vpack.c.b16 %v1756, %v1752
        %v2637 = vpack.c.b16 %v1757, %v1753
        %v2638 = vpack.c.b16 %v1762, %v1758
        %v2639 = vpack.c.b16 %v1763, %v1759
        %v2640 = vpack.c.b16 %v1764, %v1760
        %v2641 = vpack.c.b16 %v1765, %v1761
        %v2642 = vpack.c.b16 %v1770, %v1766
        %v2643 = vpack.c.b16 %v1771, %v1767
        %v2644 = vpack.c.b16 %v1772, %v1768
        %v2645 = vpack.c.b16 %v1773, %v1769
        %v2646 = vpack.c.b16 %v1778, %v1774
        %v2647 = vpack.c.b16 %v1779, %v1775
        %v2648 = vpack.c.b16 %v1780, %v1776
        %v2649 = vpack.c.b16 %v1781, %v1777
        %v2650 = vpack.c.b16 %v1786, %v1782
        %v2651 = vpack.c.b16 %v1787, %v1783
        %v2652 = vpack.c.b16 %v1788, %v1784
        %v2653 = vpack.c.b16 %v1789, %v1785
        %v2654 = vpack.c.b16 %v1794, %v1790
        %v2655 = vpack.c.b16 %v1795, %v1791
        %v2656 = vpack.c.b16 %v1796, %v1792
        %v2657 = vpack.c.b16 %v1797, %v1793
        %v2658 = vpack.c.b16 %v1802, %v1798
        %v2659 = vpack.c.b16 %v1803, %v1799
        %v2660 = vpack.c.b16 %v1804, %v1800
        %v2661 = vpack.c.b16 %v1805, %v1801
        %v2662 = vpack.c.b16 %v1810, %v1806
        %v2663 = vpack.c.b16 %v1811, %v1807
        %v2664 = vpack.c.b16 %v1812, %v1808
        %v2665 = vpack.c.b16 %v1813, %v1809
        %v2666 = vpack.c.b16 %v1818, %v1814
        %v2667 = vpack.c.b16 %v1819, %v1815
        %v2668 = vpack.c.b16 %v1820, %v1816
        %v2669 = vpack.c.b16 %v1821, %v1817
        %v2670 = vpack.c.b16 %v1826, %v1822
        %v2671 = vpack.c.b16 %v1827, %v1823
        %v2672 = vpack.c.b16 %v1828, %v1824
        %v2673 = vpack.c.b16 %v1829, %v1825
        %v2674 = vpack.c.b16 %v1834, %v1830
        %v2675 = vpack.c.b16 %v1835, %v1831
        %v2676 = vpack.c.b16 %v1836, %v1832
        %v2677 = vpack.c.b16 %v1837, %v1833
        %v2678 = vpack.c.b16 %v1842, %v1838
        %v2679 = vpack.c.b16 %v1843, %v1839
        %v2680 = vpack.c.b16 %v1844, %v1840
        %v2681 = vpack.c.b16 %v1845, %v1841
        %v2682 = vpack.c.b16 %v1850, %v1846
        %v2683 = vpack.c.b16 %v1851, %v1847
        %v2684 = vpack.c.b16 %v1852, %v1848
        %v2685 = vpack.c.b16 %v1853, %v1849
        %v2686 = vpack.c.b16 %v1858, %v1854
        %v2687 = vpack.c.b16 %v1859, %v1855
        %v2688 = vpack.c.b16 %v1860, %v1856
        %v2689 = vpack.c.b16 %v1861, %v1857
        %v2690 = vpack.c.b16 %v1866, %v1862
        %v2691 = vpack.c.b16 %v1867, %v1863
        %v2692 = vpack.c.b16 %v1868, %v1864
        %v2693 = vpack.c.b16 %v1869, %v1865
        %v2694 = vpack.c.b16 %v1874, %v1870
        %v2695 = vpack.c.b16 %v1875, %v1871
        %v2696 = vpack.c.b16 %v1876, %v1872
        %v2697 = vpack.c.b16 %v1877, %v1873
        %v2698 = vpack.c.b16 %v1882, %v1878
        %v2699 = vpack.c.b16 %v1883, %v1879
        %v2700 = vpack.c.b16 %v1884, %v1880
        %v2701 = vpack.c.b16 %v1885, %v1881
        %v2702 = vpack.c.b16 %v1890, %v1886
        %v2703 = vpack.c.b16 %v1891, %v1887
        %v2704 = vpack.c.b16 %v1892, %v1888
        %v2705 = vpack.c.b16 %v1893, %v1889
        %v2706 = vpack.c.b16 %v1898, %v1894
        %v2707 = vpack.c.b16 %v1899, %v1895
        %v2708 = vpack.c.b16 %v1900, %v1896
        %v2709 = vpack.c.b16 %v1901, %v1897
        %v2710 = vpack.c.b16 %v1906, %v1902
        %v2711 = vpack.c.b16 %v1907, %v1903
        %v2712 = vpack.c.b16 %v1908, %v1904
        %v2713 = vpack.c.b16 %v1909, %v1905
        %v2714 = vpack.c.b16 %v1914, %v1910
        %v2715 = vpack.c.b16 %v1915, %v1911
        %v2716 = vpack.c.b16 %v1916, %v1912
        %v2717 = vpack.c.b16 %v1917, %v1913
        %v2718 = vpack.c.b16 %v1922, %v1918
        %v2719 = vpack.c.b16 %v1923, %v1919
        %v2720 = vpack.c.b16 %v1924, %v1920
        %v2721 = vpack.c.b16 %v1925, %v1921
        %v2722 = vpack.c.b16 %v1930, %v1926
        %v2723 = vpack.c.b16 %v1931, %v1927
        %v2724 = vpack.c.b16 %v1932, %v1928
        %v2725 = vpack.c.b16 %v1933, %v1929
        %v2726 = vpack.c.b16 %v1938, %v1934
        %v2727 = vpack.c.b16 %v1939, %v1935
        %v2728 = vpack.c.b16 %v1940, %v1936
        %v2729 = vpack.c.b16 %v1941, %v1937
        %v2730 = vpack.c.b16 %v1946, %v1942
        %v2731 = vpack.c.b16 %v1947, %v1943
        %v2732 = vpack.c.b16 %v1948, %v1944
        %v2733 = vpack.c.b16 %v1949, %v1945
        %v2734 = vpack.c.b16 %v1954, %v1950
        %v2735 = vpack.c.b16 %v1955, %v1951
        %v2736 = vpack.c.b16 %v1956, %v1952
        %v2737 = vpack.c.b16 %v1957, %v1953
        %v2738 = vpack.c.b16 %v1962, %v1958
        %v2739 = vpack.c.b16 %v1963, %v1959
        %v2740 = vpack.c.b16 %v1964, %v1960
        %v2741 = vpack.c.b16 %v1965, %v1961
        %v2742 = vpack.c.b16 %v1970, %v1966
        %v2743 = vpack.c.b16 %v1971, %v1967
        %v2744 = vpack.c.b16 %v1972, %v1968
        %v2745 = vpack.c.b16 %v1973, %v1969
        %v2746 = vpack.c.b16 %v1978, %v1974
        %v2747 = vpack.c.b16 %v1979, %v1975
        %v2748 = vpack.c.b16 %v1980, %v1976
        %v2749 = vpack.c.b16 %v1981, %v1977
        %v2750 = vpack.c.b16 %v1986, %v1982
        %v2751 = vpack.c.b16 %v1987, %v1983
        %v2752 = vpack.c.b16 %v1988, %v1984
        %v2753 = vpack.c.b16 %v1989, %v1985
        %v2754 = vpack.c.b16 %v1994, %v1990
        %v2755 = vpack.c.b16 %v1995, %v1991
        %v2756 = vpack.c.b16 %v1996, %v1992
        %v2757 = vpack.c.b16 %v1997, %v1993
        %v2758 = vpack.c.b16 %v2002, %v1998
        %v2759 = vpack.c.b16 %v2003, %v1999
        %v2760 = vpack.c.b16 %v2004, %v2000
        %v2761 = vpack.c.b16 %v2005, %v2001
        %v2762 = vpack.c.b16 %v2010, %v2006
        %v2763 = vpack.c.b16 %v2011, %v2007
        %v2764 = vpack.c.b16 %v2012, %v2008
        %v2765 = vpack.c.b16 %v2013, %v2009
        %v2766 = vpack.c.b16 %v2018, %v2014
        %v2767 = vpack.c.b16 %v2019, %v2015
        %v2768 = vpack.c.b16 %v2020, %v2016
        %v2769 = vpack.c.b16 %v2021, %v2017
        %v2770 = vpack.c.b16 %v2026, %v2022
        %v2771 = vpack.c.b16 %v2027, %v2023
        %v2772 = vpack.c.b16 %v2028, %v2024
        %v2773 = vpack.c.b16 %v2029, %v2025
        %v2774 = vpack.c.b16 %v2034, %v2030
        %v2775 = vpack.c.b16 %v2035, %v2031
        %v2776 = vpack.c.b16 %v2036, %v2032
        %v2777 = vpack.c.b16 %v2037, %v2033
        %v2778 = vpack.c.b16 %v2042, %v2038
        %v2779 = vpack.c.b16 %v2043, %v2039
        %v2780 = vpack.c.b16 %v2044, %v2040
        %v2781 = vpack.c.b16 %v2045, %v2041
        %v2782 = vpack.c.b16 %v2050, %v2046
        %v2783 = vpack.c.b16 %v2051, %v2047
        %v2784 = vpack.c.b16 %v2052, %v2048
        %v2785 = vpack.c.b16 %v2053, %v2049
        %v2786 = vpack.c.b16 %v2058, %v2054
        %v2787 = vpack.c.b16 %v2059, %v2055
        %v2788 = vpack.c.b16 %v2060, %v2056
        %v2789 = vpack.c.b16 %v2061, %v2057
        %v2790 = vpack.c.b16 %v2066, %v2062
        %v2791 = vpack.c.b16 %v2067, %v2063
        %v2792 = vpack.c.b16 %v2068, %v2064
        %v2793 = vpack.c.b16 %v2069, %v2065
        %v2794 = vpack.c.b16 %v2074, %v2070
        %v2795 = vpack.c.b16 %v2075, %v2071
        %v2796 = vpack.c.b16 %v2076, %v2072
        %v2797 = vpack.c.b16 %v2077, %v2073
        %v2798 = vpack.c.b16 %v2082, %v2078
        %v2799 = vpack.c.b16 %v2083, %v2079
        %v2800 = vpack.c.b16 %v2084, %v2080
        %v2801 = vpack.c.b16 %v2085, %v2081
        %v2802 = vpack.c.b16 %v2090, %v2086
        %v2803 = vpack.c.b16 %v2091, %v2087
        %v2804 = vpack.c.b16 %v2092, %v2088
        %v2805 = vpack.c.b16 %v2093, %v2089
        %v2806 = vpack.c.b16 %v2098, %v2094
        %v2807 = vpack.c.b16 %v2099, %v2095
        %v2808 = vpack.c.b16 %v2100, %v2096
        %v2809 = vpack.c.b16 %v2101, %v2097
        %v2810 = vpack.c.b16 %v2106, %v2102
        %v2811 = vpack.c.b16 %v2107, %v2103
        %v2812 = vpack.c.b16 %v2108, %v2104
        %v2813 = vpack.c.b16 %v2109, %v2105
        %v2814 = vpack.c.b16 %v2114, %v2110
        %v2815 = vpack.c.b16 %v2115, %v2111
        %v2816 = vpack.c.b16 %v2116, %v2112
        %v2817 = vpack.c.b16 %v2117, %v2113
        %v2818 = vpack.c.b16 %v2122, %v2118
        %v2819 = vpack.c.b16 %v2123, %v2119
        %v2820 = vpack.c.b16 %v2124, %v2120
        %v2821 = vpack.c.b16 %v2125, %v2121
        %v2822 = vpack.c.b16 %v2130, %v2126
        %v2823 = vpack.c.b16 %v2131, %v2127
        %v2824 = vpack.c.b16 %v2132, %v2128
        %v2825 = vpack.c.b16 %v2133, %v2129
        %v2826 = vpack.c.b16 %v2138, %v2134
        %v2827 = vpack.c.b16 %v2139, %v2135
        %v2828 = vpack.c.b16 %v2140, %v2136
        %v2829 = vpack.c.b16 %v2141, %v2137
        %v2830 = vpack.c.b16 %v2146, %v2142
        %v2831 = vpack.c.b16 %v2147, %v2143
        %v2832 = vpack.c.b16 %v2148, %v2144
        %v2833 = vpack.c.b16 %v2149, %v2145
        %v2834 = vpack.c.b16 %v2154, %v2150
        %v2835 = vpack.c.b16 %v2155, %v2151
        %v2836 = vpack.c.b16 %v2156, %v2152
        %v2837 = vpack.c.b16 %v2157, %v2153
        %v2838 = vpack.c.b16 %v2162, %v2158
        %v2839 = vpack.c.b16 %v2163, %v2159
        %v2840 = vpack.c.b16 %v2164, %v2160
        %v2841 = vpack.c.b16 %v2165, %v2161
        %v2842 = vpack.c.b16 %v2170, %v2166
        %v2843 = vpack.c.b16 %v2171, %v2167
        %v2844 = vpack.c.b16 %v2172, %v2168
        %v2845 = vpack.c.b16 %v2173, %v2169
        %v2846 = vpack.c.b16 %v2178, %v2174
        %v2847 = vpack.c.b16 %v2179, %v2175
        %v2848 = vpack.c.b16 %v2180, %v2176
        %v2849 = vpack.c.b16 %v2181, %v2177
        %v2850 = vpack.c.b16 %v2186, %v2182
        %v2851 = vpack.c.b16 %v2187, %v2183
        %v2852 = vpack.c.b16 %v2188, %v2184
        %v2853 = vpack.c.b16 %v2189, %v2185
        %v2854 = vpack.c.b16 %v2194, %v2190
        %v2855 = vpack.c.b16 %v2195, %v2191
        %v2856 = vpack.c.b16 %v2196, %v2192
        %v2857 = vpack.c.b16 %v2197, %v2193
        %v2858 = vpack.c.b16 %v2202, %v2198
        %v2859 = vpack.c.b16 %v2203, %v2199
        %v2860 = vpack.c.b16 %v2204, %v2200
        %v2861 = vpack.c.b16 %v2205, %v2201
        %v2862 = vpack.c.b16 %v2210, %v2206
        %v2863 = vpack.c.b16 %v2211, %v2207
        %v2864 = vpack.c.b16 %v2212, %v2208
        %v2865 = vpack.c.b16 %v2213, %v2209
        %v2866 = vpack.c.b16 %v2218, %v2214
        %v2867 = vpack.c.b16 %v2219, %v2215
        %v2868 = vpack.c.b16 %v2220, %v2216
        %v2869 = vpack.c.b16 %v2221, %v2217
        %v2870 = vpack.c.b16 %v2226, %v2222
        %v2871 = vpack.c.b16 %v2227, %v2223
        %v2872 = vpack.c.b16 %v2228, %v2224
        %v2873 = vpack.c.b16 %v2229, %v2225
        %v2874 = vpack.c.b16 %v2234, %v2230
        %v2875 = vpack.c.b16 %v2235, %v2231
        %v2876 = vpack.c.b16 %v2236, %v2232
        %v2877 = vpack.c.b16 %v2237, %v2233
        %v2878 = vpack.c.b16 %v2242, %v2238
        %v2879 = vpack.c.b16 %v2243, %v2239
        %v2880 = vpack.c.b16 %v2244, %v2240
        %v2881 = vpack.c.b16 %v2245, %v2241
        %v2882 = vpack.c.b16 %v2250, %v2246
        %v2883 = vpack.c.b16 %v2251, %v2247
        %v2884 = vpack.c.b16 %v2252, %v2248
        %v2885 = vpack.c.b16 %v2253, %v2249
        %v2886 = vpack.c.b16 %v2258, %v2254
        %v2887 = vpack.c.b16 %v2259, %v2255
        %v2888 = vpack.c.b16 %v2260, %v2256
        %v2889 = vpack.c.b16 %v2261, %v2257
        %v2890 = vpack.c.b16 %v2266, %v2262
        %v2891 = vpack.c.b16 %v2267, %v2263
        %v2892 = vpack.c.b16 %v2268, %v2264
        %v2893 = vpack.c.b16 %v2269, %v2265
        %v2894 = vpack.c.b16 %v2274, %v2270
        %v2895 = vpack.c.b16 %v2275, %v2271
        %v2896 = vpack.c.b16 %v2276, %v2272
        %v2897 = vpack.c.b16 %v2277, %v2273
        %v2898 = vpack.c.b16 %v2282, %v2278
        %v2899 = vpack.c.b16 %v2283, %v2279
        %v2900 = vpack.c.b16 %v2284, %v2280
        %v2901 = vpack.c.b16 %v2285, %v2281
        %v2902 = vpack.c.b16 %v2290, %v2286
        %v2903 = vpack.c.b16 %v2291, %v2287
        %v2904 = vpack.c.b16 %v2292, %v2288
        %v2905 = vpack.c.b16 %v2293, %v2289
        %v2906 = vpack.c.b16 %v2298, %v2294
        %v2907 = vpack.c.b16 %v2299, %v2295
        %v2908 = vpack.c.b16 %v2300, %v2296
        %v2909 = vpack.c.b16 %v2301, %v2297
        %v2910 = vpack.c.b16 %v2306, %v2302
        %v2911 = vpack.c.b16 %v2307, %v2303
        %v2912 = vpack.c.b16 %v2308, %v2304
        %v2913 = vpack.c.b16 %v2309, %v2305
        %v2914 = vpack.c.b16 %v2314, %v2310
        %v2915 = vpack.c.b16 %v2315, %v2311
        %v2916 = vpack.c.b16 %v2316, %v2312
        %v2917 = vpack.c.b16 %v2317, %v2313
        %v2918 = vpack.c.b16 %v2322, %v2318
        %v2919 = vpack.c.b16 %v2323, %v2319
        %v2920 = vpack.c.b16 %v2324, %v2320
        %v2921 = vpack.c.b16 %v2325, %v2321
        %v2922 = vpack.c.b16 %v2330, %v2326
        %v2923 = vpack.c.b16 %v2331, %v2327
        %v2924 = vpack.c.b16 %v2332, %v2328
        %v2925 = vpack.c.b16 %v2333, %v2329
        %v2926 = vpack.c.b16 %v2338, %v2334
        %v2927 = vpack.c.b16 %v2339, %v2335
        %v2928 = vpack.c.b16 %v2340, %v2336
        %v2929 = vpack.c.b16 %v2341, %v2337
        %v2930 = vpack.c.b16 %v2346, %v2342
        %v2931 = vpack.c.b16 %v2347, %v2343
        %v2932 = vpack.c.b16 %v2348, %v2344
        %v2933 = vpack.c.b16 %v2349, %v2345
        %v2934 = vpack.c.b16 %v2354, %v2350
        %v2935 = vpack.c.b16 %v2355, %v2351
        %v2936 = vpack.c.b16 %v2356, %v2352
        %v2937 = vpack.c.b16 %v2357, %v2353
        %v2938 = vpack.c.b16 %v2362, %v2358
        %v2939 = vpack.c.b16 %v2363, %v2359
        %v2940 = vpack.c.b16 %v2364, %v2360
        %v2941 = vpack.c.b16 %v2365, %v2361
        %v2942 = vpack.c.b16 %v2370, %v2366
        %v2943 = vpack.c.b16 %v2371, %v2367
        %v2944 = vpack.c.b16 %v2372, %v2368
        %v2945 = vpack.c.b16 %v2373, %v2369
        %v2946 = vpack.c.b16 %v2378, %v2374
        %v2947 = vpack.c.b16 %v2379, %v2375
        %v2948 = vpack.c.b16 %v2380, %v2376
        %v2949 = vpack.c.b16 %v2381, %v2377
        %v2950 = vpack.c.b16 %v2386, %v2382
        %v2951 = vpack.c.b16 %v2387, %v2383
        %v2952 = vpack.c.b16 %v2388, %v2384
        %v2953 = vpack.c.b16 %v2389, %v2385
        %v2954 = vpack.c.b16 %v2394, %v2390
        %v2955 = vpack.c.b16 %v2395, %v2391
        %v2956 = vpack.c.b16 %v2396, %v2392
        %v2957 = vpack.c.b16 %v2397, %v2393
        %v2958 = vpack.c.b16 %v2402, %v2398
        %v2959 = vpack.c.b16 %v2403, %v2399
        %v2960 = vpack.c.b16 %v2404, %v2400
        %v2961 = vpack.c.b16 %v2405, %v2401
        %v2962 = vpack.c.b16 %v2410, %v2406
        %v2963 = vpack.c.b16 %v2411, %v2407
        %v2964 = vpack.c.b16 %v2412, %v2408
        %v2965 = vpack.c.b16 %v2413, %v2409
        %v2966 = vpack.c.b16 %v2418, %v2414
        %v2967 = vpack.c.b16 %v2419, %v2415
        %v2968 = vpack.c.b16 %v2420, %v2416
        %v2969 = vpack.c.b16 %v2421, %v2417
        %v2970 = vpack.c.b16 %v2426, %v2422
        %v2971 = vpack.c.b16 %v2427, %v2423
        %v2972 = vpack.c.b16 %v2428, %v2424
        %v2973 = vpack.c.b16 %v2429, %v2425
        %v2974 = vpack.c.b16 %v2434, %v2430
        %v2975 = vpack.c.b16 %v2435, %v2431
        %v2976 = vpack.c.b16 %v2436, %v2432
        %v2977 = vpack.c.b16 %v2437, %v2433
        %v2978 = vpack.c.b16 %v2442, %v2438
        %v2979 = vpack.c.b16 %v2443, %v2439
        %v2980 = vpack.c.b16 %v2444, %v2440
        %v2981 = vpack.c.b16 %v2445, %v2441
        %v2982 = vpack.c.b16 %v2450, %v2446
        %v2983 = vpack.c.b16 %v2451, %v2447
        %v2984 = vpack.c.b16 %v2452, %v2448
        %v2985 = vpack.c.b16 %v2453, %v2449
        %v2986 = vpack.c.b16 %v2458, %v2454
        %v2987 = vpack.c.b16 %v2459, %v2455
        %v2988 = vpack.c.b16 %v2460, %v2456
        %v2989 = vpack.c.b16 %v2461, %v2457
        %v2990 = vpack.c.b16 %v2466, %v2462
        %v2991 = vpack.c.b16 %v2467, %v2463
        %v2992 = vpack.c.b16 %v2468, %v2464
        %v2993 = vpack.c.b16 %v2469, %v2465
        %v2994 = vpack.c.b16 %v2474, %v2470
        %v2995 = vpack.c.b16 %v2475, %v2471
        %v2996 = vpack.c.b16 %v2476, %v2472
        %v2997 = vpack.c.b16 %v2477, %v2473
        %v2998 = vpack.c.b16 %v2482, %v2478
        %v2999 = vpack.c.b16 %v2483, %v2479
        %v3000 = vpack.c.b16 %v2484, %v2480
        %v3001 = vpack.c.b16 %v2485, %v2481
        %v3002 = vpack.c.b16 %v2490, %v2486
        %v3003 = vpack.c.b16 %v2491, %v2487
        %v3004 = vpack.c.b16 %v2492, %v2488
        %v3005 = vpack.c.b16 %v2493, %v2489
        %3518 = vmatpush.bf16.msra.mxu0 %v2522
        %3519 = vmatpush.bf16.msra.mxu0 %v2518
        %3520 = vmatpush.bf16.msra.mxu0 %v2514
        %3521 = vmatpush.bf16.msra.mxu0 %v2510
        %3522 = vmatpush.bf16.msra.mxu0 %v2506
        %3523 = vmatpush.bf16.msra.mxu0 %v2502
        %3524 = vmatpush.bf16.msra.mxu0 %v2498
        %3525 = vmatpush.bf16.msra.mxu0 %v2494
        %3526 = vmatmul.bf16.gmra.mxu0 %v926
        %v3527 = vpop.f32.mrf.mxu0
        %v3528 = vadd.f32 0.0, %v3527
        %v3529 = vpop.f32.mrf.mxu0
        %3530 = vdwg.mxu0
        %3531 = vmatpush.bf16.msra.mxu0 %v2554
        %3532 = vmatpush.bf16.msra.mxu0 %v2550
        %3533 = vmatpush.bf16.msra.mxu0 %v2546
        %3534 = vmatpush.bf16.msra.mxu0 %v2542
        %3535 = vmatpush.bf16.msra.mxu0 %v2538
        %3536 = vmatpush.bf16.msra.mxu0 %v2534
        %3537 = vmatpush.bf16.msra.mxu0 %v2530
        %3538 = vmatpush.bf16.msra.mxu0 %v2526
        %3539 = vmatmul.bf16.gmra.mxu0 %v927
        %v3540 = vpop.f32.mrf.mxu0
        %v3541 = vadd.f32 %v3528, %v3540
        %v3542 = vpop.f32.mrf.mxu0
        %3543 = vdwg.mxu0
        %3544 = vmatpush.bf16.msra.mxu0 %v2586
        %3545 = vmatpush.bf16.msra.mxu0 %v2582
        %3546 = vmatpush.bf16.msra.mxu0 %v2578
        %3547 = vmatpush.bf16.msra.mxu0 %v2574
        %3548 = vmatpush.bf16.msra.mxu0 %v2570
        %3549 = vmatpush.bf16.msra.mxu0 %v2566
        %3550 = vmatpush.bf16.msra.mxu0 %v2562
        %3551 = vmatpush.bf16.msra.mxu0 %v2558
        %3552 = vmatmul.bf16.gmra.mxu0 %v928
        %v3553 = vpop.f32.mrf.mxu0
        %v3554 = vadd.f32 %v3541, %v3553
        %v3555 = vpop.f32.mrf.mxu0
        %3556 = vdwg.mxu0
        %3557 = vmatpush.bf16.msra.mxu0 %v2618
        %3558 = vmatpush.bf16.msra.mxu0 %v2614
        %3559 = vmatpush.bf16.msra.mxu0 %v2610
        %3560 = vmatpush.bf16.msra.mxu0 %v2606
        %3561 = vmatpush.bf16.msra.mxu0 %v2602
        %3562 = vmatpush.bf16.msra.mxu0 %v2598
        %3563 = vmatpush.bf16.msra.mxu0 %v2594
        %3564 = vmatpush.bf16.msra.mxu0 %v2590
        %3565 = vmatmul.bf16.gmra.mxu0 %v929
        %v3566 = vpop.f32.mrf.mxu0
        %v3567 = vadd.f32 %v3554, %v3566
        %v3568 = vpop.f32.mrf.mxu0
        %3569 = vdwg.mxu0
        %3570 = vmatpush.bf16.msra.mxu0 %v2650
        %3571 = vmatpush.bf16.msra.mxu0 %v2646
        %3572 = vmatpush.bf16.msra.mxu0 %v2642
        %3573 = vmatpush.bf16.msra.mxu0 %v2638
        %3574 = vmatpush.bf16.msra.mxu0 %v2634
        %3575 = vmatpush.bf16.msra.mxu0 %v2630
        %3576 = vmatpush.bf16.msra.mxu0 %v2626
        %3577 = vmatpush.bf16.msra.mxu0 %v2622
        %3578 = vmatmul.bf16.gmra.mxu0 %v930
        %v3579 = vpop.f32.mrf.mxu0
        %v3580 = vadd.f32 %v3567, %v3579
        %v3581 = vpop.f32.mrf.mxu0
        %3582 = vdwg.mxu0
        %3583 = vmatpush.bf16.msra.mxu0 %v2682
        %3584 = vmatpush.bf16.msra.mxu0 %v2678
        %3585 = vmatpush.bf16.msra.mxu0 %v2674
        %3586 = vmatpush.bf16.msra.mxu0 %v2670
        %3587 = vmatpush.bf16.msra.mxu0 %v2666
        %3588 = vmatpush.bf16.msra.mxu0 %v2662
        %3589 = vmatpush.bf16.msra.mxu0 %v2658
        %3590 = vmatpush.bf16.msra.mxu0 %v2654
        %3591 = vmatmul.bf16.gmra.mxu0 %v931
        %v3592 = vpop.f32.mrf.mxu0
        %v3593 = vadd.f32 %v3580, %v3592
        %v3594 = vpop.f32.mrf.mxu0
        %3595 = vdwg.mxu0
        %3596 = vmatpush.bf16.msra.mxu0 %v2714
        %3597 = vmatpush.bf16.msra.mxu0 %v2710
        %3598 = vmatpush.bf16.msra.mxu0 %v2706
        %3599 = vmatpush.bf16.msra.mxu0 %v2702
        %3600 = vmatpush.bf16.msra.mxu0 %v2698
        %3601 = vmatpush.bf16.msra.mxu0 %v2694
        %3602 = vmatpush.bf16.msra.mxu0 %v2690
        %3603 = vmatpush.bf16.msra.mxu0 %v2686
        %3604 = vmatmul.bf16.gmra.mxu0 %v932
        %v3605 = vpop.f32.mrf.mxu0
        %v3606 = vadd.f32 %v3593, %v3605
        %v3607 = vpop.f32.mrf.mxu0
        %3608 = vdwg.mxu0
        %3609 = vmatpush.bf16.msra.mxu0 %v2746
        %3610 = vmatpush.bf16.msra.mxu0 %v2742
        %3611 = vmatpush.bf16.msra.mxu0 %v2738
        %3612 = vmatpush.bf16.msra.mxu0 %v2734
        %3613 = vmatpush.bf16.msra.mxu0 %v2730
        %3614 = vmatpush.bf16.msra.mxu0 %v2726
        %3615 = vmatpush.bf16.msra.mxu0 %v2722
        %3616 = vmatpush.bf16.msra.mxu0 %v2718
        %3617 = vmatmul.bf16.gmra.mxu0 %v933
        %v3618 = vpop.f32.mrf.mxu0
        %v3619 = vadd.f32 %v3606, %v3618
        %v3620 = vpop.f32.mrf.mxu0
        %3621 = vdwg.mxu0
        %3622 = vmatpush.bf16.msra.mxu0 %v2778
        %3623 = vmatpush.bf16.msra.mxu0 %v2774
        %3624 = vmatpush.bf16.msra.mxu0 %v2770
        %3625 = vmatpush.bf16.msra.mxu0 %v2766
        %3626 = vmatpush.bf16.msra.mxu0 %v2762
        %3627 = vmatpush.bf16.msra.mxu0 %v2758
        %3628 = vmatpush.bf16.msra.mxu0 %v2754
        %3629 = vmatpush.bf16.msra.mxu0 %v2750
        %3630 = vmatmul.bf16.gmra.mxu0 %v934
        %v3631 = vpop.f32.mrf.mxu0
        %v3632 = vadd.f32 %v3619, %v3631
        %v3633 = vpop.f32.mrf.mxu0
        %3634 = vdwg.mxu0
        %3635 = vmatpush.bf16.msra.mxu0 %v2810
        %3636 = vmatpush.bf16.msra.mxu0 %v2806
        %3637 = vmatpush.bf16.msra.mxu0 %v2802
        %3638 = vmatpush.bf16.msra.mxu0 %v2798
        %3639 = vmatpush.bf16.msra.mxu0 %v2794
        %3640 = vmatpush.bf16.msra.mxu0 %v2790
        %3641 = vmatpush.bf16.msra.mxu0 %v2786
        %3642 = vmatpush.bf16.msra.mxu0 %v2782
        %3643 = vmatmul.bf16.gmra.mxu0 %v935
        %v3644 = vpop.f32.mrf.mxu0
        %v3645 = vadd.f32 %v3632, %v3644
        %v3646 = vpop.f32.mrf.mxu0
        %3647 = vdwg.mxu0
        %3648 = vmatpush.bf16.msra.mxu0 %v2842
        %3649 = vmatpush.bf16.msra.mxu0 %v2838
        %3650 = vmatpush.bf16.msra.mxu0 %v2834
        %3651 = vmatpush.bf16.msra.mxu0 %v2830
        %3652 = vmatpush.bf16.msra.mxu0 %v2826
        %3653 = vmatpush.bf16.msra.mxu0 %v2822
        %3654 = vmatpush.bf16.msra.mxu0 %v2818
        %3655 = vmatpush.bf16.msra.mxu0 %v2814
        %3656 = vmatmul.bf16.gmra.mxu0 %v936
        %v3657 = vpop.f32.mrf.mxu0
        %v3658 = vadd.f32 %v3645, %v3657
        %v3659 = vpop.f32.mrf.mxu0
        %3660 = vdwg.mxu0
        %3661 = vmatpush.bf16.msra.mxu0 %v2874
        %3662 = vmatpush.bf16.msra.mxu0 %v2870
        %3663 = vmatpush.bf16.msra.mxu0 %v2866
        %3664 = vmatpush.bf16.msra.mxu0 %v2862
        %3665 = vmatpush.bf16.msra.mxu0 %v2858
        %3666 = vmatpush.bf16.msra.mxu0 %v2854
        %3667 = vmatpush.bf16.msra.mxu0 %v2850
        %3668 = vmatpush.bf16.msra.mxu0 %v2846
        %3669 = vmatmul.bf16.gmra.mxu0 %v937
        %v3670 = vpop.f32.mrf.mxu0
        %v3671 = vadd.f32 %v3658, %v3670
        %v3672 = vpop.f32.mrf.mxu0
        %3673 = vdwg.mxu0
        %3674 = vmatpush.bf16.msra.mxu0 %v2906
        %3675 = vmatpush.bf16.msra.mxu0 %v2902
        %3676 = vmatpush.bf16.msra.mxu0 %v2898
        %3677 = vmatpush.bf16.msra.mxu0 %v2894
        %3678 = vmatpush.bf16.msra.mxu0 %v2890
        %3679 = vmatpush.bf16.msra.mxu0 %v2886
        %3680 = vmatpush.bf16.msra.mxu0 %v2882
        %3681 = vmatpush.bf16.msra.mxu0 %v2878
        %3682 = vmatmul.bf16.gmra.mxu0 %v938
        %v3683 = vpop.f32.mrf.mxu0
        %v3684 = vadd.f32 %v3671, %v3683
        %v3685 = vpop.f32.mrf.mxu0
        %3686 = vdwg.mxu0
        %3687 = vmatpush.bf16.msra.mxu0 %v2938
        %3688 = vmatpush.bf16.msra.mxu0 %v2934
        %3689 = vmatpush.bf16.msra.mxu0 %v2930
        %3690 = vmatpush.bf16.msra.mxu0 %v2926
        %3691 = vmatpush.bf16.msra.mxu0 %v2922
        %3692 = vmatpush.bf16.msra.mxu0 %v2918
        %3693 = vmatpush.bf16.msra.mxu0 %v2914
        %3694 = vmatpush.bf16.msra.mxu0 %v2910
        %3695 = vmatmul.bf16.gmra.mxu0 %v939
        %v3696 = vpop.f32.mrf.mxu0
        %v3697 = vadd.f32 %v3684, %v3696
        %v3698 = vpop.f32.mrf.mxu0
        %3699 = vdwg.mxu0
        %3700 = vmatpush.bf16.msra.mxu0 %v2970
        %3701 = vmatpush.bf16.msra.mxu0 %v2966
        %3702 = vmatpush.bf16.msra.mxu0 %v2962
        %3703 = vmatpush.bf16.msra.mxu0 %v2958
        %3704 = vmatpush.bf16.msra.mxu0 %v2954
        %3705 = vmatpush.bf16.msra.mxu0 %v2950
        %3706 = vmatpush.bf16.msra.mxu0 %v2946
        %3707 = vmatpush.bf16.msra.mxu0 %v2942
        %3708 = vmatmul.bf16.gmra.mxu0 %v940
        %v3709 = vpop.f32.mrf.mxu0
        %v3710 = vadd.f32 %v3697, %v3709
        %v3711 = vpop.f32.mrf.mxu0
        %3712 = vdwg.mxu0
        %3713 = vmatpush.bf16.msra.mxu0 %v3002
        %3714 = vmatpush.bf16.msra.mxu0 %v2998
        %3715 = vmatpush.bf16.msra.mxu0 %v2994
        %3716 = vmatpush.bf16.msra.mxu0 %v2990
        %3717 = vmatpush.bf16.msra.mxu0 %v2986
        %3718 = vmatpush.bf16.msra.mxu0 %v2982
        %3719 = vmatpush.bf16.msra.mxu0 %v2978
        %3720 = vmatpush.bf16.msra.mxu0 %v2974
        %3721 = vmatmul.bf16.gmra.mxu0 %v941
        %v3722 = vpop.f32.mrf.mxu0
        %v3723 = vadd.f32 %v3710, %v3722
        %v3724 = vpop.f32.mrf.mxu0
        %3725 = vdwg.mxu0
        %3726 = vmatpush.bf16.msra.mxu0 %v2523
        %3727 = vmatpush.bf16.msra.mxu0 %v2519
        %3728 = vmatpush.bf16.msra.mxu0 %v2515
        %3729 = vmatpush.bf16.msra.mxu0 %v2511
        %3730 = vmatpush.bf16.msra.mxu0 %v2507
        %3731 = vmatpush.bf16.msra.mxu0 %v2503
        %3732 = vmatpush.bf16.msra.mxu0 %v2499
        %3733 = vmatpush.bf16.msra.mxu0 %v2495
        %3734 = vmatmul.bf16.gmra.mxu0 %v926
        %v3735 = vpop.f32.mrf.mxu0
        %v3736 = vadd.f32 0.0, %v3735
        %v3737 = vpop.f32.mrf.mxu0
        %3738 = vdwg.mxu0
        %3739 = vmatpush.bf16.msra.mxu0 %v2555
        %3740 = vmatpush.bf16.msra.mxu0 %v2551
        %3741 = vmatpush.bf16.msra.mxu0 %v2547
        %3742 = vmatpush.bf16.msra.mxu0 %v2543
        %3743 = vmatpush.bf16.msra.mxu0 %v2539
        %3744 = vmatpush.bf16.msra.mxu0 %v2535
        %3745 = vmatpush.bf16.msra.mxu0 %v2531
        %3746 = vmatpush.bf16.msra.mxu0 %v2527
        %3747 = vmatmul.bf16.gmra.mxu0 %v927
        %v3748 = vpop.f32.mrf.mxu0
        %v3749 = vadd.f32 %v3736, %v3748
        %v3750 = vpop.f32.mrf.mxu0
        %3751 = vdwg.mxu0
        %3752 = vmatpush.bf16.msra.mxu0 %v2587
        %3753 = vmatpush.bf16.msra.mxu0 %v2583
        %3754 = vmatpush.bf16.msra.mxu0 %v2579
        %3755 = vmatpush.bf16.msra.mxu0 %v2575
        %3756 = vmatpush.bf16.msra.mxu0 %v2571
        %3757 = vmatpush.bf16.msra.mxu0 %v2567
        %3758 = vmatpush.bf16.msra.mxu0 %v2563
        %3759 = vmatpush.bf16.msra.mxu0 %v2559
        %3760 = vmatmul.bf16.gmra.mxu0 %v928
        %v3761 = vpop.f32.mrf.mxu0
        %v3762 = vadd.f32 %v3749, %v3761
        %v3763 = vpop.f32.mrf.mxu0
        %3764 = vdwg.mxu0
        %3765 = vmatpush.bf16.msra.mxu0 %v2619
        %3766 = vmatpush.bf16.msra.mxu0 %v2615
        %3767 = vmatpush.bf16.msra.mxu0 %v2611
        %3768 = vmatpush.bf16.msra.mxu0 %v2607
        %3769 = vmatpush.bf16.msra.mxu0 %v2603
        %3770 = vmatpush.bf16.msra.mxu0 %v2599
        %3771 = vmatpush.bf16.msra.mxu0 %v2595
        %3772 = vmatpush.bf16.msra.mxu0 %v2591
        %3773 = vmatmul.bf16.gmra.mxu0 %v929
        %v3774 = vpop.f32.mrf.mxu0
        %v3775 = vadd.f32 %v3762, %v3774
        %v3776 = vpop.f32.mrf.mxu0
        %3777 = vdwg.mxu0
        %3778 = vmatpush.bf16.msra.mxu0 %v2651
        %3779 = vmatpush.bf16.msra.mxu0 %v2647
        %3780 = vmatpush.bf16.msra.mxu0 %v2643
        %3781 = vmatpush.bf16.msra.mxu0 %v2639
        %3782 = vmatpush.bf16.msra.mxu0 %v2635
        %3783 = vmatpush.bf16.msra.mxu0 %v2631
        %3784 = vmatpush.bf16.msra.mxu0 %v2627
        %3785 = vmatpush.bf16.msra.mxu0 %v2623
        %3786 = vmatmul.bf16.gmra.mxu0 %v930
        %v3787 = vpop.f32.mrf.mxu0
        %v3788 = vadd.f32 %v3775, %v3787
        %v3789 = vpop.f32.mrf.mxu0
        %3790 = vdwg.mxu0
        %3791 = vmatpush.bf16.msra.mxu0 %v2683
        %3792 = vmatpush.bf16.msra.mxu0 %v2679
        %3793 = vmatpush.bf16.msra.mxu0 %v2675
        %3794 = vmatpush.bf16.msra.mxu0 %v2671
        %3795 = vmatpush.bf16.msra.mxu0 %v2667
        %3796 = vmatpush.bf16.msra.mxu0 %v2663
        %3797 = vmatpush.bf16.msra.mxu0 %v2659
        %3798 = vmatpush.bf16.msra.mxu0 %v2655
        %3799 = vmatmul.bf16.gmra.mxu0 %v931
        %v3800 = vpop.f32.mrf.mxu0
        %v3801 = vadd.f32 %v3788, %v3800
        %v3802 = vpop.f32.mrf.mxu0
        %3803 = vdwg.mxu0
        %3804 = vmatpush.bf16.msra.mxu0 %v2715
        %3805 = vmatpush.bf16.msra.mxu0 %v2711
        %3806 = vmatpush.bf16.msra.mxu0 %v2707
        %3807 = vmatpush.bf16.msra.mxu0 %v2703
        %3808 = vmatpush.bf16.msra.mxu0 %v2699
        %3809 = vmatpush.bf16.msra.mxu0 %v2695
        %3810 = vmatpush.bf16.msra.mxu0 %v2691
        %3811 = vmatpush.bf16.msra.mxu0 %v2687
        %3812 = vmatmul.bf16.gmra.mxu0 %v932
        %v3813 = vpop.f32.mrf.mxu0
        %v3814 = vadd.f32 %v3801, %v3813
        %v3815 = vpop.f32.mrf.mxu0
        %3816 = vdwg.mxu0
        %3817 = vmatpush.bf16.msra.mxu0 %v2747
        %3818 = vmatpush.bf16.msra.mxu0 %v2743
        %3819 = vmatpush.bf16.msra.mxu0 %v2739
        %3820 = vmatpush.bf16.msra.mxu0 %v2735
        %3821 = vmatpush.bf16.msra.mxu0 %v2731
        %3822 = vmatpush.bf16.msra.mxu0 %v2727
        %3823 = vmatpush.bf16.msra.mxu0 %v2723
        %3824 = vmatpush.bf16.msra.mxu0 %v2719
        %3825 = vmatmul.bf16.gmra.mxu0 %v933
        %v3826 = vpop.f32.mrf.mxu0
        %v3827 = vadd.f32 %v3814, %v3826
        %v3828 = vpop.f32.mrf.mxu0
        %3829 = vdwg.mxu0
        %3830 = vmatpush.bf16.msra.mxu0 %v2779
        %3831 = vmatpush.bf16.msra.mxu0 %v2775
        %3832 = vmatpush.bf16.msra.mxu0 %v2771
        %3833 = vmatpush.bf16.msra.mxu0 %v2767
        %3834 = vmatpush.bf16.msra.mxu0 %v2763
        %3835 = vmatpush.bf16.msra.mxu0 %v2759
        %3836 = vmatpush.bf16.msra.mxu0 %v2755
        %3837 = vmatpush.bf16.msra.mxu0 %v2751
        %3838 = vmatmul.bf16.gmra.mxu0 %v934
        %v3839 = vpop.f32.mrf.mxu0
        %v3840 = vadd.f32 %v3827, %v3839
        %v3841 = vpop.f32.mrf.mxu0
        %3842 = vdwg.mxu0
        %3843 = vmatpush.bf16.msra.mxu0 %v2811
        %3844 = vmatpush.bf16.msra.mxu0 %v2807
        %3845 = vmatpush.bf16.msra.mxu0 %v2803
        %3846 = vmatpush.bf16.msra.mxu0 %v2799
        %3847 = vmatpush.bf16.msra.mxu0 %v2795
        %3848 = vmatpush.bf16.msra.mxu0 %v2791
        %3849 = vmatpush.bf16.msra.mxu0 %v2787
        %3850 = vmatpush.bf16.msra.mxu0 %v2783
        %3851 = vmatmul.bf16.gmra.mxu0 %v935
        %v3852 = vpop.f32.mrf.mxu0
        %v3853 = vadd.f32 %v3840, %v3852
        %v3854 = vpop.f32.mrf.mxu0
        %3855 = vdwg.mxu0
        %3856 = vmatpush.bf16.msra.mxu0 %v2843
        %3857 = vmatpush.bf16.msra.mxu0 %v2839
        %3858 = vmatpush.bf16.msra.mxu0 %v2835
        %3859 = vmatpush.bf16.msra.mxu0 %v2831
        %3860 = vmatpush.bf16.msra.mxu0 %v2827
        %3861 = vmatpush.bf16.msra.mxu0 %v2823
        %3862 = vmatpush.bf16.msra.mxu0 %v2819
        %3863 = vmatpush.bf16.msra.mxu0 %v2815
        %3864 = vmatmul.bf16.gmra.mxu0 %v936
        %v3865 = vpop.f32.mrf.mxu0
        %v3866 = vadd.f32 %v3853, %v3865
        %v3867 = vpop.f32.mrf.mxu0
        %3868 = vdwg.mxu0
        %3869 = vmatpush.bf16.msra.mxu0 %v2875
        %3870 = vmatpush.bf16.msra.mxu0 %v2871
        %3871 = vmatpush.bf16.msra.mxu0 %v2867
        %3872 = vmatpush.bf16.msra.mxu0 %v2863
        %3873 = vmatpush.bf16.msra.mxu0 %v2859
        %3874 = vmatpush.bf16.msra.mxu0 %v2855
        %3875 = vmatpush.bf16.msra.mxu0 %v2851
        %3876 = vmatpush.bf16.msra.mxu0 %v2847
        %3877 = vmatmul.bf16.gmra.mxu0 %v937
        %v3878 = vpop.f32.mrf.mxu0
        %v3879 = vadd.f32 %v3866, %v3878
        %v3880 = vpop.f32.mrf.mxu0
        %3881 = vdwg.mxu0
        %3882 = vmatpush.bf16.msra.mxu0 %v2907
        %3883 = vmatpush.bf16.msra.mxu0 %v2903
        %3884 = vmatpush.bf16.msra.mxu0 %v2899
        %3885 = vmatpush.bf16.msra.mxu0 %v2895
        %3886 = vmatpush.bf16.msra.mxu0 %v2891
        %3887 = vmatpush.bf16.msra.mxu0 %v2887
        %3888 = vmatpush.bf16.msra.mxu0 %v2883
        %3889 = vmatpush.bf16.msra.mxu0 %v2879
        %3890 = vmatmul.bf16.gmra.mxu0 %v938
        %v3891 = vpop.f32.mrf.mxu0
        %v3892 = vadd.f32 %v3879, %v3891
        %v3893 = vpop.f32.mrf.mxu0
        %3894 = vdwg.mxu0
        %3895 = vmatpush.bf16.msra.mxu0 %v2939
        %3896 = vmatpush.bf16.msra.mxu0 %v2935
        %3897 = vmatpush.bf16.msra.mxu0 %v2931
        %3898 = vmatpush.bf16.msra.mxu0 %v2927
        %3899 = vmatpush.bf16.msra.mxu0 %v2923
        %3900 = vmatpush.bf16.msra.mxu0 %v2919
        %3901 = vmatpush.bf16.msra.mxu0 %v2915
        %3902 = vmatpush.bf16.msra.mxu0 %v2911
        %3903 = vmatmul.bf16.gmra.mxu0 %v939
        %v3904 = vpop.f32.mrf.mxu0
        %v3905 = vadd.f32 %v3892, %v3904
        %v3906 = vpop.f32.mrf.mxu0
        %3907 = vdwg.mxu0
        %3908 = vmatpush.bf16.msra.mxu0 %v2971
        %3909 = vmatpush.bf16.msra.mxu0 %v2967
        %3910 = vmatpush.bf16.msra.mxu0 %v2963
        %3911 = vmatpush.bf16.msra.mxu0 %v2959
        %3912 = vmatpush.bf16.msra.mxu0 %v2955
        %3913 = vmatpush.bf16.msra.mxu0 %v2951
        %3914 = vmatpush.bf16.msra.mxu0 %v2947
        %3915 = vmatpush.bf16.msra.mxu0 %v2943
        %3916 = vmatmul.bf16.gmra.mxu0 %v940
        %v3917 = vpop.f32.mrf.mxu0
        %v3918 = vadd.f32 %v3905, %v3917
        %v3919 = vpop.f32.mrf.mxu0
        %3920 = vdwg.mxu0
        %3921 = vmatpush.bf16.msra.mxu0 %v3003
        %3922 = vmatpush.bf16.msra.mxu0 %v2999
        %3923 = vmatpush.bf16.msra.mxu0 %v2995
        %3924 = vmatpush.bf16.msra.mxu0 %v2991
        %3925 = vmatpush.bf16.msra.mxu0 %v2987
        %3926 = vmatpush.bf16.msra.mxu0 %v2983
        %3927 = vmatpush.bf16.msra.mxu0 %v2979
        %3928 = vmatpush.bf16.msra.mxu0 %v2975
        %3929 = vmatmul.bf16.gmra.mxu0 %v941
        %v3930 = vpop.f32.mrf.mxu0
        %v3931 = vadd.f32 %v3918, %v3930
        %v3932 = vpop.f32.mrf.mxu0
        %3933 = vdwg.mxu0
        %3934 = vmatpush.bf16.msra.mxu0 %v2524
        %3935 = vmatpush.bf16.msra.mxu0 %v2520
        %3936 = vmatpush.bf16.msra.mxu0 %v2516
        %3937 = vmatpush.bf16.msra.mxu0 %v2512
        %3938 = vmatpush.bf16.msra.mxu0 %v2508
        %3939 = vmatpush.bf16.msra.mxu0 %v2504
        %3940 = vmatpush.bf16.msra.mxu0 %v2500
        %3941 = vmatpush.bf16.msra.mxu0 %v2496
        %3942 = vmatmul.bf16.gmra.mxu0 %v926
        %v3943 = vpop.f32.mrf.mxu0
        %v3944 = vadd.f32 0.0, %v3943
        %v3945 = vpop.f32.mrf.mxu0
        %3946 = vdwg.mxu0
        %3947 = vmatpush.bf16.msra.mxu0 %v2556
        %3948 = vmatpush.bf16.msra.mxu0 %v2552
        %3949 = vmatpush.bf16.msra.mxu0 %v2548
        %3950 = vmatpush.bf16.msra.mxu0 %v2544
        %3951 = vmatpush.bf16.msra.mxu0 %v2540
        %3952 = vmatpush.bf16.msra.mxu0 %v2536
        %3953 = vmatpush.bf16.msra.mxu0 %v2532
        %3954 = vmatpush.bf16.msra.mxu0 %v2528
        %3955 = vmatmul.bf16.gmra.mxu0 %v927
        %v3956 = vpop.f32.mrf.mxu0
        %v3957 = vadd.f32 %v3944, %v3956
        %v3958 = vpop.f32.mrf.mxu0
        %3959 = vdwg.mxu0
        %3960 = vmatpush.bf16.msra.mxu0 %v2588
        %3961 = vmatpush.bf16.msra.mxu0 %v2584
        %3962 = vmatpush.bf16.msra.mxu0 %v2580
        %3963 = vmatpush.bf16.msra.mxu0 %v2576
        %3964 = vmatpush.bf16.msra.mxu0 %v2572
        %3965 = vmatpush.bf16.msra.mxu0 %v2568
        %3966 = vmatpush.bf16.msra.mxu0 %v2564
        %3967 = vmatpush.bf16.msra.mxu0 %v2560
        %3968 = vmatmul.bf16.gmra.mxu0 %v928
        %v3969 = vpop.f32.mrf.mxu0
        %v3970 = vadd.f32 %v3957, %v3969
        %v3971 = vpop.f32.mrf.mxu0
        %3972 = vdwg.mxu0
        %3973 = vmatpush.bf16.msra.mxu0 %v2620
        %3974 = vmatpush.bf16.msra.mxu0 %v2616
        %3975 = vmatpush.bf16.msra.mxu0 %v2612
        %3976 = vmatpush.bf16.msra.mxu0 %v2608
        %3977 = vmatpush.bf16.msra.mxu0 %v2604
        %3978 = vmatpush.bf16.msra.mxu0 %v2600
        %3979 = vmatpush.bf16.msra.mxu0 %v2596
        %3980 = vmatpush.bf16.msra.mxu0 %v2592
        %3981 = vmatmul.bf16.gmra.mxu0 %v929
        %v3982 = vpop.f32.mrf.mxu0
        %v3983 = vadd.f32 %v3970, %v3982
        %v3984 = vpop.f32.mrf.mxu0
        %3985 = vdwg.mxu0
        %3986 = vmatpush.bf16.msra.mxu0 %v2652
        %3987 = vmatpush.bf16.msra.mxu0 %v2648
        %3988 = vmatpush.bf16.msra.mxu0 %v2644
        %3989 = vmatpush.bf16.msra.mxu0 %v2640
        %3990 = vmatpush.bf16.msra.mxu0 %v2636
        %3991 = vmatpush.bf16.msra.mxu0 %v2632
        %3992 = vmatpush.bf16.msra.mxu0 %v2628
        %3993 = vmatpush.bf16.msra.mxu0 %v2624
        %3994 = vmatmul.bf16.gmra.mxu0 %v930
        %v3995 = vpop.f32.mrf.mxu0
        %v3996 = vadd.f32 %v3983, %v3995
        %v3997 = vpop.f32.mrf.mxu0
        %3998 = vdwg.mxu0
        %3999 = vmatpush.bf16.msra.mxu0 %v2684
        %4000 = vmatpush.bf16.msra.mxu0 %v2680
        %4001 = vmatpush.bf16.msra.mxu0 %v2676
        %4002 = vmatpush.bf16.msra.mxu0 %v2672
        %4003 = vmatpush.bf16.msra.mxu0 %v2668
        %4004 = vmatpush.bf16.msra.mxu0 %v2664
        %4005 = vmatpush.bf16.msra.mxu0 %v2660
        %4006 = vmatpush.bf16.msra.mxu0 %v2656
        %4007 = vmatmul.bf16.gmra.mxu0 %v931
        %v4008 = vpop.f32.mrf.mxu0
        %v4009 = vadd.f32 %v3996, %v4008
        %v4010 = vpop.f32.mrf.mxu0
        %4011 = vdwg.mxu0
        %4012 = vmatpush.bf16.msra.mxu0 %v2716
        %4013 = vmatpush.bf16.msra.mxu0 %v2712
        %4014 = vmatpush.bf16.msra.mxu0 %v2708
        %4015 = vmatpush.bf16.msra.mxu0 %v2704
        %4016 = vmatpush.bf16.msra.mxu0 %v2700
        %4017 = vmatpush.bf16.msra.mxu0 %v2696
        %4018 = vmatpush.bf16.msra.mxu0 %v2692
        %4019 = vmatpush.bf16.msra.mxu0 %v2688
        %4020 = vmatmul.bf16.gmra.mxu0 %v932
        %v4021 = vpop.f32.mrf.mxu0
        %v4022 = vadd.f32 %v4009, %v4021
        %v4023 = vpop.f32.mrf.mxu0
        %4024 = vdwg.mxu0
        %4025 = vmatpush.bf16.msra.mxu0 %v2748
        %4026 = vmatpush.bf16.msra.mxu0 %v2744
        %4027 = vmatpush.bf16.msra.mxu0 %v2740
        %4028 = vmatpush.bf16.msra.mxu0 %v2736
        %4029 = vmatpush.bf16.msra.mxu0 %v2732
        %4030 = vmatpush.bf16.msra.mxu0 %v2728
        %4031 = vmatpush.bf16.msra.mxu0 %v2724
        %4032 = vmatpush.bf16.msra.mxu0 %v2720
        %4033 = vmatmul.bf16.gmra.mxu0 %v933
        %v4034 = vpop.f32.mrf.mxu0
        %v4035 = vadd.f32 %v4022, %v4034
        %v4036 = vpop.f32.mrf.mxu0
        %4037 = vdwg.mxu0
        %4038 = vmatpush.bf16.msra.mxu0 %v2780
        %4039 = vmatpush.bf16.msra.mxu0 %v2776
        %4040 = vmatpush.bf16.msra.mxu0 %v2772
        %4041 = vmatpush.bf16.msra.mxu0 %v2768
        %4042 = vmatpush.bf16.msra.mxu0 %v2764
        %4043 = vmatpush.bf16.msra.mxu0 %v2760
        %4044 = vmatpush.bf16.msra.mxu0 %v2756
        %4045 = vmatpush.bf16.msra.mxu0 %v2752
        %4046 = vmatmul.bf16.gmra.mxu0 %v934
        %v4047 = vpop.f32.mrf.mxu0
        %v4048 = vadd.f32 %v4035, %v4047
        %v4049 = vpop.f32.mrf.mxu0
        %4050 = vdwg.mxu0
        %4051 = vmatpush.bf16.msra.mxu0 %v2812
        %4052 = vmatpush.bf16.msra.mxu0 %v2808
        %4053 = vmatpush.bf16.msra.mxu0 %v2804
        %4054 = vmatpush.bf16.msra.mxu0 %v2800
        %4055 = vmatpush.bf16.msra.mxu0 %v2796
        %4056 = vmatpush.bf16.msra.mxu0 %v2792
        %4057 = vmatpush.bf16.msra.mxu0 %v2788
        %4058 = vmatpush.bf16.msra.mxu0 %v2784
        %4059 = vmatmul.bf16.gmra.mxu0 %v935
        %v4060 = vpop.f32.mrf.mxu0
        %v4061 = vadd.f32 %v4048, %v4060
        %v4062 = vpop.f32.mrf.mxu0
        %4063 = vdwg.mxu0
        %4064 = vmatpush.bf16.msra.mxu0 %v2844
        %4065 = vmatpush.bf16.msra.mxu0 %v2840
        %4066 = vmatpush.bf16.msra.mxu0 %v2836
        %4067 = vmatpush.bf16.msra.mxu0 %v2832
        %4068 = vmatpush.bf16.msra.mxu0 %v2828
        %4069 = vmatpush.bf16.msra.mxu0 %v2824
        %4070 = vmatpush.bf16.msra.mxu0 %v2820
        %4071 = vmatpush.bf16.msra.mxu0 %v2816
        %4072 = vmatmul.bf16.gmra.mxu0 %v936
        %v4073 = vpop.f32.mrf.mxu0
        %v4074 = vadd.f32 %v4061, %v4073
        %v4075 = vpop.f32.mrf.mxu0
        %4076 = vdwg.mxu0
        %4077 = vmatpush.bf16.msra.mxu0 %v2876
        %4078 = vmatpush.bf16.msra.mxu0 %v2872
        %4079 = vmatpush.bf16.msra.mxu0 %v2868
        %4080 = vmatpush.bf16.msra.mxu0 %v2864
        %4081 = vmatpush.bf16.msra.mxu0 %v2860
        %4082 = vmatpush.bf16.msra.mxu0 %v2856
        %4083 = vmatpush.bf16.msra.mxu0 %v2852
        %4084 = vmatpush.bf16.msra.mxu0 %v2848
        %4085 = vmatmul.bf16.gmra.mxu0 %v937
        %v4086 = vpop.f32.mrf.mxu0
        %v4087 = vadd.f32 %v4074, %v4086
        %v4088 = vpop.f32.mrf.mxu0
        %4089 = vdwg.mxu0
        %4090 = vmatpush.bf16.msra.mxu0 %v2908
        %4091 = vmatpush.bf16.msra.mxu0 %v2904
        %4092 = vmatpush.bf16.msra.mxu0 %v2900
        %4093 = vmatpush.bf16.msra.mxu0 %v2896
        %4094 = vmatpush.bf16.msra.mxu0 %v2892
        %4095 = vmatpush.bf16.msra.mxu0 %v2888
        %4096 = vmatpush.bf16.msra.mxu0 %v2884
        %4097 = vmatpush.bf16.msra.mxu0 %v2880
        %4098 = vmatmul.bf16.gmra.mxu0 %v938
        %v4099 = vpop.f32.mrf.mxu0
        %v4100 = vadd.f32 %v4087, %v4099
        %v4101 = vpop.f32.mrf.mxu0
        %4102 = vdwg.mxu0
        %4103 = vmatpush.bf16.msra.mxu0 %v2940
        %4104 = vmatpush.bf16.msra.mxu0 %v2936
        %4105 = vmatpush.bf16.msra.mxu0 %v2932
        %4106 = vmatpush.bf16.msra.mxu0 %v2928
        %4107 = vmatpush.bf16.msra.mxu0 %v2924
        %4108 = vmatpush.bf16.msra.mxu0 %v2920
        %4109 = vmatpush.bf16.msra.mxu0 %v2916
        %4110 = vmatpush.bf16.msra.mxu0 %v2912
        %4111 = vmatmul.bf16.gmra.mxu0 %v939
        %v4112 = vpop.f32.mrf.mxu0
        %v4113 = vadd.f32 %v4100, %v4112
        %v4114 = vpop.f32.mrf.mxu0
        %4115 = vdwg.mxu0
        %4116 = vmatpush.bf16.msra.mxu0 %v2972
        %4117 = vmatpush.bf16.msra.mxu0 %v2968
        %4118 = vmatpush.bf16.msra.mxu0 %v2964
        %4119 = vmatpush.bf16.msra.mxu0 %v2960
        %4120 = vmatpush.bf16.msra.mxu0 %v2956
        %4121 = vmatpush.bf16.msra.mxu0 %v2952
        %4122 = vmatpush.bf16.msra.mxu0 %v2948
        %4123 = vmatpush.bf16.msra.mxu0 %v2944
        %4124 = vmatmul.bf16.gmra.mxu0 %v940
        %v4125 = vpop.f32.mrf.mxu0
        %v4126 = vadd.f32 %v4113, %v4125
        %v4127 = vpop.f32.mrf.mxu0
        %4128 = vdwg.mxu0
        %4129 = vmatpush.bf16.msra.mxu0 %v3004
        %4130 = vmatpush.bf16.msra.mxu0 %v3000
        %4131 = vmatpush.bf16.msra.mxu0 %v2996
        %4132 = vmatpush.bf16.msra.mxu0 %v2992
        %4133 = vmatpush.bf16.msra.mxu0 %v2988
        %4134 = vmatpush.bf16.msra.mxu0 %v2984
        %4135 = vmatpush.bf16.msra.mxu0 %v2980
        %4136 = vmatpush.bf16.msra.mxu0 %v2976
        %4137 = vmatmul.bf16.gmra.mxu0 %v941
        %v4138 = vpop.f32.mrf.mxu0
        %v4139 = vadd.f32 %v4126, %v4138
        %v4140 = vpop.f32.mrf.mxu0
        %4141 = vdwg.mxu0
        %4142 = vmatpush.bf16.msra.mxu0 %v2525
        %4143 = vmatpush.bf16.msra.mxu0 %v2521
        %4144 = vmatpush.bf16.msra.mxu0 %v2517
        %4145 = vmatpush.bf16.msra.mxu0 %v2513
        %4146 = vmatpush.bf16.msra.mxu0 %v2509
        %4147 = vmatpush.bf16.msra.mxu0 %v2505
        %4148 = vmatpush.bf16.msra.mxu0 %v2501
        %4149 = vmatpush.bf16.msra.mxu0 %v2497
        %4150 = vmatmul.bf16.gmra.mxu0 %v926
        %v4151 = vpop.f32.mrf.mxu0
        %v4152 = vadd.f32 0.0, %v4151
        %v4153 = vpop.f32.mrf.mxu0
        %4154 = vdwg.mxu0
        %4155 = vmatpush.bf16.msra.mxu0 %v2557
        %4156 = vmatpush.bf16.msra.mxu0 %v2553
        %4157 = vmatpush.bf16.msra.mxu0 %v2549
        %4158 = vmatpush.bf16.msra.mxu0 %v2545
        %4159 = vmatpush.bf16.msra.mxu0 %v2541
        %4160 = vmatpush.bf16.msra.mxu0 %v2537
        %4161 = vmatpush.bf16.msra.mxu0 %v2533
        %4162 = vmatpush.bf16.msra.mxu0 %v2529
        %4163 = vmatmul.bf16.gmra.mxu0 %v927
        %v4164 = vpop.f32.mrf.mxu0
        %v4165 = vadd.f32 %v4152, %v4164
        %v4166 = vpop.f32.mrf.mxu0
        %4167 = vdwg.mxu0
        %4168 = vmatpush.bf16.msra.mxu0 %v2589
        %4169 = vmatpush.bf16.msra.mxu0 %v2585
        %4170 = vmatpush.bf16.msra.mxu0 %v2581
        %4171 = vmatpush.bf16.msra.mxu0 %v2577
        %4172 = vmatpush.bf16.msra.mxu0 %v2573
        %4173 = vmatpush.bf16.msra.mxu0 %v2569
        %4174 = vmatpush.bf16.msra.mxu0 %v2565
        %4175 = vmatpush.bf16.msra.mxu0 %v2561
        %4176 = vmatmul.bf16.gmra.mxu0 %v928
        %v4177 = vpop.f32.mrf.mxu0
        %v4178 = vadd.f32 %v4165, %v4177
        %v4179 = vpop.f32.mrf.mxu0
        %4180 = vdwg.mxu0
        %4181 = vmatpush.bf16.msra.mxu0 %v2621
        %4182 = vmatpush.bf16.msra.mxu0 %v2617
        %4183 = vmatpush.bf16.msra.mxu0 %v2613
        %4184 = vmatpush.bf16.msra.mxu0 %v2609
        %4185 = vmatpush.bf16.msra.mxu0 %v2605
        %4186 = vmatpush.bf16.msra.mxu0 %v2601
        %4187 = vmatpush.bf16.msra.mxu0 %v2597
        %4188 = vmatpush.bf16.msra.mxu0 %v2593
        %4189 = vmatmul.bf16.gmra.mxu0 %v929
        %v4190 = vpop.f32.mrf.mxu0
        %v4191 = vadd.f32 %v4178, %v4190
        %v4192 = vpop.f32.mrf.mxu0
        %4193 = vdwg.mxu0
        %4194 = vmatpush.bf16.msra.mxu0 %v2653
        %4195 = vmatpush.bf16.msra.mxu0 %v2649
        %4196 = vmatpush.bf16.msra.mxu0 %v2645
        %4197 = vmatpush.bf16.msra.mxu0 %v2641
        %4198 = vmatpush.bf16.msra.mxu0 %v2637
        %4199 = vmatpush.bf16.msra.mxu0 %v2633
        %4200 = vmatpush.bf16.msra.mxu0 %v2629
        %4201 = vmatpush.bf16.msra.mxu0 %v2625
        %4202 = vmatmul.bf16.gmra.mxu0 %v930
        %v4203 = vpop.f32.mrf.mxu0
        %v4204 = vadd.f32 %v4191, %v4203
        %v4205 = vpop.f32.mrf.mxu0
        %4206 = vdwg.mxu0
        %4207 = vmatpush.bf16.msra.mxu0 %v2685
        %4208 = vmatpush.bf16.msra.mxu0 %v2681
        %4209 = vmatpush.bf16.msra.mxu0 %v2677
        %4210 = vmatpush.bf16.msra.mxu0 %v2673
        %4211 = vmatpush.bf16.msra.mxu0 %v2669
        %4212 = vmatpush.bf16.msra.mxu0 %v2665
        %4213 = vmatpush.bf16.msra.mxu0 %v2661
        %4214 = vmatpush.bf16.msra.mxu0 %v2657
        %4215 = vmatmul.bf16.gmra.mxu0 %v931
        %v4216 = vpop.f32.mrf.mxu0
        %v4217 = vadd.f32 %v4204, %v4216
        %v4218 = vpop.f32.mrf.mxu0
        %4219 = vdwg.mxu0
        %4220 = vmatpush.bf16.msra.mxu0 %v2717
        %4221 = vmatpush.bf16.msra.mxu0 %v2713
        %4222 = vmatpush.bf16.msra.mxu0 %v2709
        %4223 = vmatpush.bf16.msra.mxu0 %v2705
        %4224 = vmatpush.bf16.msra.mxu0 %v2701
        %4225 = vmatpush.bf16.msra.mxu0 %v2697
        %4226 = vmatpush.bf16.msra.mxu0 %v2693
        %4227 = vmatpush.bf16.msra.mxu0 %v2689
        %4228 = vmatmul.bf16.gmra.mxu0 %v932
        %v4229 = vpop.f32.mrf.mxu0
        %v4230 = vadd.f32 %v4217, %v4229
        %v4231 = vpop.f32.mrf.mxu0
        %4232 = vdwg.mxu0
        %4233 = vmatpush.bf16.msra.mxu0 %v2749
        %4234 = vmatpush.bf16.msra.mxu0 %v2745
        %4235 = vmatpush.bf16.msra.mxu0 %v2741
        %4236 = vmatpush.bf16.msra.mxu0 %v2737
        %4237 = vmatpush.bf16.msra.mxu0 %v2733
        %4238 = vmatpush.bf16.msra.mxu0 %v2729
        %4239 = vmatpush.bf16.msra.mxu0 %v2725
        %4240 = vmatpush.bf16.msra.mxu0 %v2721
        %4241 = vmatmul.bf16.gmra.mxu0 %v933
        %v4242 = vpop.f32.mrf.mxu0
        %v4243 = vadd.f32 %v4230, %v4242
        %v4244 = vpop.f32.mrf.mxu0
        %4245 = vdwg.mxu0
        %4246 = vmatpush.bf16.msra.mxu0 %v2781
        %4247 = vmatpush.bf16.msra.mxu0 %v2777
        %4248 = vmatpush.bf16.msra.mxu0 %v2773
        %4249 = vmatpush.bf16.msra.mxu0 %v2769
        %4250 = vmatpush.bf16.msra.mxu0 %v2765
        %4251 = vmatpush.bf16.msra.mxu0 %v2761
        %4252 = vmatpush.bf16.msra.mxu0 %v2757
        %4253 = vmatpush.bf16.msra.mxu0 %v2753
        %4254 = vmatmul.bf16.gmra.mxu0 %v934
        %v4255 = vpop.f32.mrf.mxu0
        %v4256 = vadd.f32 %v4243, %v4255
        %v4257 = vpop.f32.mrf.mxu0
        %4258 = vdwg.mxu0
        %4259 = vmatpush.bf16.msra.mxu0 %v2813
        %4260 = vmatpush.bf16.msra.mxu0 %v2809
        %4261 = vmatpush.bf16.msra.mxu0 %v2805
        %4262 = vmatpush.bf16.msra.mxu0 %v2801
        %4263 = vmatpush.bf16.msra.mxu0 %v2797
        %4264 = vmatpush.bf16.msra.mxu0 %v2793
        %4265 = vmatpush.bf16.msra.mxu0 %v2789
        %4266 = vmatpush.bf16.msra.mxu0 %v2785
        %4267 = vmatmul.bf16.gmra.mxu0 %v935
        %v4268 = vpop.f32.mrf.mxu0
        %v4269 = vadd.f32 %v4256, %v4268
        %v4270 = vpop.f32.mrf.mxu0
        %4271 = vdwg.mxu0
        %4272 = vmatpush.bf16.msra.mxu0 %v2845
        %4273 = vmatpush.bf16.msra.mxu0 %v2841
        %4274 = vmatpush.bf16.msra.mxu0 %v2837
        %4275 = vmatpush.bf16.msra.mxu0 %v2833
        %4276 = vmatpush.bf16.msra.mxu0 %v2829
        %4277 = vmatpush.bf16.msra.mxu0 %v2825
        %4278 = vmatpush.bf16.msra.mxu0 %v2821
        %4279 = vmatpush.bf16.msra.mxu0 %v2817
        %4280 = vmatmul.bf16.gmra.mxu0 %v936
        %v4281 = vpop.f32.mrf.mxu0
        %v4282 = vadd.f32 %v4269, %v4281
        %v4283 = vpop.f32.mrf.mxu0
        %4284 = vdwg.mxu0
        %4285 = vmatpush.bf16.msra.mxu0 %v2877
        %4286 = vmatpush.bf16.msra.mxu0 %v2873
        %4287 = vmatpush.bf16.msra.mxu0 %v2869
        %4288 = vmatpush.bf16.msra.mxu0 %v2865
        %4289 = vmatpush.bf16.msra.mxu0 %v2861
        %4290 = vmatpush.bf16.msra.mxu0 %v2857
        %4291 = vmatpush.bf16.msra.mxu0 %v2853
        %4292 = vmatpush.bf16.msra.mxu0 %v2849
        %4293 = vmatmul.bf16.gmra.mxu0 %v937
        %v4294 = vpop.f32.mrf.mxu0
        %v4295 = vadd.f32 %v4282, %v4294
        %v4296 = vpop.f32.mrf.mxu0
        %4297 = vdwg.mxu0
        %4298 = vmatpush.bf16.msra.mxu0 %v2909
        %4299 = vmatpush.bf16.msra.mxu0 %v2905
        %4300 = vmatpush.bf16.msra.mxu0 %v2901
        %4301 = vmatpush.bf16.msra.mxu0 %v2897
        %4302 = vmatpush.bf16.msra.mxu0 %v2893
        %4303 = vmatpush.bf16.msra.mxu0 %v2889
        %4304 = vmatpush.bf16.msra.mxu0 %v2885
        %4305 = vmatpush.bf16.msra.mxu0 %v2881
        %4306 = vmatmul.bf16.gmra.mxu0 %v938
        %v4307 = vpop.f32.mrf.mxu0
        %v4308 = vadd.f32 %v4295, %v4307
        %v4309 = vpop.f32.mrf.mxu0
        %4310 = vdwg.mxu0
        %4311 = vmatpush.bf16.msra.mxu0 %v2941
        %4312 = vmatpush.bf16.msra.mxu0 %v2937
        %4313 = vmatpush.bf16.msra.mxu0 %v2933
        %4314 = vmatpush.bf16.msra.mxu0 %v2929
        %4315 = vmatpush.bf16.msra.mxu0 %v2925
        %4316 = vmatpush.bf16.msra.mxu0 %v2921
        %4317 = vmatpush.bf16.msra.mxu0 %v2917
        %4318 = vmatpush.bf16.msra.mxu0 %v2913
        %4319 = vmatmul.bf16.gmra.mxu0 %v939
        %v4320 = vpop.f32.mrf.mxu0
        %v4321 = vadd.f32 %v4308, %v4320
        %v4322 = vpop.f32.mrf.mxu0
        %4323 = vdwg.mxu0
        %4324 = vmatpush.bf16.msra.mxu0 %v2973
        %4325 = vmatpush.bf16.msra.mxu0 %v2969
        %4326 = vmatpush.bf16.msra.mxu0 %v2965
        %4327 = vmatpush.bf16.msra.mxu0 %v2961
        %4328 = vmatpush.bf16.msra.mxu0 %v2957
        %4329 = vmatpush.bf16.msra.mxu0 %v2953
        %4330 = vmatpush.bf16.msra.mxu0 %v2949
        %4331 = vmatpush.bf16.msra.mxu0 %v2945
        %4332 = vmatmul.bf16.gmra.mxu0 %v940
        %v4333 = vpop.f32.mrf.mxu0
        %v4334 = vadd.f32 %v4321, %v4333
        %v4335 = vpop.f32.mrf.mxu0
        %4336 = vdwg.mxu0
        %4337 = vmatpush.bf16.msra.mxu0 %v3005
        %4338 = vmatpush.bf16.msra.mxu0 %v3001
        %4339 = vmatpush.bf16.msra.mxu0 %v2997
        %4340 = vmatpush.bf16.msra.mxu0 %v2993
        %4341 = vmatpush.bf16.msra.mxu0 %v2989
        %4342 = vmatpush.bf16.msra.mxu0 %v2985
        %4343 = vmatpush.bf16.msra.mxu0 %v2981
        %4344 = vmatpush.bf16.msra.mxu0 %v2977
        %4345 = vmatmul.bf16.gmra.mxu0 %v941
        %v4346 = vpop.f32.mrf.mxu0
        %v4347 = vadd.f32 %v4334, %v4346
        %v4348 = vpop.f32.mrf.mxu0
        %4349 = vdwg.mxu0
        %v4350 = vadd.f32 %v378, %v3723
        %v4351 = vadd.f32 %v379, %v3931
        %v4352 = vadd.f32 %v380, %v4139
        %v4353 = vadd.f32 %v381, %v4347
        %4354 = vst [vmem:[#allocation2] sm:$0xff] %v4350
        %4355 = vst [vmem:[#allocation2 + $0x8] sm:$0xff] %v4351
        %4356 = vst [vmem:[#allocation2 + $0x10] sm:$0xff] %v4352
        %4357 = vst [vmem:[#allocation2 + $0x18] sm:$0xff] %v4353
        %p4358 = scmp.eq.s32.totalorder %s23, 5
        // Predicated region
        $region73: #{nn_forward.1} parent=47 // pred_check
          %p4359 = pneg %p4358
        $region74: #{nn_forward.1} parent=47 // pred_check_branch
          %4361 = sbr.rel (%p4359) target = $region76
        $region75: #{nn_forward.1} parent=47 // pred_region
          %v4362 = vld [vmem:[#allocation2] sm:$0xff]
          %v4363 = vld [vmem:[#allocation2 + $0x8] sm:$0xff]
          %v4364 = vld [vmem:[#allocation2 + $0x10] sm:$0xff]
          %v4365 = vld [vmem:[#allocation2 + $0x18] sm:$0xff]
          %v4366 = vld [vmem:[#allocation5] sm:$0xf]
          %v4368 = vperm.slane %v4366, 0
          %v4369 = vperm.slane %v4366, 1
          %v4370 = vperm.slane %v4366, 2
          %v4371 = vperm.slane %v4366, 3
          %v4376 = vadd.f32 %v4362, %v4368
          %v4377 = vadd.f32 %v4363, %v4369
          %v4378 = vadd.f32 %v4364, %v4370
          %v4379 = vadd.f32 %v4365, %v4371
          %v4380 = vmax.f32 %v4376, 0.0
          %v4381 = vmax.f32 %v4377, 0.0
          %v4382 = vmax.f32 %v4378, 0.0
          %v4383 = vmax.f32 %v4379, 0.0
          %v4384 = vld [vmem:[#allocation7] sm:$0xff]
          %v4385 = vld [vmem:[#allocation7 + $0x8] sm:$0xff]
          %v4386 = vld [vmem:[#allocation7 + $0x10] sm:$0xff]
          %v4387 = vld [vmem:[#allocation7 + $0x18] sm:$0xff]
          %v4388 = vld [vmem:[#allocation7 + $0x20] sm:$0xff]
          %v4389 = vld [vmem:[#allocation7 + $0x28] sm:$0xff]
          %v4390 = vld [vmem:[#allocation7 + $0x30] sm:$0xff]
          %v4391 = vld [vmem:[#allocation7 + $0x38] sm:$0xff]
          %v4392 = vld [vmem:[#allocation7 + $0x40] sm:$0xff]
          %v4393 = vld [vmem:[#allocation7 + $0x48] sm:$0xff]
          %v4394 = vld [vmem:[#allocation7 + $0x50] sm:$0xff]
          %v4395 = vld [vmem:[#allocation7 + $0x58] sm:$0xff]
          %v4396 = vld [vmem:[#allocation7 + $0x60] sm:$0xff]
          %v4397 = vld [vmem:[#allocation7 + $0x68] sm:$0xff]
          %v4398 = vld [vmem:[#allocation7 + $0x70] sm:$0xff]
          %v4399 = vld [vmem:[#allocation7 + $0x78] sm:$0xff]
          %v4400 = vld [vmem:[#allocation7 + $0x80] sm:$0xff]
          %v4401 = vld [vmem:[#allocation7 + $0x88] sm:$0xff]
          %v4402 = vld [vmem:[#allocation7 + $0x90] sm:$0xff]
          %v4403 = vld [vmem:[#allocation7 + $0x98] sm:$0xff]
          %v4404 = vld [vmem:[#allocation7 + $0xa0] sm:$0xff]
          %v4405 = vld [vmem:[#allocation7 + $0xa8] sm:$0xff]
          %v4406 = vld [vmem:[#allocation7 + $0xb0] sm:$0xff]
          %v4407 = vld [vmem:[#allocation7 + $0xb8] sm:$0xff]
          %v4408 = vld [vmem:[#allocation7 + $0xc0] sm:$0xff]
          %v4409 = vld [vmem:[#allocation7 + $0xc8] sm:$0xff]
          %v4410 = vld [vmem:[#allocation7 + $0xd0] sm:$0xff]
          %v4411 = vld [vmem:[#allocation7 + $0xd8] sm:$0xff]
          %v4412 = vld [vmem:[#allocation7 + $0xe0] sm:$0xff]
          %v4413 = vld [vmem:[#allocation7 + $0xe8] sm:$0xff]
          %v4414 = vld [vmem:[#allocation7 + $0xf0] sm:$0xff]
          %v4415 = vld [vmem:[#allocation7 + $0xf8] sm:$0xff]
          %v4416 = vld [vmem:[#allocation7 + $0x100] sm:$0xff]
          %v4417 = vld [vmem:[#allocation7 + $0x108] sm:$0xff]
          %v4418 = vld [vmem:[#allocation7 + $0x110] sm:$0xff]
          %v4419 = vld [vmem:[#allocation7 + $0x118] sm:$0xff]
          %v4420 = vld [vmem:[#allocation7 + $0x120] sm:$0xff]
          %v4421 = vld [vmem:[#allocation7 + $0x128] sm:$0xff]
          %v4422 = vld [vmem:[#allocation7 + $0x130] sm:$0xff]
          %v4423 = vld [vmem:[#allocation7 + $0x138] sm:$0xff]
          %v4424 = vld [vmem:[#allocation7 + $0x140] sm:$0xff]
          %v4425 = vld [vmem:[#allocation7 + $0x148] sm:$0xff]
          %v4426 = vld [vmem:[#allocation7 + $0x150] sm:$0xff]
          %v4427 = vld [vmem:[#allocation7 + $0x158] sm:$0xff]
          %v4428 = vld [vmem:[#allocation7 + $0x160] sm:$0xff]
          %v4429 = vld [vmem:[#allocation7 + $0x168] sm:$0xff]
          %v4430 = vld [vmem:[#allocation7 + $0x170] sm:$0xff]
          %v4431 = vld [vmem:[#allocation7 + $0x178] sm:$0xff]
          %v4432 = vld [vmem:[#allocation7 + $0x180] sm:$0xff]
          %v4433 = vld [vmem:[#allocation7 + $0x188] sm:$0xff]
          %v4434 = vld [vmem:[#allocation7 + $0x190] sm:$0xff]
          %v4435 = vld [vmem:[#allocation7 + $0x198] sm:$0xff]
          %v4436 = vld [vmem:[#allocation7 + $0x1a0] sm:$0xff]
          %v4437 = vld [vmem:[#allocation7 + $0x1a8] sm:$0xff]
          %v4438 = vld [vmem:[#allocation7 + $0x1b0] sm:$0xff]
          %v4439 = vld [vmem:[#allocation7 + $0x1b8] sm:$0xff]
          %v4440 = vld [vmem:[#allocation7 + $0x1c0] sm:$0xff]
          %v4441 = vld [vmem:[#allocation7 + $0x1c8] sm:$0xff]
          %v4442 = vld [vmem:[#allocation7 + $0x1d0] sm:$0xff]
          %v4443 = vld [vmem:[#allocation7 + $0x1d8] sm:$0xff]
          %v4444 = vld [vmem:[#allocation7 + $0x1e0] sm:$0xff]
          %v4445 = vld [vmem:[#allocation7 + $0x1e8] sm:$0xff]
          %v4446 = vld [vmem:[#allocation7 + $0x1f0] sm:$0xff]
          %v4447 = vld [vmem:[#allocation7 + $0x1f8] sm:$0xff]
          %v4448 = vld [vmem:[#allocation7 + $0x200] sm:$0xff]
          %v4449 = vld [vmem:[#allocation7 + $0x208] sm:$0xff]
          %v4450 = vld [vmem:[#allocation7 + $0x210] sm:$0xff]
          %v4451 = vld [vmem:[#allocation7 + $0x218] sm:$0xff]
          %v4452 = vld [vmem:[#allocation7 + $0x220] sm:$0xff]
          %v4453 = vld [vmem:[#allocation7 + $0x228] sm:$0xff]
          %v4454 = vld [vmem:[#allocation7 + $0x230] sm:$0xff]
          %v4455 = vld [vmem:[#allocation7 + $0x238] sm:$0xff]
          %v4456 = vld [vmem:[#allocation7 + $0x240] sm:$0xff]
          %v4457 = vld [vmem:[#allocation7 + $0x248] sm:$0xff]
          %v4458 = vld [vmem:[#allocation7 + $0x250] sm:$0xff]
          %v4459 = vld [vmem:[#allocation7 + $0x258] sm:$0xff]
          %v4460 = vld [vmem:[#allocation7 + $0x260] sm:$0xff]
          %v4461 = vld [vmem:[#allocation7 + $0x268] sm:$0xff]
          %v4462 = vld [vmem:[#allocation7 + $0x270] sm:$0xff]
          %v4463 = vld [vmem:[#allocation7 + $0x278] sm:$0xff]
          %v4464 = vld [vmem:[#allocation7 + $0x280] sm:$0xff]
          %v4465 = vld [vmem:[#allocation7 + $0x288] sm:$0xff]
          %v4466 = vld [vmem:[#allocation7 + $0x290] sm:$0xff]
          %v4467 = vld [vmem:[#allocation7 + $0x298] sm:$0xff]
          %v4468 = vld [vmem:[#allocation7 + $0x2a0] sm:$0xff]
          %v4469 = vld [vmem:[#allocation7 + $0x2a8] sm:$0xff]
          %v4470 = vld [vmem:[#allocation7 + $0x2b0] sm:$0xff]
          %v4471 = vld [vmem:[#allocation7 + $0x2b8] sm:$0xff]
          %v4472 = vld [vmem:[#allocation7 + $0x2c0] sm:$0xff]
          %v4473 = vld [vmem:[#allocation7 + $0x2c8] sm:$0xff]
          %v4474 = vld [vmem:[#allocation7 + $0x2d0] sm:$0xff]
          %v4475 = vld [vmem:[#allocation7 + $0x2d8] sm:$0xff]
          %v4476 = vld [vmem:[#allocation7 + $0x2e0] sm:$0xff]
          %v4477 = vld [vmem:[#allocation7 + $0x2e8] sm:$0xff]
          %v4478 = vld [vmem:[#allocation7 + $0x2f0] sm:$0xff]
          %v4479 = vld [vmem:[#allocation7 + $0x2f8] sm:$0xff]
          %v4480 = vld [vmem:[#allocation7 + $0x300] sm:$0xff]
          %v4481 = vld [vmem:[#allocation7 + $0x308] sm:$0xff]
          %v4482 = vld [vmem:[#allocation7 + $0x310] sm:$0xff]
          %v4483 = vld [vmem:[#allocation7 + $0x318] sm:$0xff]
          %v4484 = vld [vmem:[#allocation7 + $0x320] sm:$0xff]
          %v4485 = vld [vmem:[#allocation7 + $0x328] sm:$0xff]
          %v4486 = vld [vmem:[#allocation7 + $0x330] sm:$0xff]
          %v4487 = vld [vmem:[#allocation7 + $0x338] sm:$0xff]
          %v4488 = vld [vmem:[#allocation7 + $0x340] sm:$0xff]
          %v4489 = vld [vmem:[#allocation7 + $0x348] sm:$0xff]
          %v4490 = vld [vmem:[#allocation7 + $0x350] sm:$0xff]
          %v4491 = vld [vmem:[#allocation7 + $0x358] sm:$0xff]
          %v4492 = vld [vmem:[#allocation7 + $0x360] sm:$0xff]
          %v4493 = vld [vmem:[#allocation7 + $0x368] sm:$0xff]
          %v4494 = vld [vmem:[#allocation7 + $0x370] sm:$0xff]
          %v4495 = vld [vmem:[#allocation7 + $0x378] sm:$0xff]
          %v4496 = vld [vmem:[#allocation7 + $0x380] sm:$0xff]
          %v4497 = vld [vmem:[#allocation7 + $0x388] sm:$0xff]
          %v4498 = vld [vmem:[#allocation7 + $0x390] sm:$0xff]
          %v4499 = vld [vmem:[#allocation7 + $0x398] sm:$0xff]
          %v4500 = vld [vmem:[#allocation7 + $0x3a0] sm:$0xff]
          %v4501 = vld [vmem:[#allocation7 + $0x3a8] sm:$0xff]
          %v4502 = vld [vmem:[#allocation7 + $0x3b0] sm:$0xff]
          %v4503 = vld [vmem:[#allocation7 + $0x3b8] sm:$0xff]
          %v4504 = vld [vmem:[#allocation7 + $0x3c0] sm:$0xff]
          %v4505 = vld [vmem:[#allocation7 + $0x3c8] sm:$0xff]
          %v4506 = vld [vmem:[#allocation7 + $0x3d0] sm:$0xff]
          %v4507 = vld [vmem:[#allocation7 + $0x3d8] sm:$0xff]
          %v4508 = vld [vmem:[#allocation7 + $0x3e0] sm:$0xff]
          %v4509 = vld [vmem:[#allocation7 + $0x3e8] sm:$0xff]
          %v4510 = vld [vmem:[#allocation7 + $0x3f0] sm:$0xff]
          %v4511 = vld [vmem:[#allocation7 + $0x3f8] sm:$0xff]
          %v4512 = vld [vmem:[#allocation8] sm:$0x3]
          %v4514 = vperm.slane %v4512, 0
          %v4515 = vperm.slane %v4512, 1
          %4518 = vmatpush.msra.mxu0 %v4414
          %4519 = vmatpush.msra.mxu0 %v4412
          %4520 = vmatpush.msra.mxu0 %v4410
          %4521 = vmatpush.msra.mxu0 %v4408
          %4522 = vmatpush.msra.mxu0 %v4406
          %4523 = vmatpush.msra.mxu0 %v4404
          %4524 = vmatpush.msra.mxu0 %v4402
          %4525 = vmatpush.msra.mxu0 %v4400
          %4526 = vmatpush.msra.mxu0 %v4398
          %4527 = vmatpush.msra.mxu0 %v4396
          %4528 = vmatpush.msra.mxu0 %v4394
          %4529 = vmatpush.msra.mxu0 %v4392
          %4530 = vmatpush.msra.mxu0 %v4390
          %4531 = vmatpush.msra.mxu0 %v4388
          %4532 = vmatpush.msra.mxu0 %v4386
          %4533 = vmatpush.msra.mxu0 %v4384
          %4534 = vmatmul.f32.gmra.mxu0 %v4380
          %v4535 = vpop.f32.mrf.mxu0
          %v4536 = vadd.f32 %v4514, %v4535
          %4537 = vdwg.mxu0
          %4538 = vmatpush.msra.mxu0 %v4446
          %4539 = vmatpush.msra.mxu0 %v4444
          %4540 = vmatpush.msra.mxu0 %v4442
          %4541 = vmatpush.msra.mxu0 %v4440
          %4542 = vmatpush.msra.mxu0 %v4438
          %4543 = vmatpush.msra.mxu0 %v4436
          %4544 = vmatpush.msra.mxu0 %v4434
          %4545 = vmatpush.msra.mxu0 %v4432
          %4546 = vmatpush.msra.mxu0 %v4430
          %4547 = vmatpush.msra.mxu0 %v4428
          %4548 = vmatpush.msra.mxu0 %v4426
          %4549 = vmatpush.msra.mxu0 %v4424
          %4550 = vmatpush.msra.mxu0 %v4422
          %4551 = vmatpush.msra.mxu0 %v4420
          %4552 = vmatpush.msra.mxu0 %v4418
          %4553 = vmatpush.msra.mxu0 %v4416
          %4554 = vmatmul.f32.gmra.mxu0 %v4381
          %v4555 = vpop.f32.mrf.mxu0
          %v4556 = vadd.f32 %v4536, %v4555
          %4557 = vdwg.mxu0
          %4558 = vmatpush.msra.mxu0 %v4478
          %4559 = vmatpush.msra.mxu0 %v4476
          %4560 = vmatpush.msra.mxu0 %v4474
          %4561 = vmatpush.msra.mxu0 %v4472
          %4562 = vmatpush.msra.mxu0 %v4470
          %4563 = vmatpush.msra.mxu0 %v4468
          %4564 = vmatpush.msra.mxu0 %v4466
          %4565 = vmatpush.msra.mxu0 %v4464
          %4566 = vmatpush.msra.mxu0 %v4462
          %4567 = vmatpush.msra.mxu0 %v4460
          %4568 = vmatpush.msra.mxu0 %v4458
          %4569 = vmatpush.msra.mxu0 %v4456
          %4570 = vmatpush.msra.mxu0 %v4454
          %4571 = vmatpush.msra.mxu0 %v4452
          %4572 = vmatpush.msra.mxu0 %v4450
          %4573 = vmatpush.msra.mxu0 %v4448
          %4574 = vmatmul.f32.gmra.mxu0 %v4382
          %v4575 = vpop.f32.mrf.mxu0
          %v4576 = vadd.f32 %v4556, %v4575
          %4577 = vdwg.mxu0
          %4578 = vmatpush.msra.mxu0 %v4510
          %4579 = vmatpush.msra.mxu0 %v4508
          %4580 = vmatpush.msra.mxu0 %v4506
          %4581 = vmatpush.msra.mxu0 %v4504
          %4582 = vmatpush.msra.mxu0 %v4502
          %4583 = vmatpush.msra.mxu0 %v4500
          %4584 = vmatpush.msra.mxu0 %v4498
          %4585 = vmatpush.msra.mxu0 %v4496
          %4586 = vmatpush.msra.mxu0 %v4494
          %4587 = vmatpush.msra.mxu0 %v4492
          %4588 = vmatpush.msra.mxu0 %v4490
          %4589 = vmatpush.msra.mxu0 %v4488
          %4590 = vmatpush.msra.mxu0 %v4486
          %4591 = vmatpush.msra.mxu0 %v4484
          %4592 = vmatpush.msra.mxu0 %v4482
          %4593 = vmatpush.msra.mxu0 %v4480
          %4594 = vmatmul.f32.gmra.mxu0 %v4383
          %v4595 = vpop.f32.mrf.mxu0
          %v4596 = vadd.f32 %v4576, %v4595
          %4597 = vdwg.mxu0
          %4598 = vmatpush.msra.mxu0 %v4415
          %4599 = vmatpush.msra.mxu0 %v4413
          %4600 = vmatpush.msra.mxu0 %v4411
          %4601 = vmatpush.msra.mxu0 %v4409
          %4602 = vmatpush.msra.mxu0 %v4407
          %4603 = vmatpush.msra.mxu0 %v4405
          %4604 = vmatpush.msra.mxu0 %v4403
          %4605 = vmatpush.msra.mxu0 %v4401
          %4606 = vmatpush.msra.mxu0 %v4399
          %4607 = vmatpush.msra.mxu0 %v4397
          %4608 = vmatpush.msra.mxu0 %v4395
          %4609 = vmatpush.msra.mxu0 %v4393
          %4610 = vmatpush.msra.mxu0 %v4391
          %4611 = vmatpush.msra.mxu0 %v4389
          %4612 = vmatpush.msra.mxu0 %v4387
          %4613 = vmatpush.msra.mxu0 %v4385
          %4614 = vmatmul.f32.gmra.mxu0 %v4380
          %v4615 = vpop.f32.mrf.mxu0
          %v4616 = vadd.f32 %v4515, %v4615
          %4617 = vdwg.mxu0
          %4618 = vmatpush.msra.mxu0 %v4447
          %4619 = vmatpush.msra.mxu0 %v4445
          %4620 = vmatpush.msra.mxu0 %v4443
          %4621 = vmatpush.msra.mxu0 %v4441
          %4622 = vmatpush.msra.mxu0 %v4439
          %4623 = vmatpush.msra.mxu0 %v4437
          %4624 = vmatpush.msra.mxu0 %v4435
          %4625 = vmatpush.msra.mxu0 %v4433
          %4626 = vmatpush.msra.mxu0 %v4431
          %4627 = vmatpush.msra.mxu0 %v4429
          %4628 = vmatpush.msra.mxu0 %v4427
          %4629 = vmatpush.msra.mxu0 %v4425
          %4630 = vmatpush.msra.mxu0 %v4423
          %4631 = vmatpush.msra.mxu0 %v4421
          %4632 = vmatpush.msra.mxu0 %v4419
          %4633 = vmatpush.msra.mxu0 %v4417
          %4634 = vmatmul.f32.gmra.mxu0 %v4381
          %v4635 = vpop.f32.mrf.mxu0
          %v4636 = vadd.f32 %v4616, %v4635
          %4637 = vdwg.mxu0
          %4638 = vmatpush.msra.mxu0 %v4479
          %4639 = vmatpush.msra.mxu0 %v4477
          %4640 = vmatpush.msra.mxu0 %v4475
          %4641 = vmatpush.msra.mxu0 %v4473
          %4642 = vmatpush.msra.mxu0 %v4471
          %4643 = vmatpush.msra.mxu0 %v4469
          %4644 = vmatpush.msra.mxu0 %v4467
          %4645 = vmatpush.msra.mxu0 %v4465
          %4646 = vmatpush.msra.mxu0 %v4463
          %4647 = vmatpush.msra.mxu0 %v4461
          %4648 = vmatpush.msra.mxu0 %v4459
          %4649 = vmatpush.msra.mxu0 %v4457
          %4650 = vmatpush.msra.mxu0 %v4455
          %4651 = vmatpush.msra.mxu0 %v4453
          %4652 = vmatpush.msra.mxu0 %v4451
          %4653 = vmatpush.msra.mxu0 %v4449
          %4654 = vmatmul.f32.gmra.mxu0 %v4382
          %v4655 = vpop.f32.mrf.mxu0
          %v4656 = vadd.f32 %v4636, %v4655
          %4657 = vdwg.mxu0
          %4658 = vmatpush.msra.mxu0 %v4511
          %4659 = vmatpush.msra.mxu0 %v4509
          %4660 = vmatpush.msra.mxu0 %v4507
          %4661 = vmatpush.msra.mxu0 %v4505
          %4662 = vmatpush.msra.mxu0 %v4503
          %4663 = vmatpush.msra.mxu0 %v4501
          %4664 = vmatpush.msra.mxu0 %v4499
          %4665 = vmatpush.msra.mxu0 %v4497
          %4666 = vmatpush.msra.mxu0 %v4495
          %4667 = vmatpush.msra.mxu0 %v4493
          %4668 = vmatpush.msra.mxu0 %v4491
          %4669 = vmatpush.msra.mxu0 %v4489
          %4670 = vmatpush.msra.mxu0 %v4487
          %4671 = vmatpush.msra.mxu0 %v4485
          %4672 = vmatpush.msra.mxu0 %v4483
          %4673 = vmatpush.msra.mxu0 %v4481
          %4674 = vmatmul.f32.gmra.mxu0 %v4383
          %v4675 = vpop.f32.mrf.mxu0
          %v4676 = vadd.f32 %v4656, %v4675
          %4677 = vdwg.mxu0
          %v4678 = vmax.f32 %v4596, 0.0
          %v4679 = vmax.f32 %v4676, 0.0
          %v4680 = vld [vmem:[%s5] sm:$0xff]
          %v4681 = vld [vmem:[%s5 + $0x8] sm:$0xff]
          %v4682 = vld [vmem:[%s5 + $0x10] sm:$0xff]
          %v4683 = vld [vmem:[%s5 + $0x18] sm:$0xff]
          %v4684 = vld [vmem:[%s5 + $0x20] sm:$0xff]
          %v4685 = vld [vmem:[%s5 + $0x28] sm:$0xff]
          %v4686 = vld [vmem:[%s5 + $0x30] sm:$0xff]
          %v4687 = vld [vmem:[%s5 + $0x38] sm:$0xff]
          %v4688 = vld [vmem:[%s5 + $0x40] sm:$0xff]
          %v4689 = vld [vmem:[%s5 + $0x48] sm:$0xff]
          %v4690 = vld [vmem:[%s5 + $0x50] sm:$0xff]
          %v4691 = vld [vmem:[%s5 + $0x58] sm:$0xff]
          %v4692 = vld [vmem:[%s5 + $0x60] sm:$0xff]
          %v4693 = vld [vmem:[%s5 + $0x68] sm:$0xff]
          %v4694 = vld [vmem:[%s5 + $0x70] sm:$0xff]
          %v4695 = vld [vmem:[%s5 + $0x78] sm:$0xff]
          %v4696 = vld [vmem:[%s5 + $0x80] sm:$0xff]
          %v4697 = vld [vmem:[%s5 + $0x88] sm:$0xff]
          %v4698 = vld [vmem:[%s5 + $0x90] sm:$0xff]
          %v4699 = vld [vmem:[%s5 + $0x98] sm:$0xff]
          %v4700 = vld [vmem:[%s5 + $0xa0] sm:$0xff]
          %v4701 = vld [vmem:[%s5 + $0xa8] sm:$0xff]
          %v4702 = vld [vmem:[%s5 + $0xb0] sm:$0xff]
          %v4703 = vld [vmem:[%s5 + $0xb8] sm:$0xff]
          %v4704 = vld [vmem:[%s5 + $0xc0] sm:$0xff]
          %v4705 = vld [vmem:[%s5 + $0xc8] sm:$0xff]
          %v4706 = vld [vmem:[%s5 + $0xd0] sm:$0xff]
          %v4707 = vld [vmem:[%s5 + $0xd8] sm:$0xff]
          %v4708 = vld [vmem:[%s5 + $0xe0] sm:$0xff]
          %v4709 = vld [vmem:[%s5 + $0xe8] sm:$0xff]
          %v4710 = vld [vmem:[%s5 + $0xf0] sm:$0xff]
          %v4711 = vld [vmem:[%s5 + $0xf8] sm:$0xff]
          %v4712 = vld [vmem:[#allocation10] sm:$0x1]
          %v4714 = vperm.slane %v4712, 0
          %4716 = vmatpush.msra.mxu0 %v4695
          %4717 = vmatpush.msra.mxu0 %v4694
          %4718 = vmatpush.msra.mxu0 %v4693
          %4719 = vmatpush.msra.mxu0 %v4692
          %4720 = vmatpush.msra.mxu0 %v4691
          %4721 = vmatpush.msra.mxu0 %v4690
          %4722 = vmatpush.msra.mxu0 %v4689
          %4723 = vmatpush.msra.mxu0 %v4688
          %4724 = vmatpush.msra.mxu0 %v4687
          %4725 = vmatpush.msra.mxu0 %v4686
          %4726 = vmatpush.msra.mxu0 %v4685
          %4727 = vmatpush.msra.mxu0 %v4684
          %4728 = vmatpush.msra.mxu0 %v4683
          %4729 = vmatpush.msra.mxu0 %v4682
          %4730 = vmatpush.msra.mxu0 %v4681
          %4731 = vmatpush.msra.mxu0 %v4680
          %4732 = vmatmul.f32.gmra.mxu0 %v4678
          %v4733 = vpop.f32.mrf.mxu0
          %v4734 = vadd.f32 %v4714, %v4733
          %4735 = vdwg.mxu0
          %4736 = vmatpush.msra.mxu0 %v4711
          %4737 = vmatpush.msra.mxu0 %v4710
          %4738 = vmatpush.msra.mxu0 %v4709
          %4739 = vmatpush.msra.mxu0 %v4708
          %4740 = vmatpush.msra.mxu0 %v4707
          %4741 = vmatpush.msra.mxu0 %v4706
          %4742 = vmatpush.msra.mxu0 %v4705
          %4743 = vmatpush.msra.mxu0 %v4704
          %4744 = vmatpush.msra.mxu0 %v4703
          %4745 = vmatpush.msra.mxu0 %v4702
          %4746 = vmatpush.msra.mxu0 %v4701
          %4747 = vmatpush.msra.mxu0 %v4700
          %4748 = vmatpush.msra.mxu0 %v4699
          %4749 = vmatpush.msra.mxu0 %v4698
          %4750 = vmatpush.msra.mxu0 %v4697
          %4751 = vmatpush.msra.mxu0 %v4696
          %4752 = vmatmul.f32.gmra.mxu0 %v4679
          %v4753 = vpop.f32.mrf.mxu0
          %v4754 = vadd.f32 %v4734, %v4753
          %4755 = vdwg.mxu0
          %vm4756 = vcmask 15360
          %v4757 = vsel %vm4756, %v4754, -inf
          %4758 = vmax.xlane.f32.xlu0 %v4757
          %v4759 = vpop.xlane.xlu0 %4758
          %v4760 = vsub.f32 %v4754, %v4759
          %v4761 = vmul.f32 %v4760, 1.442695
          %v4762 = vpow.pop %v4761
          %v4763 = vsel %vm4756, %v4762, 0.0
          %4764 = vadd.xlane.f32.xlu0 %v4763
          %v4765 = vpop.xlane.xlu0 %4764
          %v4766 = vrcp.pop %v4765
          %v4767 = vmul.f32 %v4765, %v4766
          %v4768 = vsub.f32 1.0, %v4767
          %v4769 = vmul.f32 %v4766, %v4768
          %v4770 = vadd.f32 %v4766, %v4769
          %vm4771 = vweird.f32 %v4765
          %vm4772 = vweird.f32 %v4766
          %vm4773 = vmor %vm4771, %vm4772
          %v4774 = vsel %vm4773, %v4766, %v4770
          %v4775 = vand.u32 2147483647, %v4765
          %vm4776 = vcmp.eq.f32.partialorder %v4775, 8.507059e+37
          %v4777 = vand.u32 %v4765, 2147483648
          %v4778 = vor.u32 1.1754944e-38, %v4777
          %v4779 = vsel %vm4776, %v4778, %v4774
          %v4780 = vmul.f32 %v4762, %v4779
          %4781 = vst.msk [vmem:[%s7] sm:$0xff] %vm4756, %v4780
        $region76: #{nn_forward.1} parent=47 // pred_fallthru
          _
        // Predicated region
        $region77: #{nn_forward.1} parent=47 // pred_check
          %p4782 = pneg %p193
        $region78: #{nn_forward.1} parent=47 // pred_check_branch
          %4784 = sbr.rel (%p4782) target = $region80
        $region79: #{nn_forward.1} parent=47 // pred_region
          _
        $region80: #{nn_forward.1} parent=47 // pred_fallthru
          _
        // Predicated region
        $region81: #{nn_forward.1} parent=47 // pred_check
          %p4785 = pneg %p193
        $region82: #{nn_forward.1} parent=47 // pred_check_branch
          %4787 = sbr.rel (%p4785) target = $region84
        $region83: #{nn_forward.1} parent=47 // pred_region
          _
        $region84: #{nn_forward.1} parent=47 // pred_fallthru
          _
      $region48: #{nn_forward.1} parent=5 // pred_fallthru
        _
      %p4788 = scmp.le.s32.totalorder 2, %s18
      // Predicated region
      $region85: #{nn_forward.1} parent=5 // pred_check
        %p4789 = pneg %p4788
      $region86: #{nn_forward.1} parent=5 // pred_check_branch
        %4791 = sbr.rel (%p4789) target = $region88
      $region87: #{nn_forward.1} parent=5 // pred_region
        %s4792 = ssub.s32 %s18, 2
      $region88: #{nn_forward.1} parent=5 // pred_fallthru
        _
    $region6: #{nn_forward.1} parent=1 // loop_footer
      %s22 = sadd.s32 1, %s18
    $region7: #{nn_forward.1} parent=1 // loop_footer_branch
      %17 = sbr.rel target = $region3
    $region8: #{nn_forward.1} parent=1 // loop_exit
      _
    %4793 = vsyncpa [#allocation4], 1
    %s4794 = scalar_lea.sflag [#allocation4], 1
    %4795 = vsyncpa %s4794, 1
    %4796 = vsyncpa [#allocation6], 1
    %4797 = vsyncpa [#allocation9], 1

</llo_original>
